<compile_context>
chip_gen: v7x
topology: tpu7x:2x2x1
jax: 0.10.0
libtpu: 0.0.40
codegen_flags: <defaults>
</compile_context>

<pallas_src>
import math

import jax
import jax.numpy as jnp
from jax import lax
from jax.experimental import pallas as pl
from jax.experimental.pallas import tpu as pltpu

EPS = 1e-4  # safe_softplus jitter

_VMEM = pl.BlockSpec(memory_space=pltpu.MemorySpace.VMEM)

# Interleaved gate-column layout (H-wide slots):
#   [i_fwd, i_rev, f_fwd, f_rev, o_fwd, o_rev, g_fwd, g_rev]
# -> sigmoid gates occupy cols [0:6H], tanh gates cols [6H:8H]; i/f/o/g blocks
#    for BOTH directions are contiguous 2H-wide slabs matching the (BP, 2H)
#    [fwd | rev] layout of the carried cell state.
_GATE_SLOT = {"i": 0, "f": 1, "o": 2, "g": 3}


def _gate_col(gate, direction, H):
    return (2 * _GATE_SLOT[gate] + direction) * H


# ------------------------------------------------------------------ kernel

def _make_fused_kernel(num_layers, T, BP, H, S, unroll):
    """Fused bidirectional LSTM + heads.

    Ref order:
      x0, (w_ih_l, w_hh_l, b_l) * num_layers, w_head, b_head,   # inputs
      head_out,                                                  # output
      hid_a, hid_b, gx                                           # VMEM scratch

    x0:   (T*BP, 2*D0) bf16, cols [0:D0] = io sequence in forward time order,
          cols [D0:2*D0] = the same sequence time-flipped (row block t holds
          timestep T-1-t).  Row block t = rows [t*BP, (t+1)*BP).
    w_ih: (2*Din, 8H) bf16, rows [0:Din] -> fwd gate cols, rows [Din:2Din] ->
          rev gate cols (interleaved gate layout above, zeros elsewhere).
    w_hh: (2H, 8H) bf16, rows [0:H] = h_fwd -> fwd cols, [H:2H] = h_rev -> rev.
    b:    (1, 8H) f32 = b_ih + b_hh (interleaved layout).
    w_head: (2H, 2S) bf16 = [w_At | w_cov];  b_head: (1, 2S) f32.
    hid_*: (T*BP, 4H) f32: cols [0:2H] forward-order hidden sequence,
           cols [2H:4H] time-flipped copy (only written for non-last layers).
    gx:    (T*BP, 8H) f32: hoisted input projection (+ bias) of current layer.
    """
    H2, H3, H4, H6, H8 = 2 * H, 3 * H, 4 * H, 6 * H, 8 * H

    def kernel(*refs):
        x0_ref = refs[0]
        lyr = refs[1:1 + 3 * num_layers]
        wh_ref = refs[1 + 3 * num_layers]
        bh_ref = refs[2 + 3 * num_layers]
        out_ref = refs[3 + 3 * num_layers]
        hid_a, hid_b, gx_ref = refs[4 + 3 * num_layers:]
        hid_bufs = [hid_a, hid_b]

        def rows(t):
            start = t * BP
            if not isinstance(start, int):
                start = pl.multiple_of(start, BP)   # BP is a sublane multiple
            return pl.ds(start, BP)

        zero2 = jnp.zeros((BP, H2), jnp.float32)

        for layer in range(num_layers):
            w_ih = lyr[3 * layer][...]          # (2*Din, 8H) bf16
            w_hh = lyr[3 * layer + 1][...]      # (2H, 8H)    bf16
            b = lyr[3 * layer + 2][...]         # (1, 8H)     f32

            if layer == 0:
                x_in = x0_ref[...]                              # bf16
            else:
                x_in = hid_bufs[(layer - 1) % 2][...].astype(jnp.bfloat16)

            # Hoisted input projection (+ bias): one batched matmul over all
            # timesteps and both directions, off the recurrent critical path.
            gx_ref[...] = (
                jnp.dot(x_in, w_ih, preferred_element_type=jnp.float32) + b)

            hid_ref = hid_bufs[layer % 2]
            last = (layer == num_layers - 1)

            def step(t, carry, hid_ref=hid_ref, w_hh=w_hh, last=last):
                h, c = carry                    # (BP, 2H) f32 each, [fwd|rev]
                tr = T - 1 - t
                gh = jnp.dot(h.astype(jnp.bfloat16), w_hh,
                             preferred_element_type=jnp.float32)
                gates = gh + gx_ref[rows(t), :]                 # (BP, 8H)
                sig = jax.nn.sigmoid(gates[:, :H6])             # i,f,o both dir
                g_b = jnp.tanh(gates[:, H6:])                   # g both dir
                i_b = sig[:, :H2]
                f_b = sig[:, H2:H4]
                o_b = sig[:, H4:H6]
                c = f_b * c + i_b * g_b
                h = o_b * jnp.tanh(c)
                h_f = h[:, :H]                  # fwd hidden for time t
                h_r = h[:, H:]                  # rev hidden for time T-1-t
                # forward-order sequence (consumed by next layer fwd + heads)
                hid_ref[rows(t), 0:H] = h_f
                hid_ref[rows(tr), H:H2] = h_r
                if not last:
                    # time-flipped copy (consumed by next layer's rev dir)
                    hid_ref[rows(tr), H2:H3] = h_f
                    hid_ref[rows(t), H3:H4] = h_r
                return h, c

            lax.fori_loop(0, T, step, (zero2, zero2), unroll=unroll)

        # Fused heads epilogue: one matmul for [At | raw_covar], one store.
        hid_last = hid_bufs[(num_layers - 1) % 2]
        feat = hid_last[:, :H2].astype(jnp.bfloat16)            # (T*BP, 2H)
        head = jnp.dot(feat, wh_ref[...],
                       preferred_element_type=jnp.float32) + bh_ref[...]
        col = lax.broadcasted_iota(jnp.int32, head.shape, 1)
        out_ref[...] = jnp.where(col < S, head, jax.nn.softplus(head) + EPS)

    return kernel


def _cost_estimate(T, BP, H, S, in_dims):
    flops = 0
    trans = 0
    for d in in_dims:
        flops += 2 * (T * BP) * (2 * d) * (8 * H)     # hoisted input projection
        flops += 2 * T * BP * (2 * H) * (8 * H)       # recurrent block dots
        trans += T * BP * 10 * H                       # sig(6H)+tanh(2H)+tanh(2H)
    flops += 2 * (T * BP) * (2 * H) * (2 * S)          # fused heads matmul
    trans += T * BP * 2 * S                            # softplus
    bytes_accessed = (
        2 * T * BP * 2 * in_dims[0]                               # x0 (bf16)
        + sum(2 * (2 * d * 8 * H + 2 * H * 8 * H) + 4 * 8 * H for d in in_dims)
        + 2 * (2 * H * 2 * S) + 4 * 2 * S
        + 4 * T * BP * 2 * S)
    return pl.CostEstimate(flops=int(flops), transcendentals=int(trans),
                           bytes_accessed=int(bytes_accessed))


# ------------------------------------------------------------------ params

def init_mf_inference_params(key, dim_outputs, dim_inputs, dim_states,
                             hidden_size=32, num_layers=2, bd=True):
    """PyTorch-style U(-1/sqrt(H)) init, pre-packed for the fused kernel."""
    if not bd:
        # TODO(synk): unidirectional (bd=False) weight packing not implemented;
        # the module default bd=True is what the fused kernel targets.
        raise NotImplementedError("fused kernel covers bd=True only")
    H = hidden_size
    D0 = dim_inputs + dim_outputs
    k_lstm = 1.0 / math.sqrt(H)

    w_ih_list, w_hh_list, b_list = [], [], []
    for layer in range(num_layers):
        d = D0 if layer == 0 else 2 * H
        w_ih = jnp.zeros((2 * d, 8 * H), jnp.float32)
        w_hh = jnp.zeros((2 * H, 8 * H), jnp.float32)
        b = jnp.zeros((1, 8 * H), jnp.float32)
        for direction in range(2):                    # 0 = fwd, 1 = rev
            for gate in ("i", "f", "g", "o"):         # PyTorch gate order
                key, k1, k2, k3, k4 = jax.random.split(key, 5)
                wi = jax.random.uniform(k1, (d, H), jnp.float32, -k_lstm, k_lstm)
                wh = jax.random.uniform(k2, (H, H), jnp.float32, -k_lstm, k_lstm)
                bi = jax.random.uniform(k3, (H,), jnp.float32, -k_lstm, k_lstm)
                bh = jax.random.uniform(k4, (H,), jnp.float32, -k_lstm, k_lstm)
                c0 = _gate_col(gate, direction, H)
                r0 = direction * d
                w_ih = w_ih.at[r0:r0 + d, c0:c0 + H].set(wi)
                w_hh = w_hh.at[direction * H:(direction + 1) * H,
                               c0:c0 + H].set(wh)
                b = b.at[0, c0:c0 + H].set(bi + bh)
        w_ih_list.append(w_ih.astype(jnp.bfloat16))
        w_hh_list.append(w_hh.astype(jnp.bfloat16))
        b_list.append(b)

    feat = 2 * H
    k_lin = 1.0 / math.sqrt(feat)
    key, k1, k2, k3, k4 = jax.random.split(key, 5)
    w_At = jax.random.uniform(k1, (feat, dim_states), jnp.float32, -k_lin, k_lin)
    b_At = jax.random.uniform(k2, (dim_states,), jnp.float32, -k_lin, k_lin)
    w_cov = jax.random.uniform(k3, (feat, dim_states), jnp.float32, -k_lin, k_lin)
    b_cov = jax.random.uniform(k4, (dim_states,), jnp.float32, -k_lin, k_lin)
    return {
        "lstm_w_ih": w_ih_list,                                   # bf16
        "lstm_w_hh": w_hh_list,                                   # bf16
        "lstm_b": b_list,                                         # f32
        "w_head": jnp.concatenate([w_At, w_cov], 1).astype(jnp.bfloat16),
        "b_head": jnp.concatenate([b_At, b_cov])[None, :],        # (1, 2S) f32
    }


# ----------------------------------------------------------------- forward

def mf_inference_forward(params, output_sequence, input_sequence=None):
    """Forward pass of MFInference.

    output_sequence: (B, T, dim_outputs), input_sequence: (B, T, dim_inputs).
    Returns (At_all, Lt_all), each (B, T, dim_states, dim_states).
    """
    if input_sequence is not None:
        input_sequence = jnp.flip(input_sequence, axis=1)      # .flip(dims=[1])
        io = jnp.concatenate([output_sequence, input_sequence], axis=-1)
    else:
        io = output_sequence
    io = io.astype(jnp.float32)

    B, T, D0 = io.shape
    w_ih, w_hh, b_l = params["lstm_w_ih"], params["lstm_w_hh"], params["lstm_b"]
    num_layers = len(w_ih)
    H = w_hh[0].shape[0] // 2
    S = params["w_head"].shape[1] // 2

    BP = -(-B // 8) * 8                          # pad batch to f32 sublane group
    x = jnp.transpose(io, (1, 0, 2))             # (T, B, D0) time-major
    if BP != B:
        x = jnp.pad(x, ((0, 0), (0, BP - B), (0, 0)))
    # [forward-order | time-flipped] feature concat feeds the fwd/rev halves
    # of the hoisted per-layer input projection.
    x_both = jnp.concatenate([x, jnp.flip(x, axis=0)], axis=-1)   # (T, BP, 2D0)
    x_both = x_both.reshape(T * BP, 2 * D0).astype(jnp.bfloat16)

    unroll = True if T <= 32 else 8
    kernel = _make_fused_kernel(num_layers, T, BP, H, S, unroll)

    inputs = [x_both]
    for l in range(num_layers):
        inputs += [w_ih[l], w_hh[l], b_l[l]]
    inputs += [params["w_head"], params["b_head"]]
    in_dims = [D0] + [2 * H] * (num_layers - 1)

    head_flat = pl.pallas_call(
        kernel,
        out_shape=jax.ShapeDtypeStruct((T * BP, 2 * S), jnp.float32),
        in_specs=[_VMEM] * len(inputs),
        out_specs=_VMEM,
        scratch_shapes=[
            pltpu.VMEM((T * BP, 4 * H), jnp.float32),   # hid ping
            pltpu.VMEM((T * BP, 4 * H), jnp.float32),   # hid pong
            pltpu.VMEM((T * BP, 8 * H), jnp.float32),   # hoisted gate projection
        ],
        cost_estimate=_cost_estimate(T, BP, H, S, in_dims),
    )(*inputs)
    # TODO(synk): for large B (>=16), add a batch grid axis with
    # dimension_semantics=("parallel",) to engage the second TensorCore on
    # v7x, and re-derive VMEM residency (64 MiB physical there) / set
    # vmem_limit_bytes before scaling B or T.

    head = head_flat.reshape(T, BP, 2 * S)[:, :B].transpose(1, 0, 2)  # (B,T,2S)
    at = head[..., :S]
    cov = head[..., S:]

    eye = jnp.eye(S, dtype=jnp.float32)
    At_all = at[..., :, None] * eye              # torch.diag_embed
    Lt_all = cov[..., :, None] * eye
    return At_all, Lt_all


# --------------------------------------------------------------------- main

if __name__ == "__main__":
    B, T = 2, 8
    dim_outputs, dim_inputs, dim_states = 4, 3, 4
    hidden_size, num_layers = 32, 2

    key = jax.random.PRNGKey(0)
    key, kp, ko, ki = jax.random.split(key, 4)

    params = init_mf_inference_params(kp, dim_outputs, dim_inputs, dim_states,
                                      hidden_size=hidden_size,
                                      num_layers=num_layers, bd=True)

    output_sequence = jax.random.normal(ko, (B, T, dim_outputs), jnp.float32)
    input_sequence = jax.random.normal(ki, (B, T, dim_inputs), jnp.float32)

    fwd = jax.jit(mf_inference_forward)
    At_all, Lt_all = fwd(params, output_sequence, input_sequence)
    jax.block_until_ready((At_all, Lt_all))

    assert At_all.shape == (B, T, dim_states, dim_states)
    assert Lt_all.shape == (B, T, dim_states, dim_states)
    assert bool(jnp.all(jnp.isfinite(At_all))) and bool(jnp.all(jnp.isfinite(Lt_all)))
    # Lt diagonal must be > 0 (safe_softplus guarantee), off-diagonals zero.
    diag = jnp.diagonal(Lt_all, axis1=-2, axis2=-1)
    assert bool(jnp.all(diag > 0.0))
    off = Lt_all - diag[..., :, None] * jnp.eye(dim_states, dtype=jnp.float32)
    assert bool(jnp.all(off == 0.0))

    print("KERNEL_OK")
</pallas_src>

<mosaic_0001>
module attributes {stable_mosaic.version = 11 : i64} {
  func.func @kernel(%arg0: memref<64x14xbf16, #tpu.memory_space<vmem>>, %arg1: memref<14x256xbf16, #tpu.memory_space<vmem>>, %arg2: memref<64x256xbf16, #tpu.memory_space<vmem>>, %arg3: memref<1x256xf32, #tpu.memory_space<vmem>>, %arg4: memref<128x256xbf16, #tpu.memory_space<vmem>>, %arg5: memref<64x256xbf16, #tpu.memory_space<vmem>>, %arg6: memref<1x256xf32, #tpu.memory_space<vmem>>, %arg7: memref<64x8xbf16, #tpu.memory_space<vmem>>, %arg8: memref<1x8xf32, #tpu.memory_space<vmem>>, %arg9: memref<64x8xf32, #tpu.memory_space<vmem>>, %arg10: memref<64x128xf32, #tpu.memory_space<vmem>>, %arg11: memref<64x128xf32, #tpu.memory_space<vmem>>, %arg12: memref<64x256xf32, #tpu.memory_space<vmem>>) attributes {dimension_semantics = [], scalar_prefetch = 0 : i64, scratch_operands = 3 : i64, tpu.core_type = #tpu.core_type<tc>} {
    %cst = arith.constant 0.000000e+00 : f32
    %0 = vector.broadcast %cst : f32 to vector<8x64xf32>
    %c0 = arith.constant 0 : index
    %c0_0 = arith.constant 0 : index
    %1 = vector.load %arg1[%c0, %c0_0] : memref<14x256xbf16, #tpu.memory_space<vmem>>, vector<14x256xbf16>
    %c0_1 = arith.constant 0 : index
    %c0_2 = arith.constant 0 : index
    %2 = vector.load %arg2[%c0_1, %c0_2] : memref<64x256xbf16, #tpu.memory_space<vmem>>, vector<64x256xbf16>
    %c0_3 = arith.constant 0 : index
    %c0_4 = arith.constant 0 : index
    %3 = vector.load %arg3[%c0_3, %c0_4] : memref<1x256xf32, #tpu.memory_space<vmem>>, vector<1x256xf32>
    %c0_5 = arith.constant 0 : index
    %c0_6 = arith.constant 0 : index
    %4 = vector.load %arg0[%c0_5, %c0_6] : memref<64x14xbf16, #tpu.memory_space<vmem>>, vector<64x14xbf16>
    %cst_7 = arith.constant dense<0.000000e+00> : vector<64x256xf32>
    %5 = tpu.matmul %4, %1, %cst_7 {dimension_numbers = #tpu.dot_dimension_numbers<[1], [0], [0], [1], [0, 0, 1, 1], [], []>} : vector<64x14xbf16>, vector<14x256xbf16>, vector<64x256xf32> -> vector<64x256xf32>
    %6 = vector.broadcast %3 : vector<1x256xf32> to vector<64x256xf32>
    %7 = arith.addf %5, %6 : vector<64x256xf32>
    %c0_8 = arith.constant 0 : index
    %c0_9 = arith.constant 0 : index
    %8 = vector.load %arg12[%c0_8, %c0_9] : memref<64x256xf32, #tpu.memory_space<vmem>>, vector<64x256xf32>
    tpu.vector_store %arg12[%c0_8, %c0_9], %7 {strides = array<i32>} : memref<64x256xf32, #tpu.memory_space<vmem>>, vector<64x256xf32>,
    %c0_i32 = arith.constant 0 : i32
    %c7_i32 = arith.constant 7 : i32
    %9 = arith.subi %c7_i32, %c0_i32 : i32
    %10 = arith.truncf %0 : vector<8x64xf32> to vector<8x64xbf16>
    %cst_10 = arith.constant dense<0.000000e+00> : vector<8x256xf32>
    %11 = tpu.matmul %10, %2, %cst_10 {dimension_numbers = #tpu.dot_dimension_numbers<[1], [0], [0], [1], [0, 0, 1, 1], [], []>} : vector<8x64xbf16>, vector<64x256xbf16>, vector<8x256xf32> -> vector<8x256xf32>
    %c8_i32 = arith.constant 8 : i32
    %12 = arith.muli %c0_i32, %c8_i32 : i32
    %13 = tpu.assume_multiple %12, 8 : i32
    %14 = arith.index_cast %13 : i32 to index
    %c0_11 = arith.constant 0 : index
    %15 = vector.load %arg12[%14, %c0_11] : memref<64x256xf32, #tpu.memory_space<vmem>>, vector<8x256xf32>
    %16 = arith.addf %11, %15 : vector<8x256xf32>
    %17 = vector.extract_strided_slice %16 {offsets = [0, 0], sizes = [8, 192], strides = [1, 1]} : vector<8x256xf32> to vector<8x192xf32>
    %18 = arith.negf %17 : vector<8x192xf32>
    %19 = math.exp %18 : vector<8x192xf32>
    %cst_12 = arith.constant 1.000000e+00 : f32
    %20 = vector.broadcast %cst_12 : f32 to vector<8x192xf32>
    %21 = arith.addf %20, %19 : vector<8x192xf32>
    %22 = arith.divf %20, %21 : vector<8x192xf32>
    %23 = vector.extract_strided_slice %16 {offsets = [0, 192], sizes = [8, 64], strides = [1, 1]} : vector<8x256xf32> to vector<8x64xf32>
    %24 = math.tanh %23 : vector<8x64xf32>
    %25 = vector.extract_strided_slice %22 {offsets = [0, 0], sizes = [8, 64], strides = [1, 1]} : vector<8x192xf32> to vector<8x64xf32>
    %26 = vector.extract_strided_slice %22 {offsets = [0, 64], sizes = [8, 64], strides = [1, 1]} : vector<8x192xf32> to vector<8x64xf32>
    %27 = vector.extract_strided_slice %22 {offsets = [0, 128], sizes = [8, 64], strides = [1, 1]} : vector<8x192xf32> to vector<8x64xf32>
    %28 = arith.mulf %26, %0 : vector<8x64xf32>
    %29 = arith.mulf %25, %24 : vector<8x64xf32>
    %30 = arith.addf %28, %29 : vector<8x64xf32>
    %31 = math.tanh %30 : vector<8x64xf32>
    %32 = arith.mulf %27, %31 : vector<8x64xf32>
    %33 = vector.extract_strided_slice %32 {offsets = [0, 0], sizes = [8, 32], strides = [1, 1]} : vector<8x64xf32> to vector<8x32xf32>
    %34 = vector.extract_strided_slice %32 {offsets = [0, 32], sizes = [8, 32], strides = [1, 1]} : vector<8x64xf32> to vector<8x32xf32>
    %c8_i32_13 = arith.constant 8 : i32
    %35 = arith.muli %c0_i32, %c8_i32_13 : i32
    %36 = tpu.assume_multiple %35, 8 : i32
    %37 = arith.index_cast %36 : i32 to index
    %c0_14 = arith.constant 0 : index
    %38 = vector.load %arg10[%37, %c0_14] : memref<64x128xf32, #tpu.memory_space<vmem>>, vector<8x32xf32>
    tpu.vector_store %arg10[%37, %c0_14], %33 {strides = array<i32>} : memref<64x128xf32, #tpu.memory_space<vmem>>, vector<8x32xf32>,
    %c8_i32_15 = arith.constant 8 : i32
    %39 = arith.muli %9, %c8_i32_15 : i32
    %40 = tpu.assume_multiple %39, 8 : i32
    %41 = arith.index_cast %40 : i32 to index
    %c32 = arith.constant 32 : index
    %42 = vector.load %arg10[%41, %c32] : memref<64x128xf32, #tpu.memory_space<vmem>>, vector<8x32xf32>
    tpu.vector_store %arg10[%41, %c32], %34 {strides = array<i32>} : memref<64x128xf32, #tpu.memory_space<vmem>>, vector<8x32xf32>,
    %c8_i32_16 = arith.constant 8 : i32
    %43 = arith.muli %9, %c8_i32_16 : i32
    %44 = tpu.assume_multiple %43, 8 : i32
    %45 = arith.index_cast %44 : i32 to index
    %c64 = arith.constant 64 : index
    %46 = vector.load %arg10[%45, %c64] : memref<64x128xf32, #tpu.memory_space<vmem>>, vector<8x32xf32>
    tpu.vector_store %arg10[%45, %c64], %33 {strides = array<i32>} : memref<64x128xf32, #tpu.memory_space<vmem>>, vector<8x32xf32>,
    %c8_i32_17 = arith.constant 8 : i32
    %47 = arith.muli %c0_i32, %c8_i32_17 : i32
    %48 = tpu.assume_multiple %47, 8 : i32
    %49 = arith.index_cast %48 : i32 to index
    %c96 = arith.constant 96 : index
    %50 = vector.load %arg10[%49, %c96] : memref<64x128xf32, #tpu.memory_space<vmem>>, vector<8x32xf32>
    tpu.vector_store %arg10[%49, %c96], %34 {strides = array<i32>} : memref<64x128xf32, #tpu.memory_space<vmem>>, vector<8x32xf32>,
    %c1_i32 = arith.constant 1 : i32
    %c7_i32_18 = arith.constant 7 : i32
    %51 = arith.subi %c7_i32_18, %c1_i32 : i32
    %52 = arith.truncf %32 : vector<8x64xf32> to vector<8x64xbf16>
    %cst_19 = arith.constant dense<0.000000e+00> : vector<8x256xf32>
    %53 = tpu.matmul %52, %2, %cst_19 {dimension_numbers = #tpu.dot_dimension_numbers<[1], [0], [0], [1], [0, 0, 1, 1], [], []>} : vector<8x64xbf16>, vector<64x256xbf16>, vector<8x256xf32> -> vector<8x256xf32>
    %c8_i32_20 = arith.constant 8 : i32
    %54 = arith.muli %c1_i32, %c8_i32_20 : i32
    %55 = tpu.assume_multiple %54, 8 : i32
    %56 = arith.index_cast %55 : i32 to index
    %c0_21 = arith.constant 0 : index
    %57 = vector.load %arg12[%56, %c0_21] : memref<64x256xf32, #tpu.memory_space<vmem>>, vector<8x256xf32>
    %58 = arith.addf %53, %57 : vector<8x256xf32>
    %59 = vector.extract_strided_slice %58 {offsets = [0, 0], sizes = [8, 192], strides = [1, 1]} : vector<8x256xf32> to vector<8x192xf32>
    %60 = arith.negf %59 : vector<8x192xf32>
    %61 = math.exp %60 : vector<8x192xf32>
    %cst_22 = arith.constant 1.000000e+00 : f32
    %62 = vector.broadcast %cst_22 : f32 to vector<8x192xf32>
    %63 = arith.addf %62, %61 : vector<8x192xf32>
    %64 = arith.divf %62, %63 : vector<8x192xf32>
    %65 = vector.extract_strided_slice %58 {offsets = [0, 192], sizes = [8, 64], strides = [1, 1]} : vector<8x256xf32> to vector<8x64xf32>
    %66 = math.tanh %65 : vector<8x64xf32>
    %67 = vector.extract_strided_slice %64 {offsets = [0, 0], sizes = [8, 64], strides = [1, 1]} : vector<8x192xf32> to vector<8x64xf32>
    %68 = vector.extract_strided_slice %64 {offsets = [0, 64], sizes = [8, 64], strides = [1, 1]} : vector<8x192xf32> to vector<8x64xf32>
    %69 = vector.extract_strided_slice %64 {offsets = [0, 128], sizes = [8, 64], strides = [1, 1]} : vector<8x192xf32> to vector<8x64xf32>
    %70 = arith.mulf %68, %30 : vector<8x64xf32>
    %71 = arith.mulf %67, %66 : vector<8x64xf32>
    %72 = arith.addf %70, %71 : vector<8x64xf32>
    %73 = math.tanh %72 : vector<8x64xf32>
    %74 = arith.mulf %69, %73 : vector<8x64xf32>
    %75 = vector.extract_strided_slice %74 {offsets = [0, 0], sizes = [8, 32], strides = [1, 1]} : vector<8x64xf32> to vector<8x32xf32>
    %76 = vector.extract_strided_slice %74 {offsets = [0, 32], sizes = [8, 32], strides = [1, 1]} : vector<8x64xf32> to vector<8x32xf32>
    %c8_i32_23 = arith.constant 8 : i32
    %77 = arith.muli %c1_i32, %c8_i32_23 : i32
    %78 = tpu.assume_multiple %77, 8 : i32
    %79 = arith.index_cast %78 : i32 to index
    %c0_24 = arith.constant 0 : index
    %80 = vector.load %arg10[%79, %c0_24] : memref<64x128xf32, #tpu.memory_space<vmem>>, vector<8x32xf32>
    tpu.vector_store %arg10[%79, %c0_24], %75 {strides = array<i32>} : memref<64x128xf32, #tpu.memory_space<vmem>>, vector<8x32xf32>,
    %c8_i32_25 = arith.constant 8 : i32
    %81 = arith.muli %51, %c8_i32_25 : i32
    %82 = tpu.assume_multiple %81, 8 : i32
    %83 = arith.index_cast %82 : i32 to index
    %c32_26 = arith.constant 32 : index
    %84 = vector.load %arg10[%83, %c32_26] : memref<64x128xf32, #tpu.memory_space<vmem>>, vector<8x32xf32>
    tpu.vector_store %arg10[%83, %c32_26], %76 {strides = array<i32>} : memref<64x128xf32, #tpu.memory_space<vmem>>, vector<8x32xf32>,
    %c8_i32_27 = arith.constant 8 : i32
    %85 = arith.muli %51, %c8_i32_27 : i32
    %86 = tpu.assume_multiple %85, 8 : i32
    %87 = arith.index_cast %86 : i32 to index
    %c64_28 = arith.constant 64 : index
    %88 = vector.load %arg10[%87, %c64_28] : memref<64x128xf32, #tpu.memory_space<vmem>>, vector<8x32xf32>
    tpu.vector_store %arg10[%87, %c64_28], %75 {strides = array<i32>} : memref<64x128xf32, #tpu.memory_space<vmem>>, vector<8x32xf32>,
    %c8_i32_29 = arith.constant 8 : i32
    %89 = arith.muli %c1_i32, %c8_i32_29 : i32
    %90 = tpu.assume_multiple %89, 8 : i32
    %91 = arith.index_cast %90 : i32 to index
    %c96_30 = arith.constant 96 : index
    %92 = vector.load %arg10[%91, %c96_30] : memref<64x128xf32, #tpu.memory_space<vmem>>, vector<8x32xf32>
    tpu.vector_store %arg10[%91, %c96_30], %76 {strides = array<i32>} : memref<64x128xf32, #tpu.memory_space<vmem>>, vector<8x32xf32>,
    %c2_i32 = arith.constant 2 : i32
    %c7_i32_31 = arith.constant 7 : i32
    %93 = arith.subi %c7_i32_31, %c2_i32 : i32
    %94 = arith.truncf %74 : vector<8x64xf32> to vector<8x64xbf16>
    %cst_32 = arith.constant dense<0.000000e+00> : vector<8x256xf32>
    %95 = tpu.matmul %94, %2, %cst_32 {dimension_numbers = #tpu.dot_dimension_numbers<[1], [0], [0], [1], [0, 0, 1, 1], [], []>} : vector<8x64xbf16>, vector<64x256xbf16>, vector<8x256xf32> -> vector<8x256xf32>
    %c8_i32_33 = arith.constant 8 : i32
    %96 = arith.muli %c2_i32, %c8_i32_33 : i32
    %97 = tpu.assume_multiple %96, 8 : i32
    %98 = arith.index_cast %97 : i32 to index
    %c0_34 = arith.constant 0 : index
    %99 = vector.load %arg12[%98, %c0_34] : memref<64x256xf32, #tpu.memory_space<vmem>>, vector<8x256xf32>
    %100 = arith.addf %95, %99 : vector<8x256xf32>
    %101 = vector.extract_strided_slice %100 {offsets = [0, 0], sizes = [8, 192], strides = [1, 1]} : vector<8x256xf32> to vector<8x192xf32>
    %102 = arith.negf %101 : vector<8x192xf32>
    %103 = math.exp %102 : vector<8x192xf32>
    %cst_35 = arith.constant 1.000000e+00 : f32
    %104 = vector.broadcast %cst_35 : f32 to vector<8x192xf32>
    %105 = arith.addf %104, %103 : vector<8x192xf32>
    %106 = arith.divf %104, %105 : vector<8x192xf32>
    %107 = vector.extract_strided_slice %100 {offsets = [0, 192], sizes = [8, 64], strides = [1, 1]} : vector<8x256xf32> to vector<8x64xf32>
    %108 = math.tanh %107 : vector<8x64xf32>
    %109 = vector.extract_strided_slice %106 {offsets = [0, 0], sizes = [8, 64], strides = [1, 1]} : vector<8x192xf32> to vector<8x64xf32>
    %110 = vector.extract_strided_slice %106 {offsets = [0, 64], sizes = [8, 64], strides = [1, 1]} : vector<8x192xf32> to vector<8x64xf32>
    %111 = vector.extract_strided_slice %106 {offsets = [0, 128], sizes = [8, 64], strides = [1, 1]} : vector<8x192xf32> to vector<8x64xf32>
    %112 = arith.mulf %110, %72 : vector<8x64xf32>
    %113 = arith.mulf %109, %108 : vector<8x64xf32>
    %114 = arith.addf %112, %113 : vector<8x64xf32>
    %115 = math.tanh %114 : vector<8x64xf32>
    %116 = arith.mulf %111, %115 : vector<8x64xf32>
    %117 = vector.extract_strided_slice %116 {offsets = [0, 0], sizes = [8, 32], strides = [1, 1]} : vector<8x64xf32> to vector<8x32xf32>
    %118 = vector.extract_strided_slice %116 {offsets = [0, 32], sizes = [8, 32], strides = [1, 1]} : vector<8x64xf32> to vector<8x32xf32>
    %c8_i32_36 = arith.constant 8 : i32
    %119 = arith.muli %c2_i32, %c8_i32_36 : i32
    %120 = tpu.assume_multiple %119, 8 : i32
    %121 = arith.index_cast %120 : i32 to index
    %c0_37 = arith.constant 0 : index
    %122 = vector.load %arg10[%121, %c0_37] : memref<64x128xf32, #tpu.memory_space<vmem>>, vector<8x32xf32>
    tpu.vector_store %arg10[%121, %c0_37], %117 {strides = array<i32>} : memref<64x128xf32, #tpu.memory_space<vmem>>, vector<8x32xf32>,
    %c8_i32_38 = arith.constant 8 : i32
    %123 = arith.muli %93, %c8_i32_38 : i32
    %124 = tpu.assume_multiple %123, 8 : i32
    %125 = arith.index_cast %124 : i32 to index
    %c32_39 = arith.constant 32 : index
    %126 = vector.load %arg10[%125, %c32_39] : memref<64x128xf32, #tpu.memory_space<vmem>>, vector<8x32xf32>
    tpu.vector_store %arg10[%125, %c32_39], %118 {strides = array<i32>} : memref<64x128xf32, #tpu.memory_space<vmem>>, vector<8x32xf32>,
    %c8_i32_40 = arith.constant 8 : i32
    %127 = arith.muli %93, %c8_i32_40 : i32
    %128 = tpu.assume_multiple %127, 8 : i32
    %129 = arith.index_cast %128 : i32 to index
    %c64_41 = arith.constant 64 : index
    %130 = vector.load %arg10[%129, %c64_41] : memref<64x128xf32, #tpu.memory_space<vmem>>, vector<8x32xf32>
    tpu.vector_store %arg10[%129, %c64_41], %117 {strides = array<i32>} : memref<64x128xf32, #tpu.memory_space<vmem>>, vector<8x32xf32>,
    %c8_i32_42 = arith.constant 8 : i32
    %131 = arith.muli %c2_i32, %c8_i32_42 : i32
    %132 = tpu.assume_multiple %131, 8 : i32
    %133 = arith.index_cast %132 : i32 to index
    %c96_43 = arith.constant 96 : index
    %134 = vector.load %arg10[%133, %c96_43] : memref<64x128xf32, #tpu.memory_space<vmem>>, vector<8x32xf32>
    tpu.vector_store %arg10[%133, %c96_43], %118 {strides = array<i32>} : memref<64x128xf32, #tpu.memory_space<vmem>>, vector<8x32xf32>,
    %c3_i32 = arith.constant 3 : i32
    %c7_i32_44 = arith.constant 7 : i32
    %135 = arith.subi %c7_i32_44, %c3_i32 : i32
    %136 = arith.truncf %116 : vector<8x64xf32> to vector<8x64xbf16>
    %cst_45 = arith.constant dense<0.000000e+00> : vector<8x256xf32>
    %137 = tpu.matmul %136, %2, %cst_45 {dimension_numbers = #tpu.dot_dimension_numbers<[1], [0], [0], [1], [0, 0, 1, 1], [], []>} : vector<8x64xbf16>, vector<64x256xbf16>, vector<8x256xf32> -> vector<8x256xf32>
    %c8_i32_46 = arith.constant 8 : i32
    %138 = arith.muli %c3_i32, %c8_i32_46 : i32
    %139 = tpu.assume_multiple %138, 8 : i32
    %140 = arith.index_cast %139 : i32 to index
    %c0_47 = arith.constant 0 : index
    %141 = vector.load %arg12[%140, %c0_47] : memref<64x256xf32, #tpu.memory_space<vmem>>, vector<8x256xf32>
    %142 = arith.addf %137, %141 : vector<8x256xf32>
    %143 = vector.extract_strided_slice %142 {offsets = [0, 0], sizes = [8, 192], strides = [1, 1]} : vector<8x256xf32> to vector<8x192xf32>
    %144 = arith.negf %143 : vector<8x192xf32>
    %145 = math.exp %144 : vector<8x192xf32>
    %cst_48 = arith.constant 1.000000e+00 : f32
    %146 = vector.broadcast %cst_48 : f32 to vector<8x192xf32>
    %147 = arith.addf %146, %145 : vector<8x192xf32>
    %148 = arith.divf %146, %147 : vector<8x192xf32>
    %149 = vector.extract_strided_slice %142 {offsets = [0, 192], sizes = [8, 64], strides = [1, 1]} : vector<8x256xf32> to vector<8x64xf32>
    %150 = math.tanh %149 : vector<8x64xf32>
    %151 = vector.extract_strided_slice %148 {offsets = [0, 0], sizes = [8, 64], strides = [1, 1]} : vector<8x192xf32> to vector<8x64xf32>
    %152 = vector.extract_strided_slice %148 {offsets = [0, 64], sizes = [8, 64], strides = [1, 1]} : vector<8x192xf32> to vector<8x64xf32>
    %153 = vector.extract_strided_slice %148 {offsets = [0, 128], sizes = [8, 64], strides = [1, 1]} : vector<8x192xf32> to vector<8x64xf32>
    %154 = arith.mulf %152, %114 : vector<8x64xf32>
    %155 = arith.mulf %151, %150 : vector<8x64xf32>
    %156 = arith.addf %154, %155 : vector<8x64xf32>
    %157 = math.tanh %156 : vector<8x64xf32>
    %158 = arith.mulf %153, %157 : vector<8x64xf32>
    %159 = vector.extract_strided_slice %158 {offsets = [0, 0], sizes = [8, 32], strides = [1, 1]} : vector<8x64xf32> to vector<8x32xf32>
    %160 = vector.extract_strided_slice %158 {offsets = [0, 32], sizes = [8, 32], strides = [1, 1]} : vector<8x64xf32> to vector<8x32xf32>
    %c8_i32_49 = arith.constant 8 : i32
    %161 = arith.muli %c3_i32, %c8_i32_49 : i32
    %162 = tpu.assume_multiple %161, 8 : i32
    %163 = arith.index_cast %162 : i32 to index
    %c0_50 = arith.constant 0 : index
    %164 = vector.load %arg10[%163, %c0_50] : memref<64x128xf32, #tpu.memory_space<vmem>>, vector<8x32xf32>
    tpu.vector_store %arg10[%163, %c0_50], %159 {strides = array<i32>} : memref<64x128xf32, #tpu.memory_space<vmem>>, vector<8x32xf32>,
    %c8_i32_51 = arith.constant 8 : i32
    %165 = arith.muli %135, %c8_i32_51 : i32
    %166 = tpu.assume_multiple %165, 8 : i32
    %167 = arith.index_cast %166 : i32 to index
    %c32_52 = arith.constant 32 : index
    %168 = vector.load %arg10[%167, %c32_52] : memref<64x128xf32, #tpu.memory_space<vmem>>, vector<8x32xf32>
    tpu.vector_store %arg10[%167, %c32_52], %160 {strides = array<i32>} : memref<64x128xf32, #tpu.memory_space<vmem>>, vector<8x32xf32>,
    %c8_i32_53 = arith.constant 8 : i32
    %169 = arith.muli %135, %c8_i32_53 : i32
    %170 = tpu.assume_multiple %169, 8 : i32
    %171 = arith.index_cast %170 : i32 to index
    %c64_54 = arith.constant 64 : index
    %172 = vector.load %arg10[%171, %c64_54] : memref<64x128xf32, #tpu.memory_space<vmem>>, vector<8x32xf32>
    tpu.vector_store %arg10[%171, %c64_54], %159 {strides = array<i32>} : memref<64x128xf32, #tpu.memory_space<vmem>>, vector<8x32xf32>,
    %c8_i32_55 = arith.constant 8 : i32
    %173 = arith.muli %c3_i32, %c8_i32_55 : i32
    %174 = tpu.assume_multiple %173, 8 : i32
    %175 = arith.index_cast %174 : i32 to index
    %c96_56 = arith.constant 96 : index
    %176 = vector.load %arg10[%175, %c96_56] : memref<64x128xf32, #tpu.memory_space<vmem>>, vector<8x32xf32>
    tpu.vector_store %arg10[%175, %c96_56], %160 {strides = array<i32>} : memref<64x128xf32, #tpu.memory_space<vmem>>, vector<8x32xf32>,
    %c4_i32 = arith.constant 4 : i32
    %c7_i32_57 = arith.constant 7 : i32
    %177 = arith.subi %c7_i32_57, %c4_i32 : i32
    %178 = arith.truncf %158 : vector<8x64xf32> to vector<8x64xbf16>
    %cst_58 = arith.constant dense<0.000000e+00> : vector<8x256xf32>
    %179 = tpu.matmul %178, %2, %cst_58 {dimension_numbers = #tpu.dot_dimension_numbers<[1], [0], [0], [1], [0, 0, 1, 1], [], []>} : vector<8x64xbf16>, vector<64x256xbf16>, vector<8x256xf32> -> vector<8x256xf32>
    %c8_i32_59 = arith.constant 8 : i32
    %180 = arith.muli %c4_i32, %c8_i32_59 : i32
    %181 = tpu.assume_multiple %180, 8 : i32
    %182 = arith.index_cast %181 : i32 to index
    %c0_60 = arith.constant 0 : index
    %183 = vector.load %arg12[%182, %c0_60] : memref<64x256xf32, #tpu.memory_space<vmem>>, vector<8x256xf32>
    %184 = arith.addf %179, %183 : vector<8x256xf32>
    %185 = vector.extract_strided_slice %184 {offsets = [0, 0], sizes = [8, 192], strides = [1, 1]} : vector<8x256xf32> to vector<8x192xf32>
    %186 = arith.negf %185 : vector<8x192xf32>
    %187 = math.exp %186 : vector<8x192xf32>
    %cst_61 = arith.constant 1.000000e+00 : f32
    %188 = vector.broadcast %cst_61 : f32 to vector<8x192xf32>
    %189 = arith.addf %188, %187 : vector<8x192xf32>
    %190 = arith.divf %188, %189 : vector<8x192xf32>
    %191 = vector.extract_strided_slice %184 {offsets = [0, 192], sizes = [8, 64], strides = [1, 1]} : vector<8x256xf32> to vector<8x64xf32>
    %192 = math.tanh %191 : vector<8x64xf32>
    %193 = vector.extract_strided_slice %190 {offsets = [0, 0], sizes = [8, 64], strides = [1, 1]} : vector<8x192xf32> to vector<8x64xf32>
    %194 = vector.extract_strided_slice %190 {offsets = [0, 64], sizes = [8, 64], strides = [1, 1]} : vector<8x192xf32> to vector<8x64xf32>
    %195 = vector.extract_strided_slice %190 {offsets = [0, 128], sizes = [8, 64], strides = [1, 1]} : vector<8x192xf32> to vector<8x64xf32>
    %196 = arith.mulf %194, %156 : vector<8x64xf32>
    %197 = arith.mulf %193, %192 : vector<8x64xf32>
    %198 = arith.addf %196, %197 : vector<8x64xf32>
    %199 = math.tanh %198 : vector<8x64xf32>
    %200 = arith.mulf %195, %199 : vector<8x64xf32>
    %201 = vector.extract_strided_slice %200 {offsets = [0, 0], sizes = [8, 32], strides = [1, 1]} : vector<8x64xf32> to vector<8x32xf32>
    %202 = vector.extract_strided_slice %200 {offsets = [0, 32], sizes = [8, 32], strides = [1, 1]} : vector<8x64xf32> to vector<8x32xf32>
    %c8_i32_62 = arith.constant 8 : i32
    %203 = arith.muli %c4_i32, %c8_i32_62 : i32
    %204 = tpu.assume_multiple %203, 8 : i32
    %205 = arith.index_cast %204 : i32 to index
    %c0_63 = arith.constant 0 : index
    %206 = vector.load %arg10[%205, %c0_63] : memref<64x128xf32, #tpu.memory_space<vmem>>, vector<8x32xf32>
    tpu.vector_store %arg10[%205, %c0_63], %201 {strides = array<i32>} : memref<64x128xf32, #tpu.memory_space<vmem>>, vector<8x32xf32>,
    %c8_i32_64 = arith.constant 8 : i32
    %207 = arith.muli %177, %c8_i32_64 : i32
    %208 = tpu.assume_multiple %207, 8 : i32
    %209 = arith.index_cast %208 : i32 to index
    %c32_65 = arith.constant 32 : index
    %210 = vector.load %arg10[%209, %c32_65] : memref<64x128xf32, #tpu.memory_space<vmem>>, vector<8x32xf32>
    tpu.vector_store %arg10[%209, %c32_65], %202 {strides = array<i32>} : memref<64x128xf32, #tpu.memory_space<vmem>>, vector<8x32xf32>,
    %c8_i32_66 = arith.constant 8 : i32
    %211 = arith.muli %177, %c8_i32_66 : i32
    %212 = tpu.assume_multiple %211, 8 : i32
    %213 = arith.index_cast %212 : i32 to index
    %c64_67 = arith.constant 64 : index
    %214 = vector.load %arg10[%213, %c64_67] : memref<64x128xf32, #tpu.memory_space<vmem>>, vector<8x32xf32>
    tpu.vector_store %arg10[%213, %c64_67], %201 {strides = array<i32>} : memref<64x128xf32, #tpu.memory_space<vmem>>, vector<8x32xf32>,
    %c8_i32_68 = arith.constant 8 : i32
    %215 = arith.muli %c4_i32, %c8_i32_68 : i32
    %216 = tpu.assume_multiple %215, 8 : i32
    %217 = arith.index_cast %216 : i32 to index
    %c96_69 = arith.constant 96 : index
    %218 = vector.load %arg10[%217, %c96_69] : memref<64x128xf32, #tpu.memory_space<vmem>>, vector<8x32xf32>
    tpu.vector_store %arg10[%217, %c96_69], %202 {strides = array<i32>} : memref<64x128xf32, #tpu.memory_space<vmem>>, vector<8x32xf32>,
    %c5_i32 = arith.constant 5 : i32
    %c7_i32_70 = arith.constant 7 : i32
    %219 = arith.subi %c7_i32_70, %c5_i32 : i32
    %220 = arith.truncf %200 : vector<8x64xf32> to vector<8x64xbf16>
    %cst_71 = arith.constant dense<0.000000e+00> : vector<8x256xf32>
    %221 = tpu.matmul %220, %2, %cst_71 {dimension_numbers = #tpu.dot_dimension_numbers<[1], [0], [0], [1], [0, 0, 1, 1], [], []>} : vector<8x64xbf16>, vector<64x256xbf16>, vector<8x256xf32> -> vector<8x256xf32>
    %c8_i32_72 = arith.constant 8 : i32
    %222 = arith.muli %c5_i32, %c8_i32_72 : i32
    %223 = tpu.assume_multiple %222, 8 : i32
    %224 = arith.index_cast %223 : i32 to index
    %c0_73 = arith.constant 0 : index
    %225 = vector.load %arg12[%224, %c0_73] : memref<64x256xf32, #tpu.memory_space<vmem>>, vector<8x256xf32>
    %226 = arith.addf %221, %225 : vector<8x256xf32>
    %227 = vector.extract_strided_slice %226 {offsets = [0, 0], sizes = [8, 192], strides = [1, 1]} : vector<8x256xf32> to vector<8x192xf32>
    %228 = arith.negf %227 : vector<8x192xf32>
    %229 = math.exp %228 : vector<8x192xf32>
    %cst_74 = arith.constant 1.000000e+00 : f32
    %230 = vector.broadcast %cst_74 : f32 to vector<8x192xf32>
    %231 = arith.addf %230, %229 : vector<8x192xf32>
    %232 = arith.divf %230, %231 : vector<8x192xf32>
    %233 = vector.extract_strided_slice %226 {offsets = [0, 192], sizes = [8, 64], strides = [1, 1]} : vector<8x256xf32> to vector<8x64xf32>
    %234 = math.tanh %233 : vector<8x64xf32>
    %235 = vector.extract_strided_slice %232 {offsets = [0, 0], sizes = [8, 64], strides = [1, 1]} : vector<8x192xf32> to vector<8x64xf32>
    %236 = vector.extract_strided_slice %232 {offsets = [0, 64], sizes = [8, 64], strides = [1, 1]} : vector<8x192xf32> to vector<8x64xf32>
    %237 = vector.extract_strided_slice %232 {offsets = [0, 128], sizes = [8, 64], strides = [1, 1]} : vector<8x192xf32> to vector<8x64xf32>
    %238 = arith.mulf %236, %198 : vector<8x64xf32>
    %239 = arith.mulf %235, %234 : vector<8x64xf32>
    %240 = arith.addf %238, %239 : vector<8x64xf32>
    %241 = math.tanh %240 : vector<8x64xf32>
    %242 = arith.mulf %237, %241 : vector<8x64xf32>
    %243 = vector.extract_strided_slice %242 {offsets = [0, 0], sizes = [8, 32], strides = [1, 1]} : vector<8x64xf32> to vector<8x32xf32>
    %244 = vector.extract_strided_slice %242 {offsets = [0, 32], sizes = [8, 32], strides = [1, 1]} : vector<8x64xf32> to vector<8x32xf32>
    %c8_i32_75 = arith.constant 8 : i32
    %245 = arith.muli %c5_i32, %c8_i32_75 : i32
    %246 = tpu.assume_multiple %245, 8 : i32
    %247 = arith.index_cast %246 : i32 to index
    %c0_76 = arith.constant 0 : index
    %248 = vector.load %arg10[%247, %c0_76] : memref<64x128xf32, #tpu.memory_space<vmem>>, vector<8x32xf32>
    tpu.vector_store %arg10[%247, %c0_76], %243 {strides = array<i32>} : memref<64x128xf32, #tpu.memory_space<vmem>>, vector<8x32xf32>,
    %c8_i32_77 = arith.constant 8 : i32
    %249 = arith.muli %219, %c8_i32_77 : i32
    %250 = tpu.assume_multiple %249, 8 : i32
    %251 = arith.index_cast %250 : i32 to index
    %c32_78 = arith.constant 32 : index
    %252 = vector.load %arg10[%251, %c32_78] : memref<64x128xf32, #tpu.memory_space<vmem>>, vector<8x32xf32>
    tpu.vector_store %arg10[%251, %c32_78], %244 {strides = array<i32>} : memref<64x128xf32, #tpu.memory_space<vmem>>, vector<8x32xf32>,
    %c8_i32_79 = arith.constant 8 : i32
    %253 = arith.muli %219, %c8_i32_79 : i32
    %254 = tpu.assume_multiple %253, 8 : i32
    %255 = arith.index_cast %254 : i32 to index
    %c64_80 = arith.constant 64 : index
    %256 = vector.load %arg10[%255, %c64_80] : memref<64x128xf32, #tpu.memory_space<vmem>>, vector<8x32xf32>
    tpu.vector_store %arg10[%255, %c64_80], %243 {strides = array<i32>} : memref<64x128xf32, #tpu.memory_space<vmem>>, vector<8x32xf32>,
    %c8_i32_81 = arith.constant 8 : i32
    %257 = arith.muli %c5_i32, %c8_i32_81 : i32
    %258 = tpu.assume_multiple %257, 8 : i32
    %259 = arith.index_cast %258 : i32 to index
    %c96_82 = arith.constant 96 : index
    %260 = vector.load %arg10[%259, %c96_82] : memref<64x128xf32, #tpu.memory_space<vmem>>, vector<8x32xf32>
    tpu.vector_store %arg10[%259, %c96_82], %244 {strides = array<i32>} : memref<64x128xf32, #tpu.memory_space<vmem>>, vector<8x32xf32>,
    %c6_i32 = arith.constant 6 : i32
    %c7_i32_83 = arith.constant 7 : i32
    %261 = arith.subi %c7_i32_83, %c6_i32 : i32
    %262 = arith.truncf %242 : vector<8x64xf32> to vector<8x64xbf16>
    %cst_84 = arith.constant dense<0.000000e+00> : vector<8x256xf32>
    %263 = tpu.matmul %262, %2, %cst_84 {dimension_numbers = #tpu.dot_dimension_numbers<[1], [0], [0], [1], [0, 0, 1, 1], [], []>} : vector<8x64xbf16>, vector<64x256xbf16>, vector<8x256xf32> -> vector<8x256xf32>
    %c8_i32_85 = arith.constant 8 : i32
    %264 = arith.muli %c6_i32, %c8_i32_85 : i32
    %265 = tpu.assume_multiple %264, 8 : i32
    %266 = arith.index_cast %265 : i32 to index
    %c0_86 = arith.constant 0 : index
    %267 = vector.load %arg12[%266, %c0_86] : memref<64x256xf32, #tpu.memory_space<vmem>>, vector<8x256xf32>
    %268 = arith.addf %263, %267 : vector<8x256xf32>
    %269 = vector.extract_strided_slice %268 {offsets = [0, 0], sizes = [8, 192], strides = [1, 1]} : vector<8x256xf32> to vector<8x192xf32>
    %270 = arith.negf %269 : vector<8x192xf32>
    %271 = math.exp %270 : vector<8x192xf32>
    %cst_87 = arith.constant 1.000000e+00 : f32
    %272 = vector.broadcast %cst_87 : f32 to vector<8x192xf32>
    %273 = arith.addf %272, %271 : vector<8x192xf32>
    %274 = arith.divf %272, %273 : vector<8x192xf32>
    %275 = vector.extract_strided_slice %268 {offsets = [0, 192], sizes = [8, 64], strides = [1, 1]} : vector<8x256xf32> to vector<8x64xf32>
    %276 = math.tanh %275 : vector<8x64xf32>
    %277 = vector.extract_strided_slice %274 {offsets = [0, 0], sizes = [8, 64], strides = [1, 1]} : vector<8x192xf32> to vector<8x64xf32>
    %278 = vector.extract_strided_slice %274 {offsets = [0, 64], sizes = [8, 64], strides = [1, 1]} : vector<8x192xf32> to vector<8x64xf32>
    %279 = vector.extract_strided_slice %274 {offsets = [0, 128], sizes = [8, 64], strides = [1, 1]} : vector<8x192xf32> to vector<8x64xf32>
    %280 = arith.mulf %278, %240 : vector<8x64xf32>
    %281 = arith.mulf %277, %276 : vector<8x64xf32>
    %282 = arith.addf %280, %281 : vector<8x64xf32>
    %283 = math.tanh %282 : vector<8x64xf32>
    %284 = arith.mulf %279, %283 : vector<8x64xf32>
    %285 = vector.extract_strided_slice %284 {offsets = [0, 0], sizes = [8, 32], strides = [1, 1]} : vector<8x64xf32> to vector<8x32xf32>
    %286 = vector.extract_strided_slice %284 {offsets = [0, 32], sizes = [8, 32], strides = [1, 1]} : vector<8x64xf32> to vector<8x32xf32>
    %c8_i32_88 = arith.constant 8 : i32
    %287 = arith.muli %c6_i32, %c8_i32_88 : i32
    %288 = tpu.assume_multiple %287, 8 : i32
    %289 = arith.index_cast %288 : i32 to index
    %c0_89 = arith.constant 0 : index
    %290 = vector.load %arg10[%289, %c0_89] : memref<64x128xf32, #tpu.memory_space<vmem>>, vector<8x32xf32>
    tpu.vector_store %arg10[%289, %c0_89], %285 {strides = array<i32>} : memref<64x128xf32, #tpu.memory_space<vmem>>, vector<8x32xf32>,
    %c8_i32_90 = arith.constant 8 : i32
    %291 = arith.muli %261, %c8_i32_90 : i32
    %292 = tpu.assume_multiple %291, 8 : i32
    %293 = arith.index_cast %292 : i32 to index
    %c32_91 = arith.constant 32 : index
    %294 = vector.load %arg10[%293, %c32_91] : memref<64x128xf32, #tpu.memory_space<vmem>>, vector<8x32xf32>
    tpu.vector_store %arg10[%293, %c32_91], %286 {strides = array<i32>} : memref<64x128xf32, #tpu.memory_space<vmem>>, vector<8x32xf32>,
    %c8_i32_92 = arith.constant 8 : i32
    %295 = arith.muli %261, %c8_i32_92 : i32
    %296 = tpu.assume_multiple %295, 8 : i32
    %297 = arith.index_cast %296 : i32 to index
    %c64_93 = arith.constant 64 : index
    %298 = vector.load %arg10[%297, %c64_93] : memref<64x128xf32, #tpu.memory_space<vmem>>, vector<8x32xf32>
    tpu.vector_store %arg10[%297, %c64_93], %285 {strides = array<i32>} : memref<64x128xf32, #tpu.memory_space<vmem>>, vector<8x32xf32>,
    %c8_i32_94 = arith.constant 8 : i32
    %299 = arith.muli %c6_i32, %c8_i32_94 : i32
    %300 = tpu.assume_multiple %299, 8 : i32
    %301 = arith.index_cast %300 : i32 to index
    %c96_95 = arith.constant 96 : index
    %302 = vector.load %arg10[%301, %c96_95] : memref<64x128xf32, #tpu.memory_space<vmem>>, vector<8x32xf32>
    tpu.vector_store %arg10[%301, %c96_95], %286 {strides = array<i32>} : memref<64x128xf32, #tpu.memory_space<vmem>>, vector<8x32xf32>,
    %c7_i32_96 = arith.constant 7 : i32
    %c7_i32_97 = arith.constant 7 : i32
    %303 = arith.subi %c7_i32_97, %c7_i32_96 : i32
    %304 = arith.truncf %284 : vector<8x64xf32> to vector<8x64xbf16>
    %cst_98 = arith.constant dense<0.000000e+00> : vector<8x256xf32>
    %305 = tpu.matmul %304, %2, %cst_98 {dimension_numbers = #tpu.dot_dimension_numbers<[1], [0], [0], [1], [0, 0, 1, 1], [], []>} : vector<8x64xbf16>, vector<64x256xbf16>, vector<8x256xf32> -> vector<8x256xf32>
    %c8_i32_99 = arith.constant 8 : i32
    %306 = arith.muli %c7_i32_96, %c8_i32_99 : i32
    %307 = tpu.assume_multiple %306, 8 : i32
    %308 = arith.index_cast %307 : i32 to index
    %c0_100 = arith.constant 0 : index
    %309 = vector.load %arg12[%308, %c0_100] : memref<64x256xf32, #tpu.memory_space<vmem>>, vector<8x256xf32>
    %310 = arith.addf %305, %309 : vector<8x256xf32>
    %311 = vector.extract_strided_slice %310 {offsets = [0, 0], sizes = [8, 192], strides = [1, 1]} : vector<8x256xf32> to vector<8x192xf32>
    %312 = arith.negf %311 : vector<8x192xf32>
    %313 = math.exp %312 : vector<8x192xf32>
    %cst_101 = arith.constant 1.000000e+00 : f32
    %314 = vector.broadcast %cst_101 : f32 to vector<8x192xf32>
    %315 = arith.addf %314, %313 : vector<8x192xf32>
    %316 = arith.divf %314, %315 : vector<8x192xf32>
    %317 = vector.extract_strided_slice %310 {offsets = [0, 192], sizes = [8, 64], strides = [1, 1]} : vector<8x256xf32> to vector<8x64xf32>
    %318 = math.tanh %317 : vector<8x64xf32>
    %319 = vector.extract_strided_slice %316 {offsets = [0, 0], sizes = [8, 64], strides = [1, 1]} : vector<8x192xf32> to vector<8x64xf32>
    %320 = vector.extract_strided_slice %316 {offsets = [0, 64], sizes = [8, 64], strides = [1, 1]} : vector<8x192xf32> to vector<8x64xf32>
    %321 = vector.extract_strided_slice %316 {offsets = [0, 128], sizes = [8, 64], strides = [1, 1]} : vector<8x192xf32> to vector<8x64xf32>
    %322 = arith.mulf %320, %282 : vector<8x64xf32>
    %323 = arith.mulf %319, %318 : vector<8x64xf32>
    %324 = arith.addf %322, %323 : vector<8x64xf32>
    %325 = math.tanh %324 : vector<8x64xf32>
    %326 = arith.mulf %321, %325 : vector<8x64xf32>
    %327 = vector.extract_strided_slice %326 {offsets = [0, 0], sizes = [8, 32], strides = [1, 1]} : vector<8x64xf32> to vector<8x32xf32>
    %328 = vector.extract_strided_slice %326 {offsets = [0, 32], sizes = [8, 32], strides = [1, 1]} : vector<8x64xf32> to vector<8x32xf32>
    %c8_i32_102 = arith.constant 8 : i32
    %329 = arith.muli %c7_i32_96, %c8_i32_102 : i32
    %330 = tpu.assume_multiple %329, 8 : i32
    %331 = arith.index_cast %330 : i32 to index
    %c0_103 = arith.constant 0 : index
    %332 = vector.load %arg10[%331, %c0_103] : memref<64x128xf32, #tpu.memory_space<vmem>>, vector<8x32xf32>
    tpu.vector_store %arg10[%331, %c0_103], %327 {strides = array<i32>} : memref<64x128xf32, #tpu.memory_space<vmem>>, vector<8x32xf32>,
    %c8_i32_104 = arith.constant 8 : i32
    %333 = arith.muli %303, %c8_i32_104 : i32
    %334 = tpu.assume_multiple %333, 8 : i32
    %335 = arith.index_cast %334 : i32 to index
    %c32_105 = arith.constant 32 : index
    %336 = vector.load %arg10[%335, %c32_105] : memref<64x128xf32, #tpu.memory_space<vmem>>, vector<8x32xf32>
    tpu.vector_store %arg10[%335, %c32_105], %328 {strides = array<i32>} : memref<64x128xf32, #tpu.memory_space<vmem>>, vector<8x32xf32>,
    %c8_i32_106 = arith.constant 8 : i32
    %337 = arith.muli %303, %c8_i32_106 : i32
    %338 = tpu.assume_multiple %337, 8 : i32
    %339 = arith.index_cast %338 : i32 to index
    %c64_107 = arith.constant 64 : index
    %340 = vector.load %arg10[%339, %c64_107] : memref<64x128xf32, #tpu.memory_space<vmem>>, vector<8x32xf32>
    tpu.vector_store %arg10[%339, %c64_107], %327 {strides = array<i32>} : memref<64x128xf32, #tpu.memory_space<vmem>>, vector<8x32xf32>,
    %c8_i32_108 = arith.constant 8 : i32
    %341 = arith.muli %c7_i32_96, %c8_i32_108 : i32
    %342 = tpu.assume_multiple %341, 8 : i32
    %343 = arith.index_cast %342 : i32 to index
    %c96_109 = arith.constant 96 : index
    %344 = vector.load %arg10[%343, %c96_109] : memref<64x128xf32, #tpu.memory_space<vmem>>, vector<8x32xf32>
    tpu.vector_store %arg10[%343, %c96_109], %328 {strides = array<i32>} : memref<64x128xf32, #tpu.memory_space<vmem>>, vector<8x32xf32>,
    %c8_i32_110 = arith.constant 8 : i32
    %c0_111 = arith.constant 0 : index
    %c0_112 = arith.constant 0 : index
    %345 = vector.load %arg4[%c0_111, %c0_112] : memref<128x256xbf16, #tpu.memory_space<vmem>>, vector<128x256xbf16>
    %c0_113 = arith.constant 0 : index
    %c0_114 = arith.constant 0 : index
    %346 = vector.load %arg5[%c0_113, %c0_114] : memref<64x256xbf16, #tpu.memory_space<vmem>>, vector<64x256xbf16>
    %c0_115 = arith.constant 0 : index
    %c0_116 = arith.constant 0 : index
    %347 = vector.load %arg6[%c0_115, %c0_116] : memref<1x256xf32, #tpu.memory_space<vmem>>, vector<1x256xf32>
    %c0_117 = arith.constant 0 : index
    %c0_118 = arith.constant 0 : index
    %348 = vector.load %arg10[%c0_117, %c0_118] : memref<64x128xf32, #tpu.memory_space<vmem>>, vector<64x128xf32>
    %349 = arith.truncf %348 : vector<64x128xf32> to vector<64x128xbf16>
    %cst_119 = arith.constant dense<0.000000e+00> : vector<64x256xf32>
    %350 = tpu.matmul %349, %345, %cst_119 {dimension_numbers = #tpu.dot_dimension_numbers<[1], [0], [0], [1], [0, 0, 1, 1], [], []>} : vector<64x128xbf16>, vector<128x256xbf16>, vector<64x256xf32> -> vector<64x256xf32>
    %351 = vector.broadcast %347 : vector<1x256xf32> to vector<64x256xf32>
    %352 = arith.addf %350, %351 : vector<64x256xf32>
    %c0_120 = arith.constant 0 : index
    %c0_121 = arith.constant 0 : index
    %353 = vector.load %arg12[%c0_120, %c0_121] : memref<64x256xf32, #tpu.memory_space<vmem>>, vector<64x256xf32>
    tpu.vector_store %arg12[%c0_120, %c0_121], %352 {strides = array<i32>} : memref<64x256xf32, #tpu.memory_space<vmem>>, vector<64x256xf32>,
    %c0_i32_122 = arith.constant 0 : i32
    %c7_i32_123 = arith.constant 7 : i32
    %354 = arith.subi %c7_i32_123, %c0_i32_122 : i32
    %355 = arith.truncf %0 : vector<8x64xf32> to vector<8x64xbf16>
    %cst_124 = arith.constant dense<0.000000e+00> : vector<8x256xf32>
    %356 = tpu.matmul %355, %346, %cst_124 {dimension_numbers = #tpu.dot_dimension_numbers<[1], [0], [0], [1], [0, 0, 1, 1], [], []>} : vector<8x64xbf16>, vector<64x256xbf16>, vector<8x256xf32> -> vector<8x256xf32>
    %c8_i32_125 = arith.constant 8 : i32
    %357 = arith.muli %c0_i32_122, %c8_i32_125 : i32
    %358 = tpu.assume_multiple %357, 8 : i32
    %359 = arith.index_cast %358 : i32 to index
    %c0_126 = arith.constant 0 : index
    %360 = vector.load %arg12[%359, %c0_126] : memref<64x256xf32, #tpu.memory_space<vmem>>, vector<8x256xf32>
    %361 = arith.addf %356, %360 : vector<8x256xf32>
    %362 = vector.extract_strided_slice %361 {offsets = [0, 0], sizes = [8, 192], strides = [1, 1]} : vector<8x256xf32> to vector<8x192xf32>
    %363 = arith.negf %362 : vector<8x192xf32>
    %364 = math.exp %363 : vector<8x192xf32>
    %cst_127 = arith.constant 1.000000e+00 : f32
    %365 = vector.broadcast %cst_127 : f32 to vector<8x192xf32>
    %366 = arith.addf %365, %364 : vector<8x192xf32>
    %367 = arith.divf %365, %366 : vector<8x192xf32>
    %368 = vector.extract_strided_slice %361 {offsets = [0, 192], sizes = [8, 64], strides = [1, 1]} : vector<8x256xf32> to vector<8x64xf32>
    %369 = math.tanh %368 : vector<8x64xf32>
    %370 = vector.extract_strided_slice %367 {offsets = [0, 0], sizes = [8, 64], strides = [1, 1]} : vector<8x192xf32> to vector<8x64xf32>
    %371 = vector.extract_strided_slice %367 {offsets = [0, 64], sizes = [8, 64], strides = [1, 1]} : vector<8x192xf32> to vector<8x64xf32>
    %372 = vector.extract_strided_slice %367 {offsets = [0, 128], sizes = [8, 64], strides = [1, 1]} : vector<8x192xf32> to vector<8x64xf32>
    %373 = arith.mulf %371, %0 : vector<8x64xf32>
    %374 = arith.mulf %370, %369 : vector<8x64xf32>
    %375 = arith.addf %373, %374 : vector<8x64xf32>
    %376 = math.tanh %375 : vector<8x64xf32>
    %377 = arith.mulf %372, %376 : vector<8x64xf32>
    %378 = vector.extract_strided_slice %377 {offsets = [0, 0], sizes = [8, 32], strides = [1, 1]} : vector<8x64xf32> to vector<8x32xf32>
    %379 = vector.extract_strided_slice %377 {offsets = [0, 32], sizes = [8, 32], strides = [1, 1]} : vector<8x64xf32> to vector<8x32xf32>
    %c8_i32_128 = arith.constant 8 : i32
    %380 = arith.muli %c0_i32_122, %c8_i32_128 : i32
    %381 = tpu.assume_multiple %380, 8 : i32
    %382 = arith.index_cast %381 : i32 to index
    %c0_129 = arith.constant 0 : index
    %383 = vector.load %arg11[%382, %c0_129] : memref<64x128xf32, #tpu.memory_space<vmem>>, vector<8x32xf32>
    tpu.vector_store %arg11[%382, %c0_129], %378 {strides = array<i32>} : memref<64x128xf32, #tpu.memory_space<vmem>>, vector<8x32xf32>,
    %c8_i32_130 = arith.constant 8 : i32
    %384 = arith.muli %354, %c8_i32_130 : i32
    %385 = tpu.assume_multiple %384, 8 : i32
    %386 = arith.index_cast %385 : i32 to index
    %c32_131 = arith.constant 32 : index
    %387 = vector.load %arg11[%386, %c32_131] : memref<64x128xf32, #tpu.memory_space<vmem>>, vector<8x32xf32>
    tpu.vector_store %arg11[%386, %c32_131], %379 {strides = array<i32>} : memref<64x128xf32, #tpu.memory_space<vmem>>, vector<8x32xf32>,
    %c1_i32_132 = arith.constant 1 : i32
    %c7_i32_133 = arith.constant 7 : i32
    %388 = arith.subi %c7_i32_133, %c1_i32_132 : i32
    %389 = arith.truncf %377 : vector<8x64xf32> to vector<8x64xbf16>
    %cst_134 = arith.constant dense<0.000000e+00> : vector<8x256xf32>
    %390 = tpu.matmul %389, %346, %cst_134 {dimension_numbers = #tpu.dot_dimension_numbers<[1], [0], [0], [1], [0, 0, 1, 1], [], []>} : vector<8x64xbf16>, vector<64x256xbf16>, vector<8x256xf32> -> vector<8x256xf32>
    %c8_i32_135 = arith.constant 8 : i32
    %391 = arith.muli %c1_i32_132, %c8_i32_135 : i32
    %392 = tpu.assume_multiple %391, 8 : i32
    %393 = arith.index_cast %392 : i32 to index
    %c0_136 = arith.constant 0 : index
    %394 = vector.load %arg12[%393, %c0_136] : memref<64x256xf32, #tpu.memory_space<vmem>>, vector<8x256xf32>
    %395 = arith.addf %390, %394 : vector<8x256xf32>
    %396 = vector.extract_strided_slice %395 {offsets = [0, 0], sizes = [8, 192], strides = [1, 1]} : vector<8x256xf32> to vector<8x192xf32>
    %397 = arith.negf %396 : vector<8x192xf32>
    %398 = math.exp %397 : vector<8x192xf32>
    %cst_137 = arith.constant 1.000000e+00 : f32
    %399 = vector.broadcast %cst_137 : f32 to vector<8x192xf32>
    %400 = arith.addf %399, %398 : vector<8x192xf32>
    %401 = arith.divf %399, %400 : vector<8x192xf32>
    %402 = vector.extract_strided_slice %395 {offsets = [0, 192], sizes = [8, 64], strides = [1, 1]} : vector<8x256xf32> to vector<8x64xf32>
    %403 = math.tanh %402 : vector<8x64xf32>
    %404 = vector.extract_strided_slice %401 {offsets = [0, 0], sizes = [8, 64], strides = [1, 1]} : vector<8x192xf32> to vector<8x64xf32>
    %405 = vector.extract_strided_slice %401 {offsets = [0, 64], sizes = [8, 64], strides = [1, 1]} : vector<8x192xf32> to vector<8x64xf32>
    %406 = vector.extract_strided_slice %401 {offsets = [0, 128], sizes = [8, 64], strides = [1, 1]} : vector<8x192xf32> to vector<8x64xf32>
    %407 = arith.mulf %405, %375 : vector<8x64xf32>
    %408 = arith.mulf %404, %403 : vector<8x64xf32>
    %409 = arith.addf %407, %408 : vector<8x64xf32>
    %410 = math.tanh %409 : vector<8x64xf32>
    %411 = arith.mulf %406, %410 : vector<8x64xf32>
    %412 = vector.extract_strided_slice %411 {offsets = [0, 0], sizes = [8, 32], strides = [1, 1]} : vector<8x64xf32> to vector<8x32xf32>
    %413 = vector.extract_strided_slice %411 {offsets = [0, 32], sizes = [8, 32], strides = [1, 1]} : vector<8x64xf32> to vector<8x32xf32>
    %c8_i32_138 = arith.constant 8 : i32
    %414 = arith.muli %c1_i32_132, %c8_i32_138 : i32
    %415 = tpu.assume_multiple %414, 8 : i32
    %416 = arith.index_cast %415 : i32 to index
    %c0_139 = arith.constant 0 : index
    %417 = vector.load %arg11[%416, %c0_139] : memref<64x128xf32, #tpu.memory_space<vmem>>, vector<8x32xf32>
    tpu.vector_store %arg11[%416, %c0_139], %412 {strides = array<i32>} : memref<64x128xf32, #tpu.memory_space<vmem>>, vector<8x32xf32>,
    %c8_i32_140 = arith.constant 8 : i32
    %418 = arith.muli %388, %c8_i32_140 : i32
    %419 = tpu.assume_multiple %418, 8 : i32
    %420 = arith.index_cast %419 : i32 to index
    %c32_141 = arith.constant 32 : index
    %421 = vector.load %arg11[%420, %c32_141] : memref<64x128xf32, #tpu.memory_space<vmem>>, vector<8x32xf32>
    tpu.vector_store %arg11[%420, %c32_141], %413 {strides = array<i32>} : memref<64x128xf32, #tpu.memory_space<vmem>>, vector<8x32xf32>,
    %c2_i32_142 = arith.constant 2 : i32
    %c7_i32_143 = arith.constant 7 : i32
    %422 = arith.subi %c7_i32_143, %c2_i32_142 : i32
    %423 = arith.truncf %411 : vector<8x64xf32> to vector<8x64xbf16>
    %cst_144 = arith.constant dense<0.000000e+00> : vector<8x256xf32>
    %424 = tpu.matmul %423, %346, %cst_144 {dimension_numbers = #tpu.dot_dimension_numbers<[1], [0], [0], [1], [0, 0, 1, 1], [], []>} : vector<8x64xbf16>, vector<64x256xbf16>, vector<8x256xf32> -> vector<8x256xf32>
    %c8_i32_145 = arith.constant 8 : i32
    %425 = arith.muli %c2_i32_142, %c8_i32_145 : i32
    %426 = tpu.assume_multiple %425, 8 : i32
    %427 = arith.index_cast %426 : i32 to index
    %c0_146 = arith.constant 0 : index
    %428 = vector.load %arg12[%427, %c0_146] : memref<64x256xf32, #tpu.memory_space<vmem>>, vector<8x256xf32>
    %429 = arith.addf %424, %428 : vector<8x256xf32>
    %430 = vector.extract_strided_slice %429 {offsets = [0, 0], sizes = [8, 192], strides = [1, 1]} : vector<8x256xf32> to vector<8x192xf32>
    %431 = arith.negf %430 : vector<8x192xf32>
    %432 = math.exp %431 : vector<8x192xf32>
    %cst_147 = arith.constant 1.000000e+00 : f32
    %433 = vector.broadcast %cst_147 : f32 to vector<8x192xf32>
    %434 = arith.addf %433, %432 : vector<8x192xf32>
    %435 = arith.divf %433, %434 : vector<8x192xf32>
    %436 = vector.extract_strided_slice %429 {offsets = [0, 192], sizes = [8, 64], strides = [1, 1]} : vector<8x256xf32> to vector<8x64xf32>
    %437 = math.tanh %436 : vector<8x64xf32>
    %438 = vector.extract_strided_slice %435 {offsets = [0, 0], sizes = [8, 64], strides = [1, 1]} : vector<8x192xf32> to vector<8x64xf32>
    %439 = vector.extract_strided_slice %435 {offsets = [0, 64], sizes = [8, 64], strides = [1, 1]} : vector<8x192xf32> to vector<8x64xf32>
    %440 = vector.extract_strided_slice %435 {offsets = [0, 128], sizes = [8, 64], strides = [1, 1]} : vector<8x192xf32> to vector<8x64xf32>
    %441 = arith.mulf %439, %409 : vector<8x64xf32>
    %442 = arith.mulf %438, %437 : vector<8x64xf32>
    %443 = arith.addf %441, %442 : vector<8x64xf32>
    %444 = math.tanh %443 : vector<8x64xf32>
    %445 = arith.mulf %440, %444 : vector<8x64xf32>
    %446 = vector.extract_strided_slice %445 {offsets = [0, 0], sizes = [8, 32], strides = [1, 1]} : vector<8x64xf32> to vector<8x32xf32>
    %447 = vector.extract_strided_slice %445 {offsets = [0, 32], sizes = [8, 32], strides = [1, 1]} : vector<8x64xf32> to vector<8x32xf32>
    %c8_i32_148 = arith.constant 8 : i32
    %448 = arith.muli %c2_i32_142, %c8_i32_148 : i32
    %449 = tpu.assume_multiple %448, 8 : i32
    %450 = arith.index_cast %449 : i32 to index
    %c0_149 = arith.constant 0 : index
    %451 = vector.load %arg11[%450, %c0_149] : memref<64x128xf32, #tpu.memory_space<vmem>>, vector<8x32xf32>
    tpu.vector_store %arg11[%450, %c0_149], %446 {strides = array<i32>} : memref<64x128xf32, #tpu.memory_space<vmem>>, vector<8x32xf32>,
    %c8_i32_150 = arith.constant 8 : i32
    %452 = arith.muli %422, %c8_i32_150 : i32
    %453 = tpu.assume_multiple %452, 8 : i32
    %454 = arith.index_cast %453 : i32 to index
    %c32_151 = arith.constant 32 : index
    %455 = vector.load %arg11[%454, %c32_151] : memref<64x128xf32, #tpu.memory_space<vmem>>, vector<8x32xf32>
    tpu.vector_store %arg11[%454, %c32_151], %447 {strides = array<i32>} : memref<64x128xf32, #tpu.memory_space<vmem>>, vector<8x32xf32>,
    %c3_i32_152 = arith.constant 3 : i32
    %c7_i32_153 = arith.constant 7 : i32
    %456 = arith.subi %c7_i32_153, %c3_i32_152 : i32
    %457 = arith.truncf %445 : vector<8x64xf32> to vector<8x64xbf16>
    %cst_154 = arith.constant dense<0.000000e+00> : vector<8x256xf32>
    %458 = tpu.matmul %457, %346, %cst_154 {dimension_numbers = #tpu.dot_dimension_numbers<[1], [0], [0], [1], [0, 0, 1, 1], [], []>} : vector<8x64xbf16>, vector<64x256xbf16>, vector<8x256xf32> -> vector<8x256xf32>
    %c8_i32_155 = arith.constant 8 : i32
    %459 = arith.muli %c3_i32_152, %c8_i32_155 : i32
    %460 = tpu.assume_multiple %459, 8 : i32
    %461 = arith.index_cast %460 : i32 to index
    %c0_156 = arith.constant 0 : index
    %462 = vector.load %arg12[%461, %c0_156] : memref<64x256xf32, #tpu.memory_space<vmem>>, vector<8x256xf32>
    %463 = arith.addf %458, %462 : vector<8x256xf32>
    %464 = vector.extract_strided_slice %463 {offsets = [0, 0], sizes = [8, 192], strides = [1, 1]} : vector<8x256xf32> to vector<8x192xf32>
    %465 = arith.negf %464 : vector<8x192xf32>
    %466 = math.exp %465 : vector<8x192xf32>
    %cst_157 = arith.constant 1.000000e+00 : f32
    %467 = vector.broadcast %cst_157 : f32 to vector<8x192xf32>
    %468 = arith.addf %467, %466 : vector<8x192xf32>
    %469 = arith.divf %467, %468 : vector<8x192xf32>
    %470 = vector.extract_strided_slice %463 {offsets = [0, 192], sizes = [8, 64], strides = [1, 1]} : vector<8x256xf32> to vector<8x64xf32>
    %471 = math.tanh %470 : vector<8x64xf32>
    %472 = vector.extract_strided_slice %469 {offsets = [0, 0], sizes = [8, 64], strides = [1, 1]} : vector<8x192xf32> to vector<8x64xf32>
    %473 = vector.extract_strided_slice %469 {offsets = [0, 64], sizes = [8, 64], strides = [1, 1]} : vector<8x192xf32> to vector<8x64xf32>
    %474 = vector.extract_strided_slice %469 {offsets = [0, 128], sizes = [8, 64], strides = [1, 1]} : vector<8x192xf32> to vector<8x64xf32>
    %475 = arith.mulf %473, %443 : vector<8x64xf32>
    %476 = arith.mulf %472, %471 : vector<8x64xf32>
    %477 = arith.addf %475, %476 : vector<8x64xf32>
    %478 = math.tanh %477 : vector<8x64xf32>
    %479 = arith.mulf %474, %478 : vector<8x64xf32>
    %480 = vector.extract_strided_slice %479 {offsets = [0, 0], sizes = [8, 32], strides = [1, 1]} : vector<8x64xf32> to vector<8x32xf32>
    %481 = vector.extract_strided_slice %479 {offsets = [0, 32], sizes = [8, 32], strides = [1, 1]} : vector<8x64xf32> to vector<8x32xf32>
    %c8_i32_158 = arith.constant 8 : i32
    %482 = arith.muli %c3_i32_152, %c8_i32_158 : i32
    %483 = tpu.assume_multiple %482, 8 : i32
    %484 = arith.index_cast %483 : i32 to index
    %c0_159 = arith.constant 0 : index
    %485 = vector.load %arg11[%484, %c0_159] : memref<64x128xf32, #tpu.memory_space<vmem>>, vector<8x32xf32>
    tpu.vector_store %arg11[%484, %c0_159], %480 {strides = array<i32>} : memref<64x128xf32, #tpu.memory_space<vmem>>, vector<8x32xf32>,
    %c8_i32_160 = arith.constant 8 : i32
    %486 = arith.muli %456, %c8_i32_160 : i32
    %487 = tpu.assume_multiple %486, 8 : i32
    %488 = arith.index_cast %487 : i32 to index
    %c32_161 = arith.constant 32 : index
    %489 = vector.load %arg11[%488, %c32_161] : memref<64x128xf32, #tpu.memory_space<vmem>>, vector<8x32xf32>
    tpu.vector_store %arg11[%488, %c32_161], %481 {strides = array<i32>} : memref<64x128xf32, #tpu.memory_space<vmem>>, vector<8x32xf32>,
    %c4_i32_162 = arith.constant 4 : i32
    %c7_i32_163 = arith.constant 7 : i32
    %490 = arith.subi %c7_i32_163, %c4_i32_162 : i32
    %491 = arith.truncf %479 : vector<8x64xf32> to vector<8x64xbf16>
    %cst_164 = arith.constant dense<0.000000e+00> : vector<8x256xf32>
    %492 = tpu.matmul %491, %346, %cst_164 {dimension_numbers = #tpu.dot_dimension_numbers<[1], [0], [0], [1], [0, 0, 1, 1], [], []>} : vector<8x64xbf16>, vector<64x256xbf16>, vector<8x256xf32> -> vector<8x256xf32>
    %c8_i32_165 = arith.constant 8 : i32
    %493 = arith.muli %c4_i32_162, %c8_i32_165 : i32
    %494 = tpu.assume_multiple %493, 8 : i32
    %495 = arith.index_cast %494 : i32 to index
    %c0_166 = arith.constant 0 : index
    %496 = vector.load %arg12[%495, %c0_166] : memref<64x256xf32, #tpu.memory_space<vmem>>, vector<8x256xf32>
    %497 = arith.addf %492, %496 : vector<8x256xf32>
    %498 = vector.extract_strided_slice %497 {offsets = [0, 0], sizes = [8, 192], strides = [1, 1]} : vector<8x256xf32> to vector<8x192xf32>
    %499 = arith.negf %498 : vector<8x192xf32>
    %500 = math.exp %499 : vector<8x192xf32>
    %cst_167 = arith.constant 1.000000e+00 : f32
    %501 = vector.broadcast %cst_167 : f32 to vector<8x192xf32>
    %502 = arith.addf %501, %500 : vector<8x192xf32>
    %503 = arith.divf %501, %502 : vector<8x192xf32>
    %504 = vector.extract_strided_slice %497 {offsets = [0, 192], sizes = [8, 64], strides = [1, 1]} : vector<8x256xf32> to vector<8x64xf32>
    %505 = math.tanh %504 : vector<8x64xf32>
    %506 = vector.extract_strided_slice %503 {offsets = [0, 0], sizes = [8, 64], strides = [1, 1]} : vector<8x192xf32> to vector<8x64xf32>
    %507 = vector.extract_strided_slice %503 {offsets = [0, 64], sizes = [8, 64], strides = [1, 1]} : vector<8x192xf32> to vector<8x64xf32>
    %508 = vector.extract_strided_slice %503 {offsets = [0, 128], sizes = [8, 64], strides = [1, 1]} : vector<8x192xf32> to vector<8x64xf32>
    %509 = arith.mulf %507, %477 : vector<8x64xf32>
    %510 = arith.mulf %506, %505 : vector<8x64xf32>
    %511 = arith.addf %509, %510 : vector<8x64xf32>
    %512 = math.tanh %511 : vector<8x64xf32>
    %513 = arith.mulf %508, %512 : vector<8x64xf32>
    %514 = vector.extract_strided_slice %513 {offsets = [0, 0], sizes = [8, 32], strides = [1, 1]} : vector<8x64xf32> to vector<8x32xf32>
    %515 = vector.extract_strided_slice %513 {offsets = [0, 32], sizes = [8, 32], strides = [1, 1]} : vector<8x64xf32> to vector<8x32xf32>
    %c8_i32_168 = arith.constant 8 : i32
    %516 = arith.muli %c4_i32_162, %c8_i32_168 : i32
    %517 = tpu.assume_multiple %516, 8 : i32
    %518 = arith.index_cast %517 : i32 to index
    %c0_169 = arith.constant 0 : index
    %519 = vector.load %arg11[%518, %c0_169] : memref<64x128xf32, #tpu.memory_space<vmem>>, vector<8x32xf32>
    tpu.vector_store %arg11[%518, %c0_169], %514 {strides = array<i32>} : memref<64x128xf32, #tpu.memory_space<vmem>>, vector<8x32xf32>,
    %c8_i32_170 = arith.constant 8 : i32
    %520 = arith.muli %490, %c8_i32_170 : i32
    %521 = tpu.assume_multiple %520, 8 : i32
    %522 = arith.index_cast %521 : i32 to index
    %c32_171 = arith.constant 32 : index
    %523 = vector.load %arg11[%522, %c32_171] : memref<64x128xf32, #tpu.memory_space<vmem>>, vector<8x32xf32>
    tpu.vector_store %arg11[%522, %c32_171], %515 {strides = array<i32>} : memref<64x128xf32, #tpu.memory_space<vmem>>, vector<8x32xf32>,
    %c5_i32_172 = arith.constant 5 : i32
    %c7_i32_173 = arith.constant 7 : i32
    %524 = arith.subi %c7_i32_173, %c5_i32_172 : i32
    %525 = arith.truncf %513 : vector<8x64xf32> to vector<8x64xbf16>
    %cst_174 = arith.constant dense<0.000000e+00> : vector<8x256xf32>
    %526 = tpu.matmul %525, %346, %cst_174 {dimension_numbers = #tpu.dot_dimension_numbers<[1], [0], [0], [1], [0, 0, 1, 1], [], []>} : vector<8x64xbf16>, vector<64x256xbf16>, vector<8x256xf32> -> vector<8x256xf32>
    %c8_i32_175 = arith.constant 8 : i32
    %527 = arith.muli %c5_i32_172, %c8_i32_175 : i32
    %528 = tpu.assume_multiple %527, 8 : i32
    %529 = arith.index_cast %528 : i32 to index
    %c0_176 = arith.constant 0 : index
    %530 = vector.load %arg12[%529, %c0_176] : memref<64x256xf32, #tpu.memory_space<vmem>>, vector<8x256xf32>
    %531 = arith.addf %526, %530 : vector<8x256xf32>
    %532 = vector.extract_strided_slice %531 {offsets = [0, 0], sizes = [8, 192], strides = [1, 1]} : vector<8x256xf32> to vector<8x192xf32>
    %533 = arith.negf %532 : vector<8x192xf32>
    %534 = math.exp %533 : vector<8x192xf32>
    %cst_177 = arith.constant 1.000000e+00 : f32
    %535 = vector.broadcast %cst_177 : f32 to vector<8x192xf32>
    %536 = arith.addf %535, %534 : vector<8x192xf32>
    %537 = arith.divf %535, %536 : vector<8x192xf32>
    %538 = vector.extract_strided_slice %531 {offsets = [0, 192], sizes = [8, 64], strides = [1, 1]} : vector<8x256xf32> to vector<8x64xf32>
    %539 = math.tanh %538 : vector<8x64xf32>
    %540 = vector.extract_strided_slice %537 {offsets = [0, 0], sizes = [8, 64], strides = [1, 1]} : vector<8x192xf32> to vector<8x64xf32>
    %541 = vector.extract_strided_slice %537 {offsets = [0, 64], sizes = [8, 64], strides = [1, 1]} : vector<8x192xf32> to vector<8x64xf32>
    %542 = vector.extract_strided_slice %537 {offsets = [0, 128], sizes = [8, 64], strides = [1, 1]} : vector<8x192xf32> to vector<8x64xf32>
    %543 = arith.mulf %541, %511 : vector<8x64xf32>
    %544 = arith.mulf %540, %539 : vector<8x64xf32>
    %545 = arith.addf %543, %544 : vector<8x64xf32>
    %546 = math.tanh %545 : vector<8x64xf32>
    %547 = arith.mulf %542, %546 : vector<8x64xf32>
    %548 = vector.extract_strided_slice %547 {offsets = [0, 0], sizes = [8, 32], strides = [1, 1]} : vector<8x64xf32> to vector<8x32xf32>
    %549 = vector.extract_strided_slice %547 {offsets = [0, 32], sizes = [8, 32], strides = [1, 1]} : vector<8x64xf32> to vector<8x32xf32>
    %c8_i32_178 = arith.constant 8 : i32
    %550 = arith.muli %c5_i32_172, %c8_i32_178 : i32
    %551 = tpu.assume_multiple %550, 8 : i32
    %552 = arith.index_cast %551 : i32 to index
    %c0_179 = arith.constant 0 : index
    %553 = vector.load %arg11[%552, %c0_179] : memref<64x128xf32, #tpu.memory_space<vmem>>, vector<8x32xf32>
    tpu.vector_store %arg11[%552, %c0_179], %548 {strides = array<i32>} : memref<64x128xf32, #tpu.memory_space<vmem>>, vector<8x32xf32>,
    %c8_i32_180 = arith.constant 8 : i32
    %554 = arith.muli %524, %c8_i32_180 : i32
    %555 = tpu.assume_multiple %554, 8 : i32
    %556 = arith.index_cast %555 : i32 to index
    %c32_181 = arith.constant 32 : index
    %557 = vector.load %arg11[%556, %c32_181] : memref<64x128xf32, #tpu.memory_space<vmem>>, vector<8x32xf32>
    tpu.vector_store %arg11[%556, %c32_181], %549 {strides = array<i32>} : memref<64x128xf32, #tpu.memory_space<vmem>>, vector<8x32xf32>,
    %c6_i32_182 = arith.constant 6 : i32
    %c7_i32_183 = arith.constant 7 : i32
    %558 = arith.subi %c7_i32_183, %c6_i32_182 : i32
    %559 = arith.truncf %547 : vector<8x64xf32> to vector<8x64xbf16>
    %cst_184 = arith.constant dense<0.000000e+00> : vector<8x256xf32>
    %560 = tpu.matmul %559, %346, %cst_184 {dimension_numbers = #tpu.dot_dimension_numbers<[1], [0], [0], [1], [0, 0, 1, 1], [], []>} : vector<8x64xbf16>, vector<64x256xbf16>, vector<8x256xf32> -> vector<8x256xf32>
    %c8_i32_185 = arith.constant 8 : i32
    %561 = arith.muli %c6_i32_182, %c8_i32_185 : i32
    %562 = tpu.assume_multiple %561, 8 : i32
    %563 = arith.index_cast %562 : i32 to index
    %c0_186 = arith.constant 0 : index
    %564 = vector.load %arg12[%563, %c0_186] : memref<64x256xf32, #tpu.memory_space<vmem>>, vector<8x256xf32>
    %565 = arith.addf %560, %564 : vector<8x256xf32>
    %566 = vector.extract_strided_slice %565 {offsets = [0, 0], sizes = [8, 192], strides = [1, 1]} : vector<8x256xf32> to vector<8x192xf32>
    %567 = arith.negf %566 : vector<8x192xf32>
    %568 = math.exp %567 : vector<8x192xf32>
    %cst_187 = arith.constant 1.000000e+00 : f32
    %569 = vector.broadcast %cst_187 : f32 to vector<8x192xf32>
    %570 = arith.addf %569, %568 : vector<8x192xf32>
    %571 = arith.divf %569, %570 : vector<8x192xf32>
    %572 = vector.extract_strided_slice %565 {offsets = [0, 192], sizes = [8, 64], strides = [1, 1]} : vector<8x256xf32> to vector<8x64xf32>
    %573 = math.tanh %572 : vector<8x64xf32>
    %574 = vector.extract_strided_slice %571 {offsets = [0, 0], sizes = [8, 64], strides = [1, 1]} : vector<8x192xf32> to vector<8x64xf32>
    %575 = vector.extract_strided_slice %571 {offsets = [0, 64], sizes = [8, 64], strides = [1, 1]} : vector<8x192xf32> to vector<8x64xf32>
    %576 = vector.extract_strided_slice %571 {offsets = [0, 128], sizes = [8, 64], strides = [1, 1]} : vector<8x192xf32> to vector<8x64xf32>
    %577 = arith.mulf %575, %545 : vector<8x64xf32>
    %578 = arith.mulf %574, %573 : vector<8x64xf32>
    %579 = arith.addf %577, %578 : vector<8x64xf32>
    %580 = math.tanh %579 : vector<8x64xf32>
    %581 = arith.mulf %576, %580 : vector<8x64xf32>
    %582 = vector.extract_strided_slice %581 {offsets = [0, 0], sizes = [8, 32], strides = [1, 1]} : vector<8x64xf32> to vector<8x32xf32>
    %583 = vector.extract_strided_slice %581 {offsets = [0, 32], sizes = [8, 32], strides = [1, 1]} : vector<8x64xf32> to vector<8x32xf32>
    %c8_i32_188 = arith.constant 8 : i32
    %584 = arith.muli %c6_i32_182, %c8_i32_188 : i32
    %585 = tpu.assume_multiple %584, 8 : i32
    %586 = arith.index_cast %585 : i32 to index
    %c0_189 = arith.constant 0 : index
    %587 = vector.load %arg11[%586, %c0_189] : memref<64x128xf32, #tpu.memory_space<vmem>>, vector<8x32xf32>
    tpu.vector_store %arg11[%586, %c0_189], %582 {strides = array<i32>} : memref<64x128xf32, #tpu.memory_space<vmem>>, vector<8x32xf32>,
    %c8_i32_190 = arith.constant 8 : i32
    %588 = arith.muli %558, %c8_i32_190 : i32
    %589 = tpu.assume_multiple %588, 8 : i32
    %590 = arith.index_cast %589 : i32 to index
    %c32_191 = arith.constant 32 : index
    %591 = vector.load %arg11[%590, %c32_191] : memref<64x128xf32, #tpu.memory_space<vmem>>, vector<8x32xf32>
    tpu.vector_store %arg11[%590, %c32_191], %583 {strides = array<i32>} : memref<64x128xf32, #tpu.memory_space<vmem>>, vector<8x32xf32>,
    %c7_i32_192 = arith.constant 7 : i32
    %c7_i32_193 = arith.constant 7 : i32
    %592 = arith.subi %c7_i32_193, %c7_i32_192 : i32
    %593 = arith.truncf %581 : vector<8x64xf32> to vector<8x64xbf16>
    %cst_194 = arith.constant dense<0.000000e+00> : vector<8x256xf32>
    %594 = tpu.matmul %593, %346, %cst_194 {dimension_numbers = #tpu.dot_dimension_numbers<[1], [0], [0], [1], [0, 0, 1, 1], [], []>} : vector<8x64xbf16>, vector<64x256xbf16>, vector<8x256xf32> -> vector<8x256xf32>
    %c8_i32_195 = arith.constant 8 : i32
    %595 = arith.muli %c7_i32_192, %c8_i32_195 : i32
    %596 = tpu.assume_multiple %595, 8 : i32
    %597 = arith.index_cast %596 : i32 to index
    %c0_196 = arith.constant 0 : index
    %598 = vector.load %arg12[%597, %c0_196] : memref<64x256xf32, #tpu.memory_space<vmem>>, vector<8x256xf32>
    %599 = arith.addf %594, %598 : vector<8x256xf32>
    %600 = vector.extract_strided_slice %599 {offsets = [0, 0], sizes = [8, 192], strides = [1, 1]} : vector<8x256xf32> to vector<8x192xf32>
    %601 = arith.negf %600 : vector<8x192xf32>
    %602 = math.exp %601 : vector<8x192xf32>
    %cst_197 = arith.constant 1.000000e+00 : f32
    %603 = vector.broadcast %cst_197 : f32 to vector<8x192xf32>
    %604 = arith.addf %603, %602 : vector<8x192xf32>
    %605 = arith.divf %603, %604 : vector<8x192xf32>
    %606 = vector.extract_strided_slice %599 {offsets = [0, 192], sizes = [8, 64], strides = [1, 1]} : vector<8x256xf32> to vector<8x64xf32>
    %607 = math.tanh %606 : vector<8x64xf32>
    %608 = vector.extract_strided_slice %605 {offsets = [0, 0], sizes = [8, 64], strides = [1, 1]} : vector<8x192xf32> to vector<8x64xf32>
    %609 = vector.extract_strided_slice %605 {offsets = [0, 64], sizes = [8, 64], strides = [1, 1]} : vector<8x192xf32> to vector<8x64xf32>
    %610 = vector.extract_strided_slice %605 {offsets = [0, 128], sizes = [8, 64], strides = [1, 1]} : vector<8x192xf32> to vector<8x64xf32>
    %611 = arith.mulf %609, %579 : vector<8x64xf32>
    %612 = arith.mulf %608, %607 : vector<8x64xf32>
    %613 = arith.addf %611, %612 : vector<8x64xf32>
    %614 = math.tanh %613 : vector<8x64xf32>
    %615 = arith.mulf %610, %614 : vector<8x64xf32>
    %616 = vector.extract_strided_slice %615 {offsets = [0, 0], sizes = [8, 32], strides = [1, 1]} : vector<8x64xf32> to vector<8x32xf32>
    %617 = vector.extract_strided_slice %615 {offsets = [0, 32], sizes = [8, 32], strides = [1, 1]} : vector<8x64xf32> to vector<8x32xf32>
    %c8_i32_198 = arith.constant 8 : i32
    %618 = arith.muli %c7_i32_192, %c8_i32_198 : i32
    %619 = tpu.assume_multiple %618, 8 : i32
    %620 = arith.index_cast %619 : i32 to index
    %c0_199 = arith.constant 0 : index
    %621 = vector.load %arg11[%620, %c0_199] : memref<64x128xf32, #tpu.memory_space<vmem>>, vector<8x32xf32>
    tpu.vector_store %arg11[%620, %c0_199], %616 {strides = array<i32>} : memref<64x128xf32, #tpu.memory_space<vmem>>, vector<8x32xf32>,
    %c8_i32_200 = arith.constant 8 : i32
    %622 = arith.muli %592, %c8_i32_200 : i32
    %623 = tpu.assume_multiple %622, 8 : i32
    %624 = arith.index_cast %623 : i32 to index
    %c32_201 = arith.constant 32 : index
    %625 = vector.load %arg11[%624, %c32_201] : memref<64x128xf32, #tpu.memory_space<vmem>>, vector<8x32xf32>
    tpu.vector_store %arg11[%624, %c32_201], %617 {strides = array<i32>} : memref<64x128xf32, #tpu.memory_space<vmem>>, vector<8x32xf32>,
    %c8_i32_202 = arith.constant 8 : i32
    %c0_203 = arith.constant 0 : index
    %c0_204 = arith.constant 0 : index
    %626 = vector.load %arg11[%c0_203, %c0_204] : memref<64x128xf32, #tpu.memory_space<vmem>>, vector<64x64xf32>
    %627 = arith.truncf %626 : vector<64x64xf32> to vector<64x64xbf16>
    %c0_205 = arith.constant 0 : index
    %c0_206 = arith.constant 0 : index
    %628 = vector.load %arg7[%c0_205, %c0_206] : memref<64x8xbf16, #tpu.memory_space<vmem>>, vector<64x8xbf16>
    %cst_207 = arith.constant dense<0.000000e+00> : vector<64x8xf32>
    %629 = tpu.matmul %627, %628, %cst_207 {dimension_numbers = #tpu.dot_dimension_numbers<[1], [0], [0], [1], [0, 0, 1, 1], [], []>} : vector<64x64xbf16>, vector<64x8xbf16>, vector<64x8xf32> -> vector<64x8xf32>
    %c0_208 = arith.constant 0 : index
    %c0_209 = arith.constant 0 : index
    %630 = vector.load %arg8[%c0_208, %c0_209] : memref<1x8xf32, #tpu.memory_space<vmem>>, vector<1x8xf32>
    %631 = vector.broadcast %630 : vector<1x8xf32> to vector<64x8xf32>
    %632 = arith.addf %629, %631 : vector<64x8xf32>
    %633 = tpu.iota {dimensions = array<i32: 1>} : vector<64x8xi32>
    %c4_i32_210 = arith.constant 4 : i32
    %634 = vector.broadcast %c4_i32_210 : i32 to vector<64x8xi32>
    %635 = arith.cmpi slt, %633, %634 : vector<64x8xi32>
    %cst_211 = arith.constant 0.000000e+00 : f32
    %636 = vector.broadcast %cst_211 : f32 to vector<64x8xf32>
    %637 = arith.maximumf %632, %636 : vector<64x8xf32>
    %638 = vector.broadcast %cst_211 : f32 to vector<64x8xf32>
    %639 = arith.subf %632, %638 : vector<64x8xf32>
    %640 = arith.cmpf one, %639, %639 : vector<64x8xf32>
    %641 = vector.broadcast %cst_211 : f32 to vector<64x8xf32>
    %642 = arith.addf %632, %641 : vector<64x8xf32>
    %643 = math.absf %639 : vector<64x8xf32>
    %cst_212 = arith.constant 0.000000e+00 : f32
    %644 = vector.broadcast %cst_212 : f32 to vector<64x8xf32>
    %645 = arith.subf %644, %643 : vector<64x8xf32>
    %646 = math.exp %645 : vector<64x8xf32>
    %647 = math.log1p %646 : vector<64x8xf32>
    %648 = arith.addf %637, %647 : vector<64x8xf32>
    %649 = arith.select %640, %642, %648 : vector<64x8xi1>, vector<64x8xf32>
    %cst_213 = arith.constant 9.99999974E-5 : f32
    %650 = vector.broadcast %cst_213 : f32 to vector<64x8xf32>
    %651 = arith.addf %649, %650 : vector<64x8xf32>
    %652 = arith.select %635, %632, %651 : vector<64x8xi1>, vector<64x8xf32>
    %c0_214 = arith.constant 0 : index
    %c0_215 = arith.constant 0 : index
    %653 = vector.load %arg9[%c0_214, %c0_215] : memref<64x8xf32, #tpu.memory_space<vmem>>, vector<64x8xf32>
    tpu.vector_store %arg9[%c0_214, %c0_215], %652 {strides = array<i32>} : memref<64x8xf32, #tpu.memory_space<vmem>>, vector<64x8xf32>,
    return
  }
}

</mosaic_0001>

<llo_original>
// kernel: mf_inference_forward.1
$region0: #{mf_inference_forward.1}
  #allocation0 [shape = 'u32[]', space=smem, size = 0x4, offset = 0x4, fixed_abs, tag = 'smem constant byte address 0x4 - core index']
  #allocation1 [shape = 'u32[144,128]{1,0:T(1,128)}', space=vmem, size = 0x12000, scoped, tag = 'internal scratch']
  #allocation2 [shape = 'f32[64,128]{1,0:T(8,128)}', space=vmem, size = 0x8000, scoped, tag = 'scratch operand']
  #allocation3 [shape = 'f32[64,128]{1,0:T(8,128)}', space=vmem, size = 0x8000, scoped, tag = 'scratch operand']
  #allocation4 [shape = 'f32[64,256]{1,0:T(8,128)}', space=vmem, size = 0x10000, scoped, tag = 'scratch operand']
  %s0 = inlined_call_operand.vmem [shape: bf16[64,14], index: 0, kind: input, shape index: {}]
  %s1 = inlined_call_operand.vmem [shape: bf16[14,256], index: 1, kind: input, shape index: {}]
  %s2 = inlined_call_operand.vmem [shape: bf16[64,256], index: 2, kind: input, shape index: {}]
  %s3 = inlined_call_operand.vmem [shape: f32[1,256], index: 3, kind: input, shape index: {}]
  %s4 = inlined_call_operand.vmem [shape: bf16[128,256], index: 4, kind: input, shape index: {}]
  %s5 = inlined_call_operand.vmem [shape: bf16[64,256], index: 5, kind: input, shape index: {}]
  %s6 = inlined_call_operand.vmem [shape: f32[1,256], index: 6, kind: input, shape index: {}]
  %s7 = inlined_call_operand.vmem [shape: bf16[64,8], index: 7, kind: input, shape index: {}]
  %s8 = inlined_call_operand.vmem [shape: f32[1,8], index: 8, kind: input, shape index: {}]
  %s9 = inlined_call_operand.vmem [shape: f32[64,8], index: 9, kind: output, shape index: {}]
  %s10 = sld [smem:[#allocation0]]
  $region46: #{mf_inference_forward.1} parent=0
    _
  %s12 = ssub.s32 1, %s10
  %s13 = scalar_select 0, %s12, %s10
  // Predicated region
  $region2: #{mf_inference_forward.1} parent=0 // pred_check
    _
  $region3: #{mf_inference_forward.1} parent=0 // pred_check_branch
    %15 = sbr.rel (0) target = $region5
  $region4: #{mf_inference_forward.1} parent=0 // pred_region
    _
  $region5: #{mf_inference_forward.1} parent=0 // pred_fallthru
    _
  // Predicated region
  $region6: #{mf_inference_forward.1} parent=0 // pred_check
    _
  $region7: #{mf_inference_forward.1} parent=0 // pred_check_branch
    %17 = sbr.rel (0) target = $region9
  $region8: #{mf_inference_forward.1} parent=0 // pred_region
    _
  $region9: #{mf_inference_forward.1} parent=0 // pred_fallthru
    _
  // Predicated region
  $region10: #{mf_inference_forward.1} parent=0 // pred_check
    _
  $region11: #{mf_inference_forward.1} parent=0 // pred_check_branch
    %19 = sbr.rel (0) target = $region13
  $region12: #{mf_inference_forward.1} parent=0 // pred_region
    _
  $region13: #{mf_inference_forward.1} parent=0 // pred_fallthru
    _
  // Predicated region
  $region14: #{mf_inference_forward.1} parent=0 // pred_check
    _
  $region15: #{mf_inference_forward.1} parent=0 // pred_check_branch
    %21 = sbr.rel (0) target = $region17
  $region16: #{mf_inference_forward.1} parent=0 // pred_region
    _
  $region17: #{mf_inference_forward.1} parent=0 // pred_fallthru
    _
  // Predicated region
  $region18: #{mf_inference_forward.1} parent=0 // pred_check
    _
  $region19: #{mf_inference_forward.1} parent=0 // pred_check_branch
    %23 = sbr.rel (0) target = $region21
  $region20: #{mf_inference_forward.1} parent=0 // pred_region
    _
  $region21: #{mf_inference_forward.1} parent=0 // pred_fallthru
    _
  // Predicated region
  $region22: #{mf_inference_forward.1} parent=0 // pred_check
    _
  $region23: #{mf_inference_forward.1} parent=0 // pred_check_branch
    %25 = sbr.rel (0) target = $region25
  $region24: #{mf_inference_forward.1} parent=0 // pred_region
    _
  $region25: #{mf_inference_forward.1} parent=0 // pred_fallthru
    _
  // Predicated region
  $region26: #{mf_inference_forward.1} parent=0 // pred_check
    _
  $region27: #{mf_inference_forward.1} parent=0 // pred_check_branch
    %27 = sbr.rel (0) target = $region29
  $region28: #{mf_inference_forward.1} parent=0 // pred_region
    _
  $region29: #{mf_inference_forward.1} parent=0 // pred_fallthru
    _
  // Predicated region
  $region30: #{mf_inference_forward.1} parent=0 // pred_check
    _
  $region31: #{mf_inference_forward.1} parent=0 // pred_check_branch
    %29 = sbr.rel (0) target = $region33
  $region32: #{mf_inference_forward.1} parent=0 // pred_region
    _
  $region33: #{mf_inference_forward.1} parent=0 // pred_fallthru
    _
  // Predicated region
  $region34: #{mf_inference_forward.1} parent=0 // pred_check
    _
  $region35: #{mf_inference_forward.1} parent=0 // pred_check_branch
    %31 = sbr.rel (0) target = $region37
  $region36: #{mf_inference_forward.1} parent=0 // pred_region
    _
  $region37: #{mf_inference_forward.1} parent=0 // pred_fallthru
    _
  %v33 = vld [vmem:[%s1] sm:$0xff]
  %v34 = vld [vmem:[%s1 + $0x8] sm:$0x77]
  %v35 = vld [vmem:[%s2] sm:$0xff]
  %v36 = vld [vmem:[%s2 + $0x8] sm:$0xff]
  %v37 = vld [vmem:[%s2 + $0x10] sm:$0xff]
  %v38 = vld [vmem:[%s2 + $0x18] sm:$0xff]
  %v39 = vld [vmem:[%s2 + $0x20] sm:$0xff]
  %v40 = vld [vmem:[%s2 + $0x28] sm:$0xff]
  %v41 = vld [vmem:[%s2 + $0x30] sm:$0xff]
  %v42 = vld [vmem:[%s2 + $0x38] sm:$0xff]
  %v43 = vld [vmem:[%s3] sm:$0x3]
  %v44 = vld [vmem:[%s0] sm:$0xf]
  %v45 = vld [vmem:[%s0 + $0x4] sm:$0xf]
  %v46 = vld [vmem:[%s0 + $0x8] sm:$0xf]
  %v47 = vld [vmem:[%s0 + $0xc] sm:$0xf]
  %v48 = vld [vmem:[%s0 + $0x10] sm:$0xf]
  %v49 = vld [vmem:[%s0 + $0x14] sm:$0xf]
  %v50 = vld [vmem:[%s0 + $0x18] sm:$0xf]
  %v51 = vld [vmem:[%s0 + $0x1c] sm:$0xf]
  %v53 = vlaneseq
  %v54 = vshrl.u32 %v53, 7
  %v55 = vsub.s32 0, %v54
  %v56 = vrot.slane %v43, %v55
  %v57 = vlaneseq
  %v58 = vshrl.u32 %v57, 7
  %v59 = vsub.s32 1, %v58
  %v60 = vrot.slane %v43, %v59
  %v71 = vunpack.c.l.b16 %v44
  %v72 = vunpack.c.l.b16 %v45
  %v73 = vunpack.c.l.b16 %v46
  %v74 = vunpack.c.l.b16 %v47
  %v75 = vunpack.c.l.b16 %v48
  %v76 = vunpack.c.l.b16 %v49
  %v77 = vunpack.c.l.b16 %v50
  %v78 = vunpack.c.l.b16 %v51
  %v79 = vpack.c.b16 %v72, %v71
  %v80 = vpack.c.b16 %v74, %v73
  %v81 = vpack.c.b16 %v76, %v75
  %v82 = vpack.c.b16 %v78, %v77
  %v85 = vunpack.c.l.b16 %v33
  %v86 = vunpack.c.h.b16 %v33
  %v87 = vunpack.c.l.b16 %v34
  %v88 = vunpack.c.h.b16 %v34
  %v89 = vpack.c.b16 %v87, %v85
  %v90 = vpack.c.b16 %v88, %v86
  %vm91 = vcmask 113664
  %v93 = vsel %vm91, %v79, 0
  %v96 = vsel %vm91, %v80, 0
  %v99 = vsel %vm91, %v81, 0
  %v102 = vsel %vm91, %v82, 0
  %vm104 = vcmask 1046528
  %v106 = vsel %vm104, %v89, 0
  %v109 = vsel %vm104, %v90, 0
  %111 = vmatprep.subr.bf16.mxu0 %v109
  %112 = vmatpush1.bf16.msra.mxu0 %v106
  %113 = vmatprep.subr.bf16.mxu0 0
  %114 = vmatpush1.bf16.msra.mxu0 0
  %115 = vmatprep.subr.bf16.mxu0 0
  %116 = vmatpush1.bf16.msra.mxu0 0
  %117 = vmatprep.subr.bf16.mxu0 0
  %118 = vmatpush1.bf16.msra.mxu0 0
  %119 = vmatprep.subr.bf16.mxu0 0
  %120 = vmatpush1.bf16.msra.mxu0 0
  %121 = vmatprep.subr.bf16.mxu0 0
  %122 = vmatpush1.bf16.msra.mxu0 0
  %123 = vmatprep.subr.bf16.mxu0 0
  %124 = vmatpush1.bf16.msra.mxu0 0
  %125 = vmatprep.subr.bf16.mxu0 0
  %126 = vmatpush1.bf16.msra.mxu0 0
  %127 = vmatprep.subr.bf16.mxu0 0
  %128 = vmatpush1.bf16.msra.mxu0 0
  %129 = vmatprep.subr.bf16.mxu0 0
  %130 = vmatpush1.bf16.msra.mxu0 0
  %131 = vmatprep.subr.bf16.mxu0 0
  %132 = vmatpush1.bf16.msra.mxu0 0
  %133 = vmatprep.subr.bf16.mxu0 0
  %134 = vmatpush1.bf16.msra.mxu0 0
  %135 = vmatprep.subr.bf16.mxu0 0
  %136 = vmatpush1.bf16.msra.mxu0 0
  %137 = vmatprep.subr.bf16.mxu0 0
  %138 = vmatpush1.bf16.msra.mxu0 0
  %139 = vmatprep.subr.bf16.mxu0 0
  %140 = vmatpush1.bf16.msra.mxu0 0
  %141 = vmatprep.subr.bf16.mxu0 0
  %142 = vmatpush1.bf16.msra.mxu0 0
  %143 = vmatprep.mubr.bf16.mxu0 0
  %144 = vmatmul.mubr.bf16.gmra.mrb[0].mxu0 %v93
  %v145 = vpop.f32.mrb[0].mxu0
  %v146 = vadd.f32 %v56, %v145
  %v147 = vpop.f32.mrb[0].mxu0
  %v148 = vadd.f32 %v60, %v147
  %v149 = vpop.f32.mrb[0].mxu0
  %v150 = vadd.f32 %v56, %v149
  %v151 = vpop.f32.mrb[0].mxu0
  %v152 = vadd.f32 %v60, %v151
  %153 = vmatprep.mubr.bf16.mxu0 0
  %154 = vmatmul.mubr.bf16.gmra.mrb[0].mxu0 %v96
  %v155 = vpop.f32.mrb[0].mxu0
  %v156 = vadd.f32 %v56, %v155
  %v157 = vpop.f32.mrb[0].mxu0
  %v158 = vadd.f32 %v60, %v157
  %v159 = vpop.f32.mrb[0].mxu0
  %v160 = vadd.f32 %v56, %v159
  %v161 = vpop.f32.mrb[0].mxu0
  %v162 = vadd.f32 %v60, %v161
  %163 = vmatprep.mubr.bf16.mxu0 0
  %164 = vmatmul.mubr.bf16.gmra.mrb[0].mxu0 %v99
  %v165 = vpop.f32.mrb[0].mxu0
  %v166 = vadd.f32 %v56, %v165
  %v167 = vpop.f32.mrb[0].mxu0
  %v168 = vadd.f32 %v60, %v167
  %v169 = vpop.f32.mrb[0].mxu0
  %v170 = vadd.f32 %v56, %v169
  %v171 = vpop.f32.mrb[0].mxu0
  %v172 = vadd.f32 %v60, %v171
  %173 = vmatprep.mubr.bf16.mxu0 0
  %174 = vmatmul.mubr.bf16.gmra.mrb[0].mxu0 %v102
  %v175 = vpop.f32.mrb[0].mxu0
  %v176 = vadd.f32 %v56, %v175
  %v177 = vpop.f32.mrb[0].mxu0
  %v178 = vadd.f32 %v60, %v177
  %v179 = vpop.f32.mrb[0].mxu0
  %v180 = vadd.f32 %v56, %v179
  %v181 = vpop.f32.mrb[0].mxu0
  %v182 = vadd.f32 %v60, %v181
  %183 = vdwg.mxu0
  %184 = vst [vmem:[#allocation4] sm:$0xff] %v146
  %185 = vst [vmem:[#allocation4 + $0x8] sm:$0xff] %v148
  %186 = vst [vmem:[#allocation4 + $0x10] sm:$0xff] %v150
  %187 = vst [vmem:[#allocation4 + $0x18] sm:$0xff] %v152
  %188 = vst [vmem:[#allocation4 + $0x20] sm:$0xff] %v156
  %189 = vst [vmem:[#allocation4 + $0x28] sm:$0xff] %v158
  %190 = vst [vmem:[#allocation4 + $0x30] sm:$0xff] %v160
  %191 = vst [vmem:[#allocation4 + $0x38] sm:$0xff] %v162
  %192 = vst [vmem:[#allocation4 + $0x40] sm:$0xff] %v166
  %193 = vst [vmem:[#allocation4 + $0x48] sm:$0xff] %v168
  %194 = vst [vmem:[#allocation4 + $0x50] sm:$0xff] %v170
  %195 = vst [vmem:[#allocation4 + $0x58] sm:$0xff] %v172
  %196 = vst [vmem:[#allocation4 + $0x60] sm:$0xff] %v176
  %197 = vst [vmem:[#allocation4 + $0x68] sm:$0xff] %v178
  %198 = vst [vmem:[#allocation4 + $0x70] sm:$0xff] %v180
  %199 = vst [vmem:[#allocation4 + $0x78] sm:$0xff] %v182
  %s200 = smul.u32 0, 2
  %s201 = smul.addr %s200, 8
  %s202 = scalar_lea.vmem [#allocation4], %s201
  %v203 = vld [vmem:[%s202] sm:$0xff]
  %v204 = vld [vmem:[%s202 + $0x8] sm:$0xff]
  %v213 = vunpack.c.l.b16 %v35
  %v214 = vunpack.c.h.b16 %v35
  %v215 = vunpack.c.l.b16 %v36
  %v216 = vunpack.c.h.b16 %v36
  %v217 = vunpack.c.l.b16 %v37
  %v218 = vunpack.c.h.b16 %v37
  %v219 = vunpack.c.l.b16 %v38
  %v220 = vunpack.c.h.b16 %v38
  %v221 = vunpack.c.l.b16 %v39
  %v222 = vunpack.c.h.b16 %v39
  %v223 = vunpack.c.l.b16 %v40
  %v224 = vunpack.c.h.b16 %v40
  %v225 = vunpack.c.l.b16 %v41
  %v226 = vunpack.c.h.b16 %v41
  %v227 = vunpack.c.l.b16 %v42
  %v228 = vunpack.c.h.b16 %v42
  %v229 = vpack.c.b16 %v215, %v213
  %v230 = vpack.c.b16 %v216, %v214
  %v231 = vpack.c.b16 %v219, %v217
  %v232 = vpack.c.b16 %v220, %v218
  %v233 = vpack.c.b16 %v223, %v221
  %v234 = vpack.c.b16 %v224, %v222
  %v235 = vpack.c.b16 %v227, %v225
  %v236 = vpack.c.b16 %v228, %v226
  %vm245 = vcmask 523264
  %v247 = vsel %vm245, 0, 0
  %249 = vmatprep.subr.bf16.mxu0 %v230
  %250 = vmatpush1.bf16.msra.mxu0 %v229
  %251 = vmatprep.subr.bf16.mxu0 %v232
  %252 = vmatpush1.bf16.msra.mxu0 %v231
  %253 = vmatprep.subr.bf16.mxu0 %v234
  %254 = vmatpush1.bf16.msra.mxu0 %v233
  %255 = vmatprep.subr.bf16.mxu0 %v236
  %256 = vmatpush1.bf16.msra.mxu0 %v235
  %257 = vmatprep.subr.bf16.mxu0 0
  %258 = vmatpush1.bf16.msra.mxu0 0
  %259 = vmatprep.subr.bf16.mxu0 0
  %260 = vmatpush1.bf16.msra.mxu0 0
  %261 = vmatprep.subr.bf16.mxu0 0
  %262 = vmatpush1.bf16.msra.mxu0 0
  %263 = vmatprep.subr.bf16.mxu0 0
  %264 = vmatpush1.bf16.msra.mxu0 0
  %265 = vmatprep.subr.bf16.mxu0 0
  %266 = vmatpush1.bf16.msra.mxu0 0
  %267 = vmatprep.subr.bf16.mxu0 0
  %268 = vmatpush1.bf16.msra.mxu0 0
  %269 = vmatprep.subr.bf16.mxu0 0
  %270 = vmatpush1.bf16.msra.mxu0 0
  %271 = vmatprep.subr.bf16.mxu0 0
  %272 = vmatpush1.bf16.msra.mxu0 0
  %273 = vmatprep.subr.bf16.mxu0 0
  %274 = vmatpush1.bf16.msra.mxu0 0
  %275 = vmatprep.subr.bf16.mxu0 0
  %276 = vmatpush1.bf16.msra.mxu0 0
  %277 = vmatprep.subr.bf16.mxu0 0
  %278 = vmatpush1.bf16.msra.mxu0 0
  %279 = vmatprep.subr.bf16.mxu0 0
  %280 = vmatpush1.bf16.msra.mxu0 0
  %281 = vmatprep.mubr.bf16.mxu0 0
  %282 = vmatmul.mubr.bf16.gmra.mrb[0].mxu0 %v247
  %v283 = vpop.f32.mrb[0].mxu0
  %v284 = vadd.f32 %v203, %v283
  %v285 = vpop.f32.mrb[0].mxu0
  %v286 = vadd.f32 %v204, %v285
  %v287 = vpop.f32.mrb[0].mxu0
  %v288 = vpop.f32.mrb[0].mxu0
  %289 = vdwg.mxu0
  %v290 = vxor.u32 %v284, 2147483648
  %v291 = vxor.u32 %v286, 2147483648
  %v292 = vmul.f32 %v290, 1.442695
  %v293 = vpow.pop %v292
  %v294 = vmul.f32 %v291, 1.442695
  %v295 = vpow.pop %v294
  %v296 = vadd.f32 %v293, 1.0
  %v297 = vadd.f32 %v295, 1.0
  %v298 = vrcp.pop %v296
  %v299 = vmul.f32 1.0, %v298
  %v300 = vrcp.pop %v297
  %v301 = vmul.f32 1.0, %v300
  %v302 = vtanh.pop %v286
  %v303 = vmul.f32 %v299, 0.0
  %305 = vrot.lane.b32.xlu0 %v302, 64
  %v306 = vpop.permute.xlu0 %305
  %v308 = vmul.f32 %v299, %v306
  %310 = vrot.lane.b32.xlu0 %v308, 64
  %v311 = vpop.permute.xlu0 %310
  %v313 = vadd.f32 %v303, %v311
  %v314 = vtanh.pop %v313
  %316 = vrot.lane.b32.xlu0 %v314, 64
  %v317 = vpop.permute.xlu0 %316
  %v319 = vmul.f32 %v301, %v317
  %vm320 = vcmask 261120
  %321 = vst.msk [vmem:[#allocation2] sm:$0xff] %vm320, %v319
  %s322 = scalar_lea.vmem [#allocation2], 56
  %vm323 = vcmask 523520
  %324 = vst.msk [vmem:[%s322] sm:$0xff] %vm323, %v319
  %326 = vrot.lane.b32.xlu0 %v319, 64
  %v327 = vpop.permute.xlu0 %326
  %vm329 = vcmask 785920
  %330 = vst.msk [vmem:[%s322] sm:$0xff] %vm329, %v327
  %vm331 = vcmask 1048320
  %332 = vst.msk [vmem:[#allocation2] sm:$0xff] %vm331, %v327
  %v333 = vpack.c.bf16 %v319, %v319
  %s334 = smul.u32 1, 2
  %s335 = smul.addr %s334, 8
  %s336 = scalar_lea.vmem [#allocation4], %s335
  %v337 = vld [vmem:[%s336] sm:$0xff]
  %v338 = vld [vmem:[%s336 + $0x8] sm:$0xff]
  %v340 = vsel %vm245, %v333, 0
  %342 = vmatprep.subr.bf16.mxu0 %v230
  %343 = vmatpush1.bf16.msra.mxu0 %v229
  %344 = vmatprep.subr.bf16.mxu0 %v232
  %345 = vmatpush1.bf16.msra.mxu0 %v231
  %346 = vmatprep.subr.bf16.mxu0 %v234
  %347 = vmatpush1.bf16.msra.mxu0 %v233
  %348 = vmatprep.subr.bf16.mxu0 %v236
  %349 = vmatpush1.bf16.msra.mxu0 %v235
  %350 = vmatprep.subr.bf16.mxu0 0
  %351 = vmatpush1.bf16.msra.mxu0 0
  %352 = vmatprep.subr.bf16.mxu0 0
  %353 = vmatpush1.bf16.msra.mxu0 0
  %354 = vmatprep.subr.bf16.mxu0 0
  %355 = vmatpush1.bf16.msra.mxu0 0
  %356 = vmatprep.subr.bf16.mxu0 0
  %357 = vmatpush1.bf16.msra.mxu0 0
  %358 = vmatprep.subr.bf16.mxu0 0
  %359 = vmatpush1.bf16.msra.mxu0 0
  %360 = vmatprep.subr.bf16.mxu0 0
  %361 = vmatpush1.bf16.msra.mxu0 0
  %362 = vmatprep.subr.bf16.mxu0 0
  %363 = vmatpush1.bf16.msra.mxu0 0
  %364 = vmatprep.subr.bf16.mxu0 0
  %365 = vmatpush1.bf16.msra.mxu0 0
  %366 = vmatprep.subr.bf16.mxu0 0
  %367 = vmatpush1.bf16.msra.mxu0 0
  %368 = vmatprep.subr.bf16.mxu0 0
  %369 = vmatpush1.bf16.msra.mxu0 0
  %370 = vmatprep.subr.bf16.mxu0 0
  %371 = vmatpush1.bf16.msra.mxu0 0
  %372 = vmatprep.subr.bf16.mxu0 0
  %373 = vmatpush1.bf16.msra.mxu0 0
  %374 = vmatprep.mubr.bf16.mxu0 0
  %375 = vmatmul.mubr.bf16.gmra.mrb[0].mxu0 %v340
  %v376 = vpop.f32.mrb[0].mxu0
  %v377 = vadd.f32 %v337, %v376
  %v378 = vpop.f32.mrb[0].mxu0
  %v379 = vadd.f32 %v338, %v378
  %v380 = vpop.f32.mrb[0].mxu0
  %v381 = vpop.f32.mrb[0].mxu0
  %382 = vdwg.mxu0
  %v383 = vxor.u32 %v377, 2147483648
  %v384 = vxor.u32 %v379, 2147483648
  %v385 = vmul.f32 %v383, 1.442695
  %v386 = vpow.pop %v385
  %v387 = vmul.f32 %v384, 1.442695
  %v388 = vpow.pop %v387
  %v389 = vadd.f32 %v386, 1.0
  %v390 = vadd.f32 %v388, 1.0
  %v391 = vrcp.pop %v389
  %v392 = vmul.f32 1.0, %v391
  %v393 = vrcp.pop %v390
  %v394 = vmul.f32 1.0, %v393
  %v395 = vtanh.pop %v379
  %v396 = vmul.f32 %v392, %v313
  %398 = vrot.lane.b32.xlu0 %v395, 64
  %v399 = vpop.permute.xlu0 %398
  %v401 = vmul.f32 %v392, %v399
  %403 = vrot.lane.b32.xlu0 %v401, 64
  %v404 = vpop.permute.xlu0 %403
  %v406 = vadd.f32 %v396, %v404
  %v407 = vtanh.pop %v406
  %409 = vrot.lane.b32.xlu0 %v407, 64
  %v410 = vpop.permute.xlu0 %409
  %v412 = vmul.f32 %v394, %v410
  %s413 = scalar_lea.vmem [#allocation2], 8
  %414 = vst.msk [vmem:[%s413] sm:$0xff] %vm320, %v412
  %s415 = scalar_lea.vmem [#allocation2], 48
  %416 = vst.msk [vmem:[%s415] sm:$0xff] %vm323, %v412
  %418 = vrot.lane.b32.xlu0 %v412, 64
  %v419 = vpop.permute.xlu0 %418
  %421 = vst.msk [vmem:[%s415] sm:$0xff] %vm329, %v419
  %422 = vst.msk [vmem:[%s413] sm:$0xff] %vm331, %v419
  %v423 = vpack.c.bf16 %v412, %v412
  %s424 = smul.u32 2, 2
  %s425 = smul.addr %s424, 8
  %s426 = scalar_lea.vmem [#allocation4], %s425
  %v427 = vld [vmem:[%s426] sm:$0xff]
  %v428 = vld [vmem:[%s426 + $0x8] sm:$0xff]
  %v430 = vsel %vm245, %v423, 0
  %432 = vmatprep.subr.bf16.mxu0 %v230
  %433 = vmatpush1.bf16.msra.mxu0 %v229
  %434 = vmatprep.subr.bf16.mxu0 %v232
  %435 = vmatpush1.bf16.msra.mxu0 %v231
  %436 = vmatprep.subr.bf16.mxu0 %v234
  %437 = vmatpush1.bf16.msra.mxu0 %v233
  %438 = vmatprep.subr.bf16.mxu0 %v236
  %439 = vmatpush1.bf16.msra.mxu0 %v235
  %440 = vmatprep.subr.bf16.mxu0 0
  %441 = vmatpush1.bf16.msra.mxu0 0
  %442 = vmatprep.subr.bf16.mxu0 0
  %443 = vmatpush1.bf16.msra.mxu0 0
  %444 = vmatprep.subr.bf16.mxu0 0
  %445 = vmatpush1.bf16.msra.mxu0 0
  %446 = vmatprep.subr.bf16.mxu0 0
  %447 = vmatpush1.bf16.msra.mxu0 0
  %448 = vmatprep.subr.bf16.mxu0 0
  %449 = vmatpush1.bf16.msra.mxu0 0
  %450 = vmatprep.subr.bf16.mxu0 0
  %451 = vmatpush1.bf16.msra.mxu0 0
  %452 = vmatprep.subr.bf16.mxu0 0
  %453 = vmatpush1.bf16.msra.mxu0 0
  %454 = vmatprep.subr.bf16.mxu0 0
  %455 = vmatpush1.bf16.msra.mxu0 0
  %456 = vmatprep.subr.bf16.mxu0 0
  %457 = vmatpush1.bf16.msra.mxu0 0
  %458 = vmatprep.subr.bf16.mxu0 0
  %459 = vmatpush1.bf16.msra.mxu0 0
  %460 = vmatprep.subr.bf16.mxu0 0
  %461 = vmatpush1.bf16.msra.mxu0 0
  %462 = vmatprep.subr.bf16.mxu0 0
  %463 = vmatpush1.bf16.msra.mxu0 0
  %464 = vmatprep.mubr.bf16.mxu0 0
  %465 = vmatmul.mubr.bf16.gmra.mrb[0].mxu0 %v430
  %v466 = vpop.f32.mrb[0].mxu0
  %v467 = vadd.f32 %v427, %v466
  %v468 = vpop.f32.mrb[0].mxu0
  %v469 = vadd.f32 %v428, %v468
  %v470 = vpop.f32.mrb[0].mxu0
  %v471 = vpop.f32.mrb[0].mxu0
  %472 = vdwg.mxu0
  %v473 = vxor.u32 %v467, 2147483648
  %v474 = vxor.u32 %v469, 2147483648
  %v475 = vmul.f32 %v473, 1.442695
  %v476 = vpow.pop %v475
  %v477 = vmul.f32 %v474, 1.442695
  %v478 = vpow.pop %v477
  %v479 = vadd.f32 %v476, 1.0
  %v480 = vadd.f32 %v478, 1.0
  %v481 = vrcp.pop %v479
  %v482 = vmul.f32 1.0, %v481
  %v483 = vrcp.pop %v480
  %v484 = vmul.f32 1.0, %v483
  %v485 = vtanh.pop %v469
  %v486 = vmul.f32 %v482, %v406
  %488 = vrot.lane.b32.xlu0 %v485, 64
  %v489 = vpop.permute.xlu0 %488
  %v491 = vmul.f32 %v482, %v489
  %493 = vrot.lane.b32.xlu0 %v491, 64
  %v494 = vpop.permute.xlu0 %493
  %v496 = vadd.f32 %v486, %v494
  %v497 = vtanh.pop %v496
  %499 = vrot.lane.b32.xlu0 %v497, 64
  %v500 = vpop.permute.xlu0 %499
  %v502 = vmul.f32 %v484, %v500
  %s503 = scalar_lea.vmem [#allocation2], 16
  %504 = vst.msk [vmem:[%s503] sm:$0xff] %vm320, %v502
  %s505 = scalar_lea.vmem [#allocation2], 40
  %506 = vst.msk [vmem:[%s505] sm:$0xff] %vm323, %v502
  %508 = vrot.lane.b32.xlu0 %v502, 64
  %v509 = vpop.permute.xlu0 %508
  %511 = vst.msk [vmem:[%s505] sm:$0xff] %vm329, %v509
  %512 = vst.msk [vmem:[%s503] sm:$0xff] %vm331, %v509
  %v513 = vpack.c.bf16 %v502, %v502
  %s514 = smul.u32 3, 2
  %s515 = smul.addr %s514, 8
  %s516 = scalar_lea.vmem [#allocation4], %s515
  %v517 = vld [vmem:[%s516] sm:$0xff]
  %v518 = vld [vmem:[%s516 + $0x8] sm:$0xff]
  %v520 = vsel %vm245, %v513, 0
  %522 = vmatprep.subr.bf16.mxu0 %v230
  %523 = vmatpush1.bf16.msra.mxu0 %v229
  %524 = vmatprep.subr.bf16.mxu0 %v232
  %525 = vmatpush1.bf16.msra.mxu0 %v231
  %526 = vmatprep.subr.bf16.mxu0 %v234
  %527 = vmatpush1.bf16.msra.mxu0 %v233
  %528 = vmatprep.subr.bf16.mxu0 %v236
  %529 = vmatpush1.bf16.msra.mxu0 %v235
  %530 = vmatprep.subr.bf16.mxu0 0
  %531 = vmatpush1.bf16.msra.mxu0 0
  %532 = vmatprep.subr.bf16.mxu0 0
  %533 = vmatpush1.bf16.msra.mxu0 0
  %534 = vmatprep.subr.bf16.mxu0 0
  %535 = vmatpush1.bf16.msra.mxu0 0
  %536 = vmatprep.subr.bf16.mxu0 0
  %537 = vmatpush1.bf16.msra.mxu0 0
  %538 = vmatprep.subr.bf16.mxu0 0
  %539 = vmatpush1.bf16.msra.mxu0 0
  %540 = vmatprep.subr.bf16.mxu0 0
  %541 = vmatpush1.bf16.msra.mxu0 0
  %542 = vmatprep.subr.bf16.mxu0 0
  %543 = vmatpush1.bf16.msra.mxu0 0
  %544 = vmatprep.subr.bf16.mxu0 0
  %545 = vmatpush1.bf16.msra.mxu0 0
  %546 = vmatprep.subr.bf16.mxu0 0
  %547 = vmatpush1.bf16.msra.mxu0 0
  %548 = vmatprep.subr.bf16.mxu0 0
  %549 = vmatpush1.bf16.msra.mxu0 0
  %550 = vmatprep.subr.bf16.mxu0 0
  %551 = vmatpush1.bf16.msra.mxu0 0
  %552 = vmatprep.subr.bf16.mxu0 0
  %553 = vmatpush1.bf16.msra.mxu0 0
  %554 = vmatprep.mubr.bf16.mxu0 0
  %555 = vmatmul.mubr.bf16.gmra.mrb[0].mxu0 %v520
  %v556 = vpop.f32.mrb[0].mxu0
  %v557 = vadd.f32 %v517, %v556
  %v558 = vpop.f32.mrb[0].mxu0
  %v559 = vadd.f32 %v518, %v558
  %v560 = vpop.f32.mrb[0].mxu0
  %v561 = vpop.f32.mrb[0].mxu0
  %562 = vdwg.mxu0
  %v563 = vxor.u32 %v557, 2147483648
  %v564 = vxor.u32 %v559, 2147483648
  %v565 = vmul.f32 %v563, 1.442695
  %v566 = vpow.pop %v565
  %v567 = vmul.f32 %v564, 1.442695
  %v568 = vpow.pop %v567
  %v569 = vadd.f32 %v566, 1.0
  %v570 = vadd.f32 %v568, 1.0
  %v571 = vrcp.pop %v569
  %v572 = vmul.f32 1.0, %v571
  %v573 = vrcp.pop %v570
  %v574 = vmul.f32 1.0, %v573
  %v575 = vtanh.pop %v559
  %v576 = vmul.f32 %v572, %v496
  %578 = vrot.lane.b32.xlu0 %v575, 64
  %v579 = vpop.permute.xlu0 %578
  %v581 = vmul.f32 %v572, %v579
  %583 = vrot.lane.b32.xlu0 %v581, 64
  %v584 = vpop.permute.xlu0 %583
  %v586 = vadd.f32 %v576, %v584
  %v587 = vtanh.pop %v586
  %589 = vrot.lane.b32.xlu0 %v587, 64
  %v590 = vpop.permute.xlu0 %589
  %v592 = vmul.f32 %v574, %v590
  %s593 = scalar_lea.vmem [#allocation2], 24
  %594 = vst.msk [vmem:[%s593] sm:$0xff] %vm320, %v592
  %s595 = scalar_lea.vmem [#allocation2], 32
  %596 = vst.msk [vmem:[%s595] sm:$0xff] %vm323, %v592
  %598 = vrot.lane.b32.xlu0 %v592, 64
  %v599 = vpop.permute.xlu0 %598
  %601 = vst.msk [vmem:[%s595] sm:$0xff] %vm329, %v599
  %602 = vst.msk [vmem:[%s593] sm:$0xff] %vm331, %v599
  %v603 = vpack.c.bf16 %v592, %v592
  %s604 = smul.u32 4, 2
  %s605 = smul.addr %s604, 8
  %s606 = scalar_lea.vmem [#allocation4], %s605
  %v607 = vld [vmem:[%s606] sm:$0xff]
  %v608 = vld [vmem:[%s606 + $0x8] sm:$0xff]
  %v610 = vsel %vm245, %v603, 0
  %612 = vmatprep.subr.bf16.mxu0 %v230
  %613 = vmatpush1.bf16.msra.mxu0 %v229
  %614 = vmatprep.subr.bf16.mxu0 %v232
  %615 = vmatpush1.bf16.msra.mxu0 %v231
  %616 = vmatprep.subr.bf16.mxu0 %v234
  %617 = vmatpush1.bf16.msra.mxu0 %v233
  %618 = vmatprep.subr.bf16.mxu0 %v236
  %619 = vmatpush1.bf16.msra.mxu0 %v235
  %620 = vmatprep.subr.bf16.mxu0 0
  %621 = vmatpush1.bf16.msra.mxu0 0
  %622 = vmatprep.subr.bf16.mxu0 0
  %623 = vmatpush1.bf16.msra.mxu0 0
  %624 = vmatprep.subr.bf16.mxu0 0
  %625 = vmatpush1.bf16.msra.mxu0 0
  %626 = vmatprep.subr.bf16.mxu0 0
  %627 = vmatpush1.bf16.msra.mxu0 0
  %628 = vmatprep.subr.bf16.mxu0 0
  %629 = vmatpush1.bf16.msra.mxu0 0
  %630 = vmatprep.subr.bf16.mxu0 0
  %631 = vmatpush1.bf16.msra.mxu0 0
  %632 = vmatprep.subr.bf16.mxu0 0
  %633 = vmatpush1.bf16.msra.mxu0 0
  %634 = vmatprep.subr.bf16.mxu0 0
  %635 = vmatpush1.bf16.msra.mxu0 0
  %636 = vmatprep.subr.bf16.mxu0 0
  %637 = vmatpush1.bf16.msra.mxu0 0
  %638 = vmatprep.subr.bf16.mxu0 0
  %639 = vmatpush1.bf16.msra.mxu0 0
  %640 = vmatprep.subr.bf16.mxu0 0
  %641 = vmatpush1.bf16.msra.mxu0 0
  %642 = vmatprep.subr.bf16.mxu0 0
  %643 = vmatpush1.bf16.msra.mxu0 0
  %644 = vmatprep.mubr.bf16.mxu0 0
  %645 = vmatmul.mubr.bf16.gmra.mrb[0].mxu0 %v610
  %v646 = vpop.f32.mrb[0].mxu0
  %v647 = vadd.f32 %v607, %v646
  %v648 = vpop.f32.mrb[0].mxu0
  %v649 = vadd.f32 %v608, %v648
  %v650 = vpop.f32.mrb[0].mxu0
  %v651 = vpop.f32.mrb[0].mxu0
  %652 = vdwg.mxu0
  %v653 = vxor.u32 %v647, 2147483648
  %v654 = vxor.u32 %v649, 2147483648
  %v655 = vmul.f32 %v653, 1.442695
  %v656 = vpow.pop %v655
  %v657 = vmul.f32 %v654, 1.442695
  %v658 = vpow.pop %v657
  %v659 = vadd.f32 %v656, 1.0
  %v660 = vadd.f32 %v658, 1.0
  %v661 = vrcp.pop %v659
  %v662 = vmul.f32 1.0, %v661
  %v663 = vrcp.pop %v660
  %v664 = vmul.f32 1.0, %v663
  %v665 = vtanh.pop %v649
  %v666 = vmul.f32 %v662, %v586
  %668 = vrot.lane.b32.xlu0 %v665, 64
  %v669 = vpop.permute.xlu0 %668
  %v671 = vmul.f32 %v662, %v669
  %673 = vrot.lane.b32.xlu0 %v671, 64
  %v674 = vpop.permute.xlu0 %673
  %v676 = vadd.f32 %v666, %v674
  %v677 = vtanh.pop %v676
  %679 = vrot.lane.b32.xlu0 %v677, 64
  %v680 = vpop.permute.xlu0 %679
  %v682 = vmul.f32 %v664, %v680
  %683 = vst.msk [vmem:[%s595] sm:$0xff] %vm320, %v682
  %684 = vst.msk [vmem:[%s593] sm:$0xff] %vm323, %v682
  %686 = vrot.lane.b32.xlu0 %v682, 64
  %v687 = vpop.permute.xlu0 %686
  %689 = vst.msk [vmem:[%s593] sm:$0xff] %vm329, %v687
  %690 = vst.msk [vmem:[%s595] sm:$0xff] %vm331, %v687
  %v691 = vpack.c.bf16 %v682, %v682
  %s692 = smul.u32 5, 2
  %s693 = smul.addr %s692, 8
  %s694 = scalar_lea.vmem [#allocation4], %s693
  %v695 = vld [vmem:[%s694] sm:$0xff]
  %v696 = vld [vmem:[%s694 + $0x8] sm:$0xff]
  %v698 = vsel %vm245, %v691, 0
  %700 = vmatprep.subr.bf16.mxu0 %v230
  %701 = vmatpush1.bf16.msra.mxu0 %v229
  %702 = vmatprep.subr.bf16.mxu0 %v232
  %703 = vmatpush1.bf16.msra.mxu0 %v231
  %704 = vmatprep.subr.bf16.mxu0 %v234
  %705 = vmatpush1.bf16.msra.mxu0 %v233
  %706 = vmatprep.subr.bf16.mxu0 %v236
  %707 = vmatpush1.bf16.msra.mxu0 %v235
  %708 = vmatprep.subr.bf16.mxu0 0
  %709 = vmatpush1.bf16.msra.mxu0 0
  %710 = vmatprep.subr.bf16.mxu0 0
  %711 = vmatpush1.bf16.msra.mxu0 0
  %712 = vmatprep.subr.bf16.mxu0 0
  %713 = vmatpush1.bf16.msra.mxu0 0
  %714 = vmatprep.subr.bf16.mxu0 0
  %715 = vmatpush1.bf16.msra.mxu0 0
  %716 = vmatprep.subr.bf16.mxu0 0
  %717 = vmatpush1.bf16.msra.mxu0 0
  %718 = vmatprep.subr.bf16.mxu0 0
  %719 = vmatpush1.bf16.msra.mxu0 0
  %720 = vmatprep.subr.bf16.mxu0 0
  %721 = vmatpush1.bf16.msra.mxu0 0
  %722 = vmatprep.subr.bf16.mxu0 0
  %723 = vmatpush1.bf16.msra.mxu0 0
  %724 = vmatprep.subr.bf16.mxu0 0
  %725 = vmatpush1.bf16.msra.mxu0 0
  %726 = vmatprep.subr.bf16.mxu0 0
  %727 = vmatpush1.bf16.msra.mxu0 0
  %728 = vmatprep.subr.bf16.mxu0 0
  %729 = vmatpush1.bf16.msra.mxu0 0
  %730 = vmatprep.subr.bf16.mxu0 0
  %731 = vmatpush1.bf16.msra.mxu0 0
  %732 = vmatprep.mubr.bf16.mxu0 0
  %733 = vmatmul.mubr.bf16.gmra.mrb[0].mxu0 %v698
  %v734 = vpop.f32.mrb[0].mxu0
  %v735 = vadd.f32 %v695, %v734
  %v736 = vpop.f32.mrb[0].mxu0
  %v737 = vadd.f32 %v696, %v736
  %v738 = vpop.f32.mrb[0].mxu0
  %v739 = vpop.f32.mrb[0].mxu0
  %740 = vdwg.mxu0
  %v741 = vxor.u32 %v735, 2147483648
  %v742 = vxor.u32 %v737, 2147483648
  %v743 = vmul.f32 %v741, 1.442695
  %v744 = vpow.pop %v743
  %v745 = vmul.f32 %v742, 1.442695
  %v746 = vpow.pop %v745
  %v747 = vadd.f32 %v744, 1.0
  %v748 = vadd.f32 %v746, 1.0
  %v749 = vrcp.pop %v747
  %v750 = vmul.f32 1.0, %v749
  %v751 = vrcp.pop %v748
  %v752 = vmul.f32 1.0, %v751
  %v753 = vtanh.pop %v737
  %v754 = vmul.f32 %v750, %v676
  %756 = vrot.lane.b32.xlu0 %v753, 64
  %v757 = vpop.permute.xlu0 %756
  %v759 = vmul.f32 %v750, %v757
  %761 = vrot.lane.b32.xlu0 %v759, 64
  %v762 = vpop.permute.xlu0 %761
  %v764 = vadd.f32 %v754, %v762
  %v765 = vtanh.pop %v764
  %767 = vrot.lane.b32.xlu0 %v765, 64
  %v768 = vpop.permute.xlu0 %767
  %v770 = vmul.f32 %v752, %v768
  %771 = vst.msk [vmem:[%s505] sm:$0xff] %vm320, %v770
  %772 = vst.msk [vmem:[%s503] sm:$0xff] %vm323, %v770
  %774 = vrot.lane.b32.xlu0 %v770, 64
  %v775 = vpop.permute.xlu0 %774
  %777 = vst.msk [vmem:[%s503] sm:$0xff] %vm329, %v775
  %778 = vst.msk [vmem:[%s505] sm:$0xff] %vm331, %v775
  %v779 = vpack.c.bf16 %v770, %v770
  %s780 = smul.u32 6, 2
  %s781 = smul.addr %s780, 8
  %s782 = scalar_lea.vmem [#allocation4], %s781
  %v783 = vld [vmem:[%s782] sm:$0xff]
  %v784 = vld [vmem:[%s782 + $0x8] sm:$0xff]
  %v786 = vsel %vm245, %v779, 0
  %788 = vmatprep.subr.bf16.mxu0 %v230
  %789 = vmatpush1.bf16.msra.mxu0 %v229
  %790 = vmatprep.subr.bf16.mxu0 %v232
  %791 = vmatpush1.bf16.msra.mxu0 %v231
  %792 = vmatprep.subr.bf16.mxu0 %v234
  %793 = vmatpush1.bf16.msra.mxu0 %v233
  %794 = vmatprep.subr.bf16.mxu0 %v236
  %795 = vmatpush1.bf16.msra.mxu0 %v235
  %796 = vmatprep.subr.bf16.mxu0 0
  %797 = vmatpush1.bf16.msra.mxu0 0
  %798 = vmatprep.subr.bf16.mxu0 0
  %799 = vmatpush1.bf16.msra.mxu0 0
  %800 = vmatprep.subr.bf16.mxu0 0
  %801 = vmatpush1.bf16.msra.mxu0 0
  %802 = vmatprep.subr.bf16.mxu0 0
  %803 = vmatpush1.bf16.msra.mxu0 0
  %804 = vmatprep.subr.bf16.mxu0 0
  %805 = vmatpush1.bf16.msra.mxu0 0
  %806 = vmatprep.subr.bf16.mxu0 0
  %807 = vmatpush1.bf16.msra.mxu0 0
  %808 = vmatprep.subr.bf16.mxu0 0
  %809 = vmatpush1.bf16.msra.mxu0 0
  %810 = vmatprep.subr.bf16.mxu0 0
  %811 = vmatpush1.bf16.msra.mxu0 0
  %812 = vmatprep.subr.bf16.mxu0 0
  %813 = vmatpush1.bf16.msra.mxu0 0
  %814 = vmatprep.subr.bf16.mxu0 0
  %815 = vmatpush1.bf16.msra.mxu0 0
  %816 = vmatprep.subr.bf16.mxu0 0
  %817 = vmatpush1.bf16.msra.mxu0 0
  %818 = vmatprep.subr.bf16.mxu0 0
  %819 = vmatpush1.bf16.msra.mxu0 0
  %820 = vmatprep.mubr.bf16.mxu0 0
  %821 = vmatmul.mubr.bf16.gmra.mrb[0].mxu0 %v786
  %v822 = vpop.f32.mrb[0].mxu0
  %v823 = vadd.f32 %v783, %v822
  %v824 = vpop.f32.mrb[0].mxu0
  %v825 = vadd.f32 %v784, %v824
  %v826 = vpop.f32.mrb[0].mxu0
  %v827 = vpop.f32.mrb[0].mxu0
  %828 = vdwg.mxu0
  %v829 = vxor.u32 %v823, 2147483648
  %v830 = vxor.u32 %v825, 2147483648
  %v831 = vmul.f32 %v829, 1.442695
  %v832 = vpow.pop %v831
  %v833 = vmul.f32 %v830, 1.442695
  %v834 = vpow.pop %v833
  %v835 = vadd.f32 %v832, 1.0
  %v836 = vadd.f32 %v834, 1.0
  %v837 = vrcp.pop %v835
  %v838 = vmul.f32 1.0, %v837
  %v839 = vrcp.pop %v836
  %v840 = vmul.f32 1.0, %v839
  %v841 = vtanh.pop %v825
  %v842 = vmul.f32 %v838, %v764
  %844 = vrot.lane.b32.xlu0 %v841, 64
  %v845 = vpop.permute.xlu0 %844
  %v847 = vmul.f32 %v838, %v845
  %849 = vrot.lane.b32.xlu0 %v847, 64
  %v850 = vpop.permute.xlu0 %849
  %v852 = vadd.f32 %v842, %v850
  %v853 = vtanh.pop %v852
  %855 = vrot.lane.b32.xlu0 %v853, 64
  %v856 = vpop.permute.xlu0 %855
  %v858 = vmul.f32 %v840, %v856
  %859 = vst.msk [vmem:[%s415] sm:$0xff] %vm320, %v858
  %860 = vst.msk [vmem:[%s413] sm:$0xff] %vm323, %v858
  %862 = vrot.lane.b32.xlu0 %v858, 64
  %v863 = vpop.permute.xlu0 %862
  %865 = vst.msk [vmem:[%s413] sm:$0xff] %vm329, %v863
  %866 = vst.msk [vmem:[%s415] sm:$0xff] %vm331, %v863
  %v867 = vpack.c.bf16 %v858, %v858
  %s868 = smul.u32 7, 2
  %s869 = smul.addr %s868, 8
  %s870 = scalar_lea.vmem [#allocation4], %s869
  %v871 = vld [vmem:[%s870] sm:$0xff]
  %v872 = vld [vmem:[%s870 + $0x8] sm:$0xff]
  %v874 = vsel %vm245, %v867, 0
  %876 = vmatprep.subr.bf16.mxu0 %v230
  %877 = vmatpush1.bf16.msra.mxu0 %v229
  %878 = vmatprep.subr.bf16.mxu0 %v232
  %879 = vmatpush1.bf16.msra.mxu0 %v231
  %880 = vmatprep.subr.bf16.mxu0 %v234
  %881 = vmatpush1.bf16.msra.mxu0 %v233
  %882 = vmatprep.subr.bf16.mxu0 %v236
  %883 = vmatpush1.bf16.msra.mxu0 %v235
  %884 = vmatprep.subr.bf16.mxu0 0
  %885 = vmatpush1.bf16.msra.mxu0 0
  %886 = vmatprep.subr.bf16.mxu0 0
  %887 = vmatpush1.bf16.msra.mxu0 0
  %888 = vmatprep.subr.bf16.mxu0 0
  %889 = vmatpush1.bf16.msra.mxu0 0
  %890 = vmatprep.subr.bf16.mxu0 0
  %891 = vmatpush1.bf16.msra.mxu0 0
  %892 = vmatprep.subr.bf16.mxu0 0
  %893 = vmatpush1.bf16.msra.mxu0 0
  %894 = vmatprep.subr.bf16.mxu0 0
  %895 = vmatpush1.bf16.msra.mxu0 0
  %896 = vmatprep.subr.bf16.mxu0 0
  %897 = vmatpush1.bf16.msra.mxu0 0
  %898 = vmatprep.subr.bf16.mxu0 0
  %899 = vmatpush1.bf16.msra.mxu0 0
  %900 = vmatprep.subr.bf16.mxu0 0
  %901 = vmatpush1.bf16.msra.mxu0 0
  %902 = vmatprep.subr.bf16.mxu0 0
  %903 = vmatpush1.bf16.msra.mxu0 0
  %904 = vmatprep.subr.bf16.mxu0 0
  %905 = vmatpush1.bf16.msra.mxu0 0
  %906 = vmatprep.subr.bf16.mxu0 0
  %907 = vmatpush1.bf16.msra.mxu0 0
  %908 = vmatprep.mubr.bf16.mxu0 0
  %909 = vmatmul.mubr.bf16.gmra.mrb[0].mxu0 %v874
  %v910 = vpop.f32.mrb[0].mxu0
  %v911 = vadd.f32 %v871, %v910
  %v912 = vpop.f32.mrb[0].mxu0
  %v913 = vadd.f32 %v872, %v912
  %v914 = vpop.f32.mrb[0].mxu0
  %v915 = vpop.f32.mrb[0].mxu0
  %916 = vdwg.mxu0
  %v917 = vxor.u32 %v911, 2147483648
  %v918 = vxor.u32 %v913, 2147483648
  %v919 = vmul.f32 %v917, 1.442695
  %v920 = vpow.pop %v919
  %v921 = vmul.f32 %v918, 1.442695
  %v922 = vpow.pop %v921
  %v923 = vadd.f32 %v920, 1.0
  %v924 = vadd.f32 %v922, 1.0
  %v925 = vrcp.pop %v923
  %v926 = vmul.f32 1.0, %v925
  %v927 = vrcp.pop %v924
  %v928 = vmul.f32 1.0, %v927
  %v929 = vtanh.pop %v913
  %v930 = vmul.f32 %v926, %v852
  %932 = vrot.lane.b32.xlu0 %v929, 64
  %v933 = vpop.permute.xlu0 %932
  %v935 = vmul.f32 %v926, %v933
  %937 = vrot.lane.b32.xlu0 %v935, 64
  %v938 = vpop.permute.xlu0 %937
  %v940 = vadd.f32 %v930, %v938
  %v941 = vtanh.pop %v940
  %943 = vrot.lane.b32.xlu0 %v941, 64
  %v944 = vpop.permute.xlu0 %943
  %v946 = vmul.f32 %v928, %v944
  %947 = vst.msk [vmem:[%s322] sm:$0xff] %vm320, %v946
  %948 = vst.msk [vmem:[#allocation2] sm:$0xff] %vm323, %v946
  %950 = vrot.lane.b32.xlu0 %v946, 64
  %v951 = vpop.permute.xlu0 %950
  %953 = vst.msk [vmem:[#allocation2] sm:$0xff] %vm329, %v951
  %954 = vst.msk [vmem:[%s322] sm:$0xff] %vm331, %v951
  %v955 = vld [vmem:[%s4] sm:$0xff]
  %v956 = vld [vmem:[%s4 + $0x8] sm:$0xff]
  %v957 = vld [vmem:[%s4 + $0x10] sm:$0xff]
  %v958 = vld [vmem:[%s4 + $0x18] sm:$0xff]
  %v959 = vld [vmem:[%s4 + $0x20] sm:$0xff]
  %v960 = vld [vmem:[%s4 + $0x28] sm:$0xff]
  %v961 = vld [vmem:[%s4 + $0x30] sm:$0xff]
  %v962 = vld [vmem:[%s4 + $0x38] sm:$0xff]
  %v963 = vld [vmem:[%s4 + $0x40] sm:$0xff]
  %v964 = vld [vmem:[%s4 + $0x48] sm:$0xff]
  %v965 = vld [vmem:[%s4 + $0x50] sm:$0xff]
  %v966 = vld [vmem:[%s4 + $0x58] sm:$0xff]
  %v967 = vld [vmem:[%s4 + $0x60] sm:$0xff]
  %v968 = vld [vmem:[%s4 + $0x68] sm:$0xff]
  %v969 = vld [vmem:[%s4 + $0x70] sm:$0xff]
  %v970 = vld [vmem:[%s4 + $0x78] sm:$0xff]
  %v971 = vld [vmem:[%s5] sm:$0xff]
  %v972 = vld [vmem:[%s5 + $0x8] sm:$0xff]
  %v973 = vld [vmem:[%s5 + $0x10] sm:$0xff]
  %v974 = vld [vmem:[%s5 + $0x18] sm:$0xff]
  %v975 = vld [vmem:[%s5 + $0x20] sm:$0xff]
  %v976 = vld [vmem:[%s5 + $0x28] sm:$0xff]
  %v977 = vld [vmem:[%s5 + $0x30] sm:$0xff]
  %v978 = vld [vmem:[%s5 + $0x38] sm:$0xff]
  %v979 = vld [vmem:[%s6] sm:$0x3]
  %v980 = vld [vmem:[#allocation2] sm:$0xff]
  %v981 = vld [vmem:[#allocation2 + $0x8] sm:$0xff]
  %v982 = vld [vmem:[#allocation2 + $0x10] sm:$0xff]
  %v983 = vld [vmem:[#allocation2 + $0x18] sm:$0xff]
  %v984 = vld [vmem:[#allocation2 + $0x20] sm:$0xff]
  %v985 = vld [vmem:[#allocation2 + $0x28] sm:$0xff]
  %v986 = vld [vmem:[#allocation2 + $0x30] sm:$0xff]
  %v987 = vld [vmem:[#allocation2 + $0x38] sm:$0xff]
  %v988 = vpack.c.bf16 %v981, %v980
  %v989 = vpack.c.bf16 %v983, %v982
  %v990 = vpack.c.bf16 %v985, %v984
  %v991 = vpack.c.bf16 %v987, %v986
  %v993 = vlaneseq
  %v994 = vshrl.u32 %v993, 7
  %v995 = vsub.s32 0, %v994
  %v996 = vrot.slane %v979, %v995
  %v997 = vlaneseq
  %v998 = vshrl.u32 %v997, 7
  %v999 = vsub.s32 1, %v998
  %v1000 = vrot.slane %v979, %v999
  %v1019 = vunpack.c.l.b16 %v955
  %v1020 = vunpack.c.h.b16 %v955
  %v1021 = vunpack.c.l.b16 %v956
  %v1022 = vunpack.c.h.b16 %v956
  %v1023 = vunpack.c.l.b16 %v957
  %v1024 = vunpack.c.h.b16 %v957
  %v1025 = vunpack.c.l.b16 %v958
  %v1026 = vunpack.c.h.b16 %v958
  %v1027 = vunpack.c.l.b16 %v959
  %v1028 = vunpack.c.h.b16 %v959
  %v1029 = vunpack.c.l.b16 %v960
  %v1030 = vunpack.c.h.b16 %v960
  %v1031 = vunpack.c.l.b16 %v961
  %v1032 = vunpack.c.h.b16 %v961
  %v1033 = vunpack.c.l.b16 %v962
  %v1034 = vunpack.c.h.b16 %v962
  %v1035 = vunpack.c.l.b16 %v963
  %v1036 = vunpack.c.h.b16 %v963
  %v1037 = vunpack.c.l.b16 %v964
  %v1038 = vunpack.c.h.b16 %v964
  %v1039 = vunpack.c.l.b16 %v965
  %v1040 = vunpack.c.h.b16 %v965
  %v1041 = vunpack.c.l.b16 %v966
  %v1042 = vunpack.c.h.b16 %v966
  %v1043 = vunpack.c.l.b16 %v967
  %v1044 = vunpack.c.h.b16 %v967
  %v1045 = vunpack.c.l.b16 %v968
  %v1046 = vunpack.c.h.b16 %v968
  %v1047 = vunpack.c.l.b16 %v969
  %v1048 = vunpack.c.h.b16 %v969
  %v1049 = vunpack.c.l.b16 %v970
  %v1050 = vunpack.c.h.b16 %v970
  %v1051 = vpack.c.b16 %v1021, %v1019
  %v1052 = vpack.c.b16 %v1022, %v1020
  %v1053 = vpack.c.b16 %v1025, %v1023
  %v1054 = vpack.c.b16 %v1026, %v1024
  %v1055 = vpack.c.b16 %v1029, %v1027
  %v1056 = vpack.c.b16 %v1030, %v1028
  %v1057 = vpack.c.b16 %v1033, %v1031
  %v1058 = vpack.c.b16 %v1034, %v1032
  %v1059 = vpack.c.b16 %v1037, %v1035
  %v1060 = vpack.c.b16 %v1038, %v1036
  %v1061 = vpack.c.b16 %v1041, %v1039
  %v1062 = vpack.c.b16 %v1042, %v1040
  %v1063 = vpack.c.b16 %v1045, %v1043
  %v1064 = vpack.c.b16 %v1046, %v1044
  %v1065 = vpack.c.b16 %v1049, %v1047
  %v1066 = vpack.c.b16 %v1050, %v1048
  %1083 = vmatprep.subr.bf16.mxu0 %v1052
  %1084 = vmatpush1.bf16.msra.mxu0 %v1051
  %1085 = vmatprep.subr.bf16.mxu0 %v1054
  %1086 = vmatpush1.bf16.msra.mxu0 %v1053
  %1087 = vmatprep.subr.bf16.mxu0 %v1056
  %1088 = vmatpush1.bf16.msra.mxu0 %v1055
  %1089 = vmatprep.subr.bf16.mxu0 %v1058
  %1090 = vmatpush1.bf16.msra.mxu0 %v1057
  %1091 = vmatprep.subr.bf16.mxu0 %v1060
  %1092 = vmatpush1.bf16.msra.mxu0 %v1059
  %1093 = vmatprep.subr.bf16.mxu0 %v1062
  %1094 = vmatpush1.bf16.msra.mxu0 %v1061
  %1095 = vmatprep.subr.bf16.mxu0 %v1064
  %1096 = vmatpush1.bf16.msra.mxu0 %v1063
  %1097 = vmatprep.subr.bf16.mxu0 %v1066
  %1098 = vmatpush1.bf16.msra.mxu0 %v1065
  %1099 = vmatprep.subr.bf16.mxu0 0
  %1100 = vmatpush1.bf16.msra.mxu0 0
  %1101 = vmatprep.subr.bf16.mxu0 0
  %1102 = vmatpush1.bf16.msra.mxu0 0
  %1103 = vmatprep.subr.bf16.mxu0 0
  %1104 = vmatpush1.bf16.msra.mxu0 0
  %1105 = vmatprep.subr.bf16.mxu0 0
  %1106 = vmatpush1.bf16.msra.mxu0 0
  %1107 = vmatprep.subr.bf16.mxu0 0
  %1108 = vmatpush1.bf16.msra.mxu0 0
  %1109 = vmatprep.subr.bf16.mxu0 0
  %1110 = vmatpush1.bf16.msra.mxu0 0
  %1111 = vmatprep.subr.bf16.mxu0 0
  %1112 = vmatpush1.bf16.msra.mxu0 0
  %1113 = vmatprep.subr.bf16.mxu0 0
  %1114 = vmatpush1.bf16.msra.mxu0 0
  %1115 = vmatprep.mubr.bf16.mxu0 0
  %1116 = vmatmul.mubr.bf16.gmra.mrb[0].mxu0 %v988
  %v1117 = vpop.f32.mrb[0].mxu0
  %v1118 = vadd.f32 %v996, %v1117
  %v1119 = vpop.f32.mrb[0].mxu0
  %v1120 = vadd.f32 %v1000, %v1119
  %v1121 = vpop.f32.mrb[0].mxu0
  %v1122 = vadd.f32 %v996, %v1121
  %v1123 = vpop.f32.mrb[0].mxu0
  %v1124 = vadd.f32 %v1000, %v1123
  %1125 = vmatprep.mubr.bf16.mxu0 0
  %1126 = vmatmul.mubr.bf16.gmra.mrb[0].mxu0 %v989
  %v1127 = vpop.f32.mrb[0].mxu0
  %v1128 = vadd.f32 %v996, %v1127
  %v1129 = vpop.f32.mrb[0].mxu0
  %v1130 = vadd.f32 %v1000, %v1129
  %v1131 = vpop.f32.mrb[0].mxu0
  %v1132 = vadd.f32 %v996, %v1131
  %v1133 = vpop.f32.mrb[0].mxu0
  %v1134 = vadd.f32 %v1000, %v1133
  %1135 = vmatprep.mubr.bf16.mxu0 0
  %1136 = vmatmul.mubr.bf16.gmra.mrb[0].mxu0 %v990
  %v1137 = vpop.f32.mrb[0].mxu0
  %v1138 = vadd.f32 %v996, %v1137
  %v1139 = vpop.f32.mrb[0].mxu0
  %v1140 = vadd.f32 %v1000, %v1139
  %v1141 = vpop.f32.mrb[0].mxu0
  %v1142 = vadd.f32 %v996, %v1141
  %v1143 = vpop.f32.mrb[0].mxu0
  %v1144 = vadd.f32 %v1000, %v1143
  %1145 = vmatprep.mubr.bf16.mxu0 0
  %1146 = vmatmul.mubr.bf16.gmra.mrb[0].mxu0 %v991
  %v1147 = vpop.f32.mrb[0].mxu0
  %v1148 = vadd.f32 %v996, %v1147
  %v1149 = vpop.f32.mrb[0].mxu0
  %v1150 = vadd.f32 %v1000, %v1149
  %v1151 = vpop.f32.mrb[0].mxu0
  %v1152 = vadd.f32 %v996, %v1151
  %v1153 = vpop.f32.mrb[0].mxu0
  %v1154 = vadd.f32 %v1000, %v1153
  %1155 = vdwg.mxu0
  %1156 = vst [vmem:[#allocation4] sm:$0xff] %v1118
  %1157 = vst [vmem:[#allocation4 + $0x8] sm:$0xff] %v1120
  %1158 = vst [vmem:[#allocation4 + $0x10] sm:$0xff] %v1122
  %1159 = vst [vmem:[#allocation4 + $0x18] sm:$0xff] %v1124
  %1160 = vst [vmem:[#allocation4 + $0x20] sm:$0xff] %v1128
  %1161 = vst [vmem:[#allocation4 + $0x28] sm:$0xff] %v1130
  %1162 = vst [vmem:[#allocation4 + $0x30] sm:$0xff] %v1132
  %1163 = vst [vmem:[#allocation4 + $0x38] sm:$0xff] %v1134
  %1164 = vst [vmem:[#allocation4 + $0x40] sm:$0xff] %v1138
  %1165 = vst [vmem:[#allocation4 + $0x48] sm:$0xff] %v1140
  %1166 = vst [vmem:[#allocation4 + $0x50] sm:$0xff] %v1142
  %1167 = vst [vmem:[#allocation4 + $0x58] sm:$0xff] %v1144
  %1168 = vst [vmem:[#allocation4 + $0x60] sm:$0xff] %v1148
  %1169 = vst [vmem:[#allocation4 + $0x68] sm:$0xff] %v1150
  %1170 = vst [vmem:[#allocation4 + $0x70] sm:$0xff] %v1152
  %1171 = vst [vmem:[#allocation4 + $0x78] sm:$0xff] %v1154
  %v1172 = vld [vmem:[%s202] sm:$0xff]
  %v1173 = vld [vmem:[%s202 + $0x8] sm:$0xff]
  %v1182 = vunpack.c.l.b16 %v971
  %v1183 = vunpack.c.h.b16 %v971
  %v1184 = vunpack.c.l.b16 %v972
  %v1185 = vunpack.c.h.b16 %v972
  %v1186 = vunpack.c.l.b16 %v973
  %v1187 = vunpack.c.h.b16 %v973
  %v1188 = vunpack.c.l.b16 %v974
  %v1189 = vunpack.c.h.b16 %v974
  %v1190 = vunpack.c.l.b16 %v975
  %v1191 = vunpack.c.h.b16 %v975
  %v1192 = vunpack.c.l.b16 %v976
  %v1193 = vunpack.c.h.b16 %v976
  %v1194 = vunpack.c.l.b16 %v977
  %v1195 = vunpack.c.h.b16 %v977
  %v1196 = vunpack.c.l.b16 %v978
  %v1197 = vunpack.c.h.b16 %v978
  %v1198 = vpack.c.b16 %v1184, %v1182
  %v1199 = vpack.c.b16 %v1185, %v1183
  %v1200 = vpack.c.b16 %v1188, %v1186
  %v1201 = vpack.c.b16 %v1189, %v1187
  %v1202 = vpack.c.b16 %v1192, %v1190
  %v1203 = vpack.c.b16 %v1193, %v1191
  %v1204 = vpack.c.b16 %v1196, %v1194
  %v1205 = vpack.c.b16 %v1197, %v1195
  %1214 = vmatprep.subr.bf16.mxu0 %v1199
  %1215 = vmatpush1.bf16.msra.mxu0 %v1198
  %1216 = vmatprep.subr.bf16.mxu0 %v1201
  %1217 = vmatpush1.bf16.msra.mxu0 %v1200
  %1218 = vmatprep.subr.bf16.mxu0 %v1203
  %1219 = vmatpush1.bf16.msra.mxu0 %v1202
  %1220 = vmatprep.subr.bf16.mxu0 %v1205
  %1221 = vmatpush1.bf16.msra.mxu0 %v1204
  %1222 = vmatprep.subr.bf16.mxu0 0
  %1223 = vmatpush1.bf16.msra.mxu0 0
  %1224 = vmatprep.subr.bf16.mxu0 0
  %1225 = vmatpush1.bf16.msra.mxu0 0
  %1226 = vmatprep.subr.bf16.mxu0 0
  %1227 = vmatpush1.bf16.msra.mxu0 0
  %1228 = vmatprep.subr.bf16.mxu0 0
  %1229 = vmatpush1.bf16.msra.mxu0 0
  %1230 = vmatprep.subr.bf16.mxu0 0
  %1231 = vmatpush1.bf16.msra.mxu0 0
  %1232 = vmatprep.subr.bf16.mxu0 0
  %1233 = vmatpush1.bf16.msra.mxu0 0
  %1234 = vmatprep.subr.bf16.mxu0 0
  %1235 = vmatpush1.bf16.msra.mxu0 0
  %1236 = vmatprep.subr.bf16.mxu0 0
  %1237 = vmatpush1.bf16.msra.mxu0 0
  %1238 = vmatprep.subr.bf16.mxu0 0
  %1239 = vmatpush1.bf16.msra.mxu0 0
  %1240 = vmatprep.subr.bf16.mxu0 0
  %1241 = vmatpush1.bf16.msra.mxu0 0
  %1242 = vmatprep.subr.bf16.mxu0 0
  %1243 = vmatpush1.bf16.msra.mxu0 0
  %1244 = vmatprep.subr.bf16.mxu0 0
  %1245 = vmatpush1.bf16.msra.mxu0 0
  %1246 = vmatprep.mubr.bf16.mxu0 0
  %1247 = vmatmul.mubr.bf16.gmra.mrb[0].mxu0 %v247
  %v1248 = vpop.f32.mrb[0].mxu0
  %v1249 = vadd.f32 %v1172, %v1248
  %v1250 = vpop.f32.mrb[0].mxu0
  %v1251 = vadd.f32 %v1173, %v1250
  %v1252 = vpop.f32.mrb[0].mxu0
  %v1253 = vpop.f32.mrb[0].mxu0
  %1254 = vdwg.mxu0
  %v1255 = vxor.u32 %v1249, 2147483648
  %v1256 = vxor.u32 %v1251, 2147483648
  %v1257 = vmul.f32 %v1255, 1.442695
  %v1258 = vpow.pop %v1257
  %v1259 = vmul.f32 %v1256, 1.442695
  %v1260 = vpow.pop %v1259
  %v1261 = vadd.f32 %v1258, 1.0
  %v1262 = vadd.f32 %v1260, 1.0
  %v1263 = vrcp.pop %v1261
  %v1264 = vmul.f32 1.0, %v1263
  %v1265 = vrcp.pop %v1262
  %v1266 = vmul.f32 1.0, %v1265
  %v1267 = vtanh.pop %v1251
  %v1268 = vmul.f32 %v1264, 0.0
  %1270 = vrot.lane.b32.xlu0 %v1267, 64
  %v1271 = vpop.permute.xlu0 %1270
  %v1273 = vmul.f32 %v1264, %v1271
  %1275 = vrot.lane.b32.xlu0 %v1273, 64
  %v1276 = vpop.permute.xlu0 %1275
  %v1278 = vadd.f32 %v1268, %v1276
  %v1279 = vtanh.pop %v1278
  %1281 = vrot.lane.b32.xlu0 %v1279, 64
  %v1282 = vpop.permute.xlu0 %1281
  %v1284 = vmul.f32 %v1266, %v1282
  %1285 = vst.msk [vmem:[#allocation3] sm:$0xff] %vm320, %v1284
  %s1286 = scalar_lea.vmem [#allocation3], 56
  %1287 = vst.msk [vmem:[%s1286] sm:$0xff] %vm323, %v1284
  %v1288 = vpack.c.bf16 %v1284, %v1284
  %v1289 = vld [vmem:[%s336] sm:$0xff]
  %v1290 = vld [vmem:[%s336 + $0x8] sm:$0xff]
  %v1292 = vsel %vm245, %v1288, 0
  %1294 = vmatprep.subr.bf16.mxu0 %v1199
  %1295 = vmatpush1.bf16.msra.mxu0 %v1198
  %1296 = vmatprep.subr.bf16.mxu0 %v1201
  %1297 = vmatpush1.bf16.msra.mxu0 %v1200
  %1298 = vmatprep.subr.bf16.mxu0 %v1203
  %1299 = vmatpush1.bf16.msra.mxu0 %v1202
  %1300 = vmatprep.subr.bf16.mxu0 %v1205
  %1301 = vmatpush1.bf16.msra.mxu0 %v1204
  %1302 = vmatprep.subr.bf16.mxu0 0
  %1303 = vmatpush1.bf16.msra.mxu0 0
  %1304 = vmatprep.subr.bf16.mxu0 0
  %1305 = vmatpush1.bf16.msra.mxu0 0
  %1306 = vmatprep.subr.bf16.mxu0 0
  %1307 = vmatpush1.bf16.msra.mxu0 0
  %1308 = vmatprep.subr.bf16.mxu0 0
  %1309 = vmatpush1.bf16.msra.mxu0 0
  %1310 = vmatprep.subr.bf16.mxu0 0
  %1311 = vmatpush1.bf16.msra.mxu0 0
  %1312 = vmatprep.subr.bf16.mxu0 0
  %1313 = vmatpush1.bf16.msra.mxu0 0
  %1314 = vmatprep.subr.bf16.mxu0 0
  %1315 = vmatpush1.bf16.msra.mxu0 0
  %1316 = vmatprep.subr.bf16.mxu0 0
  %1317 = vmatpush1.bf16.msra.mxu0 0
  %1318 = vmatprep.subr.bf16.mxu0 0
  %1319 = vmatpush1.bf16.msra.mxu0 0
  %1320 = vmatprep.subr.bf16.mxu0 0
  %1321 = vmatpush1.bf16.msra.mxu0 0
  %1322 = vmatprep.subr.bf16.mxu0 0
  %1323 = vmatpush1.bf16.msra.mxu0 0
  %1324 = vmatprep.subr.bf16.mxu0 0
  %1325 = vmatpush1.bf16.msra.mxu0 0
  %1326 = vmatprep.mubr.bf16.mxu0 0
  %1327 = vmatmul.mubr.bf16.gmra.mrb[0].mxu0 %v1292
  %v1328 = vpop.f32.mrb[0].mxu0
  %v1329 = vadd.f32 %v1289, %v1328
  %v1330 = vpop.f32.mrb[0].mxu0
  %v1331 = vadd.f32 %v1290, %v1330
  %v1332 = vpop.f32.mrb[0].mxu0
  %v1333 = vpop.f32.mrb[0].mxu0
  %1334 = vdwg.mxu0
  %v1335 = vxor.u32 %v1329, 2147483648
  %v1336 = vxor.u32 %v1331, 2147483648
  %v1337 = vmul.f32 %v1335, 1.442695
  %v1338 = vpow.pop %v1337
  %v1339 = vmul.f32 %v1336, 1.442695
  %v1340 = vpow.pop %v1339
  %v1341 = vadd.f32 %v1338, 1.0
  %v1342 = vadd.f32 %v1340, 1.0
  %v1343 = vrcp.pop %v1341
  %v1344 = vmul.f32 1.0, %v1343
  %v1345 = vrcp.pop %v1342
  %v1346 = vmul.f32 1.0, %v1345
  %v1347 = vtanh.pop %v1331
  %v1348 = vmul.f32 %v1344, %v1278
  %1350 = vrot.lane.b32.xlu0 %v1347, 64
  %v1351 = vpop.permute.xlu0 %1350
  %v1353 = vmul.f32 %v1344, %v1351
  %1355 = vrot.lane.b32.xlu0 %v1353, 64
  %v1356 = vpop.permute.xlu0 %1355
  %v1358 = vadd.f32 %v1348, %v1356
  %v1359 = vtanh.pop %v1358
  %1361 = vrot.lane.b32.xlu0 %v1359, 64
  %v1362 = vpop.permute.xlu0 %1361
  %v1364 = vmul.f32 %v1346, %v1362
  %s1365 = scalar_lea.vmem [#allocation3], 8
  %1366 = vst.msk [vmem:[%s1365] sm:$0xff] %vm320, %v1364
  %s1367 = scalar_lea.vmem [#allocation3], 48
  %1368 = vst.msk [vmem:[%s1367] sm:$0xff] %vm323, %v1364
  %v1369 = vpack.c.bf16 %v1364, %v1364
  %v1370 = vld [vmem:[%s426] sm:$0xff]
  %v1371 = vld [vmem:[%s426 + $0x8] sm:$0xff]
  %v1373 = vsel %vm245, %v1369, 0
  %1375 = vmatprep.subr.bf16.mxu0 %v1199
  %1376 = vmatpush1.bf16.msra.mxu0 %v1198
  %1377 = vmatprep.subr.bf16.mxu0 %v1201
  %1378 = vmatpush1.bf16.msra.mxu0 %v1200
  %1379 = vmatprep.subr.bf16.mxu0 %v1203
  %1380 = vmatpush1.bf16.msra.mxu0 %v1202
  %1381 = vmatprep.subr.bf16.mxu0 %v1205
  %1382 = vmatpush1.bf16.msra.mxu0 %v1204
  %1383 = vmatprep.subr.bf16.mxu0 0
  %1384 = vmatpush1.bf16.msra.mxu0 0
  %1385 = vmatprep.subr.bf16.mxu0 0
  %1386 = vmatpush1.bf16.msra.mxu0 0
  %1387 = vmatprep.subr.bf16.mxu0 0
  %1388 = vmatpush1.bf16.msra.mxu0 0
  %1389 = vmatprep.subr.bf16.mxu0 0
  %1390 = vmatpush1.bf16.msra.mxu0 0
  %1391 = vmatprep.subr.bf16.mxu0 0
  %1392 = vmatpush1.bf16.msra.mxu0 0
  %1393 = vmatprep.subr.bf16.mxu0 0
  %1394 = vmatpush1.bf16.msra.mxu0 0
  %1395 = vmatprep.subr.bf16.mxu0 0
  %1396 = vmatpush1.bf16.msra.mxu0 0
  %1397 = vmatprep.subr.bf16.mxu0 0
  %1398 = vmatpush1.bf16.msra.mxu0 0
  %1399 = vmatprep.subr.bf16.mxu0 0
  %1400 = vmatpush1.bf16.msra.mxu0 0
  %1401 = vmatprep.subr.bf16.mxu0 0
  %1402 = vmatpush1.bf16.msra.mxu0 0
  %1403 = vmatprep.subr.bf16.mxu0 0
  %1404 = vmatpush1.bf16.msra.mxu0 0
  %1405 = vmatprep.subr.bf16.mxu0 0
  %1406 = vmatpush1.bf16.msra.mxu0 0
  %1407 = vmatprep.mubr.bf16.mxu0 0
  %1408 = vmatmul.mubr.bf16.gmra.mrb[0].mxu0 %v1373
  %v1409 = vpop.f32.mrb[0].mxu0
  %v1410 = vadd.f32 %v1370, %v1409
  %v1411 = vpop.f32.mrb[0].mxu0
  %v1412 = vadd.f32 %v1371, %v1411
  %v1413 = vpop.f32.mrb[0].mxu0
  %v1414 = vpop.f32.mrb[0].mxu0
  %1415 = vdwg.mxu0
  %v1416 = vxor.u32 %v1410, 2147483648
  %v1417 = vxor.u32 %v1412, 2147483648
  %v1418 = vmul.f32 %v1416, 1.442695
  %v1419 = vpow.pop %v1418
  %v1420 = vmul.f32 %v1417, 1.442695
  %v1421 = vpow.pop %v1420
  %v1422 = vadd.f32 %v1419, 1.0
  %v1423 = vadd.f32 %v1421, 1.0
  %v1424 = vrcp.pop %v1422
  %v1425 = vmul.f32 1.0, %v1424
  %v1426 = vrcp.pop %v1423
  %v1427 = vmul.f32 1.0, %v1426
  %v1428 = vtanh.pop %v1412
  %v1429 = vmul.f32 %v1425, %v1358
  %1431 = vrot.lane.b32.xlu0 %v1428, 64
  %v1432 = vpop.permute.xlu0 %1431
  %v1434 = vmul.f32 %v1425, %v1432
  %1436 = vrot.lane.b32.xlu0 %v1434, 64
  %v1437 = vpop.permute.xlu0 %1436
  %v1439 = vadd.f32 %v1429, %v1437
  %v1440 = vtanh.pop %v1439
  %1442 = vrot.lane.b32.xlu0 %v1440, 64
  %v1443 = vpop.permute.xlu0 %1442
  %v1445 = vmul.f32 %v1427, %v1443
  %s1446 = scalar_lea.vmem [#allocation3], 16
  %1447 = vst.msk [vmem:[%s1446] sm:$0xff] %vm320, %v1445
  %s1448 = scalar_lea.vmem [#allocation3], 40
  %1449 = vst.msk [vmem:[%s1448] sm:$0xff] %vm323, %v1445
  %v1450 = vpack.c.bf16 %v1445, %v1445
  %v1451 = vld [vmem:[%s516] sm:$0xff]
  %v1452 = vld [vmem:[%s516 + $0x8] sm:$0xff]
  %v1454 = vsel %vm245, %v1450, 0
  %1456 = vmatprep.subr.bf16.mxu0 %v1199
  %1457 = vmatpush1.bf16.msra.mxu0 %v1198
  %1458 = vmatprep.subr.bf16.mxu0 %v1201
  %1459 = vmatpush1.bf16.msra.mxu0 %v1200
  %1460 = vmatprep.subr.bf16.mxu0 %v1203
  %1461 = vmatpush1.bf16.msra.mxu0 %v1202
  %1462 = vmatprep.subr.bf16.mxu0 %v1205
  %1463 = vmatpush1.bf16.msra.mxu0 %v1204
  %1464 = vmatprep.subr.bf16.mxu0 0
  %1465 = vmatpush1.bf16.msra.mxu0 0
  %1466 = vmatprep.subr.bf16.mxu0 0
  %1467 = vmatpush1.bf16.msra.mxu0 0
  %1468 = vmatprep.subr.bf16.mxu0 0
  %1469 = vmatpush1.bf16.msra.mxu0 0
  %1470 = vmatprep.subr.bf16.mxu0 0
  %1471 = vmatpush1.bf16.msra.mxu0 0
  %1472 = vmatprep.subr.bf16.mxu0 0
  %1473 = vmatpush1.bf16.msra.mxu0 0
  %1474 = vmatprep.subr.bf16.mxu0 0
  %1475 = vmatpush1.bf16.msra.mxu0 0
  %1476 = vmatprep.subr.bf16.mxu0 0
  %1477 = vmatpush1.bf16.msra.mxu0 0
  %1478 = vmatprep.subr.bf16.mxu0 0
  %1479 = vmatpush1.bf16.msra.mxu0 0
  %1480 = vmatprep.subr.bf16.mxu0 0
  %1481 = vmatpush1.bf16.msra.mxu0 0
  %1482 = vmatprep.subr.bf16.mxu0 0
  %1483 = vmatpush1.bf16.msra.mxu0 0
  %1484 = vmatprep.subr.bf16.mxu0 0
  %1485 = vmatpush1.bf16.msra.mxu0 0
  %1486 = vmatprep.subr.bf16.mxu0 0
  %1487 = vmatpush1.bf16.msra.mxu0 0
  %1488 = vmatprep.mubr.bf16.mxu0 0
  %1489 = vmatmul.mubr.bf16.gmra.mrb[0].mxu0 %v1454
  %v1490 = vpop.f32.mrb[0].mxu0
  %v1491 = vadd.f32 %v1451, %v1490
  %v1492 = vpop.f32.mrb[0].mxu0
  %v1493 = vadd.f32 %v1452, %v1492
  %v1494 = vpop.f32.mrb[0].mxu0
  %v1495 = vpop.f32.mrb[0].mxu0
  %1496 = vdwg.mxu0
  %v1497 = vxor.u32 %v1491, 2147483648
  %v1498 = vxor.u32 %v1493, 2147483648
  %v1499 = vmul.f32 %v1497, 1.442695
  %v1500 = vpow.pop %v1499
  %v1501 = vmul.f32 %v1498, 1.442695
  %v1502 = vpow.pop %v1501
  %v1503 = vadd.f32 %v1500, 1.0
  %v1504 = vadd.f32 %v1502, 1.0
  %v1505 = vrcp.pop %v1503
  %v1506 = vmul.f32 1.0, %v1505
  %v1507 = vrcp.pop %v1504
  %v1508 = vmul.f32 1.0, %v1507
  %v1509 = vtanh.pop %v1493
  %v1510 = vmul.f32 %v1506, %v1439
  %1512 = vrot.lane.b32.xlu0 %v1509, 64
  %v1513 = vpop.permute.xlu0 %1512
  %v1515 = vmul.f32 %v1506, %v1513
  %1517 = vrot.lane.b32.xlu0 %v1515, 64
  %v1518 = vpop.permute.xlu0 %1517
  %v1520 = vadd.f32 %v1510, %v1518
  %v1521 = vtanh.pop %v1520
  %1523 = vrot.lane.b32.xlu0 %v1521, 64
  %v1524 = vpop.permute.xlu0 %1523
  %v1526 = vmul.f32 %v1508, %v1524
  %s1527 = scalar_lea.vmem [#allocation3], 24
  %1528 = vst.msk [vmem:[%s1527] sm:$0xff] %vm320, %v1526
  %s1529 = scalar_lea.vmem [#allocation3], 32
  %1530 = vst.msk [vmem:[%s1529] sm:$0xff] %vm323, %v1526
  %v1531 = vpack.c.bf16 %v1526, %v1526
  %v1532 = vld [vmem:[%s606] sm:$0xff]
  %v1533 = vld [vmem:[%s606 + $0x8] sm:$0xff]
  %v1535 = vsel %vm245, %v1531, 0
  %1537 = vmatprep.subr.bf16.mxu0 %v1199
  %1538 = vmatpush1.bf16.msra.mxu0 %v1198
  %1539 = vmatprep.subr.bf16.mxu0 %v1201
  %1540 = vmatpush1.bf16.msra.mxu0 %v1200
  %1541 = vmatprep.subr.bf16.mxu0 %v1203
  %1542 = vmatpush1.bf16.msra.mxu0 %v1202
  %1543 = vmatprep.subr.bf16.mxu0 %v1205
  %1544 = vmatpush1.bf16.msra.mxu0 %v1204
  %1545 = vmatprep.subr.bf16.mxu0 0
  %1546 = vmatpush1.bf16.msra.mxu0 0
  %1547 = vmatprep.subr.bf16.mxu0 0
  %1548 = vmatpush1.bf16.msra.mxu0 0
  %1549 = vmatprep.subr.bf16.mxu0 0
  %1550 = vmatpush1.bf16.msra.mxu0 0
  %1551 = vmatprep.subr.bf16.mxu0 0
  %1552 = vmatpush1.bf16.msra.mxu0 0
  %1553 = vmatprep.subr.bf16.mxu0 0
  %1554 = vmatpush1.bf16.msra.mxu0 0
  %1555 = vmatprep.subr.bf16.mxu0 0
  %1556 = vmatpush1.bf16.msra.mxu0 0
  %1557 = vmatprep.subr.bf16.mxu0 0
  %1558 = vmatpush1.bf16.msra.mxu0 0
  %1559 = vmatprep.subr.bf16.mxu0 0
  %1560 = vmatpush1.bf16.msra.mxu0 0
  %1561 = vmatprep.subr.bf16.mxu0 0
  %1562 = vmatpush1.bf16.msra.mxu0 0
  %1563 = vmatprep.subr.bf16.mxu0 0
  %1564 = vmatpush1.bf16.msra.mxu0 0
  %1565 = vmatprep.subr.bf16.mxu0 0
  %1566 = vmatpush1.bf16.msra.mxu0 0
  %1567 = vmatprep.subr.bf16.mxu0 0
  %1568 = vmatpush1.bf16.msra.mxu0 0
  %1569 = vmatprep.mubr.bf16.mxu0 0
  %1570 = vmatmul.mubr.bf16.gmra.mrb[0].mxu0 %v1535
  %v1571 = vpop.f32.mrb[0].mxu0
  %v1572 = vadd.f32 %v1532, %v1571
  %v1573 = vpop.f32.mrb[0].mxu0
  %v1574 = vadd.f32 %v1533, %v1573
  %v1575 = vpop.f32.mrb[0].mxu0
  %v1576 = vpop.f32.mrb[0].mxu0
  %1577 = vdwg.mxu0
  %v1578 = vxor.u32 %v1572, 2147483648
  %v1579 = vxor.u32 %v1574, 2147483648
  %v1580 = vmul.f32 %v1578, 1.442695
  %v1581 = vpow.pop %v1580
  %v1582 = vmul.f32 %v1579, 1.442695
  %v1583 = vpow.pop %v1582
  %v1584 = vadd.f32 %v1581, 1.0
  %v1585 = vadd.f32 %v1583, 1.0
  %v1586 = vrcp.pop %v1584
  %v1587 = vmul.f32 1.0, %v1586
  %v1588 = vrcp.pop %v1585
  %v1589 = vmul.f32 1.0, %v1588
  %v1590 = vtanh.pop %v1574
  %v1591 = vmul.f32 %v1587, %v1520
  %1593 = vrot.lane.b32.xlu0 %v1590, 64
  %v1594 = vpop.permute.xlu0 %1593
  %v1596 = vmul.f32 %v1587, %v1594
  %1598 = vrot.lane.b32.xlu0 %v1596, 64
  %v1599 = vpop.permute.xlu0 %1598
  %v1601 = vadd.f32 %v1591, %v1599
  %v1602 = vtanh.pop %v1601
  %1604 = vrot.lane.b32.xlu0 %v1602, 64
  %v1605 = vpop.permute.xlu0 %1604
  %v1607 = vmul.f32 %v1589, %v1605
  %1608 = vst.msk [vmem:[%s1529] sm:$0xff] %vm320, %v1607
  %1609 = vst.msk [vmem:[%s1527] sm:$0xff] %vm323, %v1607
  %v1610 = vpack.c.bf16 %v1607, %v1607
  %v1611 = vld [vmem:[%s694] sm:$0xff]
  %v1612 = vld [vmem:[%s694 + $0x8] sm:$0xff]
  %v1614 = vsel %vm245, %v1610, 0
  %1616 = vmatprep.subr.bf16.mxu0 %v1199
  %1617 = vmatpush1.bf16.msra.mxu0 %v1198
  %1618 = vmatprep.subr.bf16.mxu0 %v1201
  %1619 = vmatpush1.bf16.msra.mxu0 %v1200
  %1620 = vmatprep.subr.bf16.mxu0 %v1203
  %1621 = vmatpush1.bf16.msra.mxu0 %v1202
  %1622 = vmatprep.subr.bf16.mxu0 %v1205
  %1623 = vmatpush1.bf16.msra.mxu0 %v1204
  %1624 = vmatprep.subr.bf16.mxu0 0
  %1625 = vmatpush1.bf16.msra.mxu0 0
  %1626 = vmatprep.subr.bf16.mxu0 0
  %1627 = vmatpush1.bf16.msra.mxu0 0
  %1628 = vmatprep.subr.bf16.mxu0 0
  %1629 = vmatpush1.bf16.msra.mxu0 0
  %1630 = vmatprep.subr.bf16.mxu0 0
  %1631 = vmatpush1.bf16.msra.mxu0 0
  %1632 = vmatprep.subr.bf16.mxu0 0
  %1633 = vmatpush1.bf16.msra.mxu0 0
  %1634 = vmatprep.subr.bf16.mxu0 0
  %1635 = vmatpush1.bf16.msra.mxu0 0
  %1636 = vmatprep.subr.bf16.mxu0 0
  %1637 = vmatpush1.bf16.msra.mxu0 0
  %1638 = vmatprep.subr.bf16.mxu0 0
  %1639 = vmatpush1.bf16.msra.mxu0 0
  %1640 = vmatprep.subr.bf16.mxu0 0
  %1641 = vmatpush1.bf16.msra.mxu0 0
  %1642 = vmatprep.subr.bf16.mxu0 0
  %1643 = vmatpush1.bf16.msra.mxu0 0
  %1644 = vmatprep.subr.bf16.mxu0 0
  %1645 = vmatpush1.bf16.msra.mxu0 0
  %1646 = vmatprep.subr.bf16.mxu0 0
  %1647 = vmatpush1.bf16.msra.mxu0 0
  %1648 = vmatprep.mubr.bf16.mxu0 0
  %1649 = vmatmul.mubr.bf16.gmra.mrb[0].mxu0 %v1614
  %v1650 = vpop.f32.mrb[0].mxu0
  %v1651 = vadd.f32 %v1611, %v1650
  %v1652 = vpop.f32.mrb[0].mxu0
  %v1653 = vadd.f32 %v1612, %v1652
  %v1654 = vpop.f32.mrb[0].mxu0
  %v1655 = vpop.f32.mrb[0].mxu0
  %1656 = vdwg.mxu0
  %v1657 = vxor.u32 %v1651, 2147483648
  %v1658 = vxor.u32 %v1653, 2147483648
  %v1659 = vmul.f32 %v1657, 1.442695
  %v1660 = vpow.pop %v1659
  %v1661 = vmul.f32 %v1658, 1.442695
  %v1662 = vpow.pop %v1661
  %v1663 = vadd.f32 %v1660, 1.0
  %v1664 = vadd.f32 %v1662, 1.0
  %v1665 = vrcp.pop %v1663
  %v1666 = vmul.f32 1.0, %v1665
  %v1667 = vrcp.pop %v1664
  %v1668 = vmul.f32 1.0, %v1667
  %v1669 = vtanh.pop %v1653
  %v1670 = vmul.f32 %v1666, %v1601
  %1672 = vrot.lane.b32.xlu0 %v1669, 64
  %v1673 = vpop.permute.xlu0 %1672
  %v1675 = vmul.f32 %v1666, %v1673
  %1677 = vrot.lane.b32.xlu0 %v1675, 64
  %v1678 = vpop.permute.xlu0 %1677
  %v1680 = vadd.f32 %v1670, %v1678
  %v1681 = vtanh.pop %v1680
  %1683 = vrot.lane.b32.xlu0 %v1681, 64
  %v1684 = vpop.permute.xlu0 %1683
  %v1686 = vmul.f32 %v1668, %v1684
  %1687 = vst.msk [vmem:[%s1448] sm:$0xff] %vm320, %v1686
  %1688 = vst.msk [vmem:[%s1446] sm:$0xff] %vm323, %v1686
  %v1689 = vpack.c.bf16 %v1686, %v1686
  %v1690 = vld [vmem:[%s782] sm:$0xff]
  %v1691 = vld [vmem:[%s782 + $0x8] sm:$0xff]
  %v1693 = vsel %vm245, %v1689, 0
  %1695 = vmatprep.subr.bf16.mxu0 %v1199
  %1696 = vmatpush1.bf16.msra.mxu0 %v1198
  %1697 = vmatprep.subr.bf16.mxu0 %v1201
  %1698 = vmatpush1.bf16.msra.mxu0 %v1200
  %1699 = vmatprep.subr.bf16.mxu0 %v1203
  %1700 = vmatpush1.bf16.msra.mxu0 %v1202
  %1701 = vmatprep.subr.bf16.mxu0 %v1205
  %1702 = vmatpush1.bf16.msra.mxu0 %v1204
  %1703 = vmatprep.subr.bf16.mxu0 0
  %1704 = vmatpush1.bf16.msra.mxu0 0
  %1705 = vmatprep.subr.bf16.mxu0 0
  %1706 = vmatpush1.bf16.msra.mxu0 0
  %1707 = vmatprep.subr.bf16.mxu0 0
  %1708 = vmatpush1.bf16.msra.mxu0 0
  %1709 = vmatprep.subr.bf16.mxu0 0
  %1710 = vmatpush1.bf16.msra.mxu0 0
  %1711 = vmatprep.subr.bf16.mxu0 0
  %1712 = vmatpush1.bf16.msra.mxu0 0
  %1713 = vmatprep.subr.bf16.mxu0 0
  %1714 = vmatpush1.bf16.msra.mxu0 0
  %1715 = vmatprep.subr.bf16.mxu0 0
  %1716 = vmatpush1.bf16.msra.mxu0 0
  %1717 = vmatprep.subr.bf16.mxu0 0
  %1718 = vmatpush1.bf16.msra.mxu0 0
  %1719 = vmatprep.subr.bf16.mxu0 0
  %1720 = vmatpush1.bf16.msra.mxu0 0
  %1721 = vmatprep.subr.bf16.mxu0 0
  %1722 = vmatpush1.bf16.msra.mxu0 0
  %1723 = vmatprep.subr.bf16.mxu0 0
  %1724 = vmatpush1.bf16.msra.mxu0 0
  %1725 = vmatprep.subr.bf16.mxu0 0
  %1726 = vmatpush1.bf16.msra.mxu0 0
  %1727 = vmatprep.mubr.bf16.mxu0 0
  %1728 = vmatmul.mubr.bf16.gmra.mrb[0].mxu0 %v1693
  %v1729 = vpop.f32.mrb[0].mxu0
  %v1730 = vadd.f32 %v1690, %v1729
  %v1731 = vpop.f32.mrb[0].mxu0
  %v1732 = vadd.f32 %v1691, %v1731
  %v1733 = vpop.f32.mrb[0].mxu0
  %v1734 = vpop.f32.mrb[0].mxu0
  %1735 = vdwg.mxu0
  %v1736 = vxor.u32 %v1730, 2147483648
  %v1737 = vxor.u32 %v1732, 2147483648
  %v1738 = vmul.f32 %v1736, 1.442695
  %v1739 = vpow.pop %v1738
  %v1740 = vmul.f32 %v1737, 1.442695
  %v1741 = vpow.pop %v1740
  %v1742 = vadd.f32 %v1739, 1.0
  %v1743 = vadd.f32 %v1741, 1.0
  %v1744 = vrcp.pop %v1742
  %v1745 = vmul.f32 1.0, %v1744
  %v1746 = vrcp.pop %v1743
  %v1747 = vmul.f32 1.0, %v1746
  %v1748 = vtanh.pop %v1732
  %v1749 = vmul.f32 %v1745, %v1680
  %1751 = vrot.lane.b32.xlu0 %v1748, 64
  %v1752 = vpop.permute.xlu0 %1751
  %v1754 = vmul.f32 %v1745, %v1752
  %1756 = vrot.lane.b32.xlu0 %v1754, 64
  %v1757 = vpop.permute.xlu0 %1756
  %v1759 = vadd.f32 %v1749, %v1757
  %v1760 = vtanh.pop %v1759
  %1762 = vrot.lane.b32.xlu0 %v1760, 64
  %v1763 = vpop.permute.xlu0 %1762
  %v1765 = vmul.f32 %v1747, %v1763
  %1766 = vst.msk [vmem:[%s1367] sm:$0xff] %vm320, %v1765
  %1767 = vst.msk [vmem:[%s1365] sm:$0xff] %vm323, %v1765
  %v1768 = vpack.c.bf16 %v1765, %v1765
  %v1769 = vld [vmem:[%s870] sm:$0xff]
  %v1770 = vld [vmem:[%s870 + $0x8] sm:$0xff]
  %v1772 = vsel %vm245, %v1768, 0
  %1774 = vmatprep.subr.bf16.mxu0 %v1199
  %1775 = vmatpush1.bf16.msra.mxu0 %v1198
  %1776 = vmatprep.subr.bf16.mxu0 %v1201
  %1777 = vmatpush1.bf16.msra.mxu0 %v1200
  %1778 = vmatprep.subr.bf16.mxu0 %v1203
  %1779 = vmatpush1.bf16.msra.mxu0 %v1202
  %1780 = vmatprep.subr.bf16.mxu0 %v1205
  %1781 = vmatpush1.bf16.msra.mxu0 %v1204
  %1782 = vmatprep.subr.bf16.mxu0 0
  %1783 = vmatpush1.bf16.msra.mxu0 0
  %1784 = vmatprep.subr.bf16.mxu0 0
  %1785 = vmatpush1.bf16.msra.mxu0 0
  %1786 = vmatprep.subr.bf16.mxu0 0
  %1787 = vmatpush1.bf16.msra.mxu0 0
  %1788 = vmatprep.subr.bf16.mxu0 0
  %1789 = vmatpush1.bf16.msra.mxu0 0
  %1790 = vmatprep.subr.bf16.mxu0 0
  %1791 = vmatpush1.bf16.msra.mxu0 0
  %1792 = vmatprep.subr.bf16.mxu0 0
  %1793 = vmatpush1.bf16.msra.mxu0 0
  %1794 = vmatprep.subr.bf16.mxu0 0
  %1795 = vmatpush1.bf16.msra.mxu0 0
  %1796 = vmatprep.subr.bf16.mxu0 0
  %1797 = vmatpush1.bf16.msra.mxu0 0
  %1798 = vmatprep.subr.bf16.mxu0 0
  %1799 = vmatpush1.bf16.msra.mxu0 0
  %1800 = vmatprep.subr.bf16.mxu0 0
  %1801 = vmatpush1.bf16.msra.mxu0 0
  %1802 = vmatprep.subr.bf16.mxu0 0
  %1803 = vmatpush1.bf16.msra.mxu0 0
  %1804 = vmatprep.subr.bf16.mxu0 0
  %1805 = vmatpush1.bf16.msra.mxu0 0
  %1806 = vmatprep.mubr.bf16.mxu0 0
  %1807 = vmatmul.mubr.bf16.gmra.mrb[0].mxu0 %v1772
  %v1808 = vpop.f32.mrb[0].mxu0
  %v1809 = vadd.f32 %v1769, %v1808
  %v1810 = vpop.f32.mrb[0].mxu0
  %v1811 = vadd.f32 %v1770, %v1810
  %v1812 = vpop.f32.mrb[0].mxu0
  %v1813 = vpop.f32.mrb[0].mxu0
  %1814 = vdwg.mxu0
  %v1815 = vxor.u32 %v1809, 2147483648
  %v1816 = vxor.u32 %v1811, 2147483648
  %v1817 = vmul.f32 %v1815, 1.442695
  %v1818 = vpow.pop %v1817
  %v1819 = vmul.f32 %v1816, 1.442695
  %v1820 = vpow.pop %v1819
  %v1821 = vadd.f32 %v1818, 1.0
  %v1822 = vadd.f32 %v1820, 1.0
  %v1823 = vrcp.pop %v1821
  %v1824 = vmul.f32 1.0, %v1823
  %v1825 = vrcp.pop %v1822
  %v1826 = vmul.f32 1.0, %v1825
  %v1827 = vtanh.pop %v1811
  %v1828 = vmul.f32 %v1824, %v1759
  %1830 = vrot.lane.b32.xlu0 %v1827, 64
  %v1831 = vpop.permute.xlu0 %1830
  %v1833 = vmul.f32 %v1824, %v1831
  %1835 = vrot.lane.b32.xlu0 %v1833, 64
  %v1836 = vpop.permute.xlu0 %1835
  %v1838 = vadd.f32 %v1828, %v1836
  %v1839 = vtanh.pop %v1838
  %1841 = vrot.lane.b32.xlu0 %v1839, 64
  %v1842 = vpop.permute.xlu0 %1841
  %v1844 = vmul.f32 %v1826, %v1842
  %1845 = vst.msk [vmem:[%s1286] sm:$0xff] %vm320, %v1844
  %1846 = vst.msk [vmem:[#allocation3] sm:$0xff] %vm323, %v1844
  %v1847 = vld [vmem:[#allocation3] sm:$0xff]
  %v1848 = vld [vmem:[#allocation3 + $0x8] sm:$0xff]
  %v1849 = vld [vmem:[#allocation3 + $0x10] sm:$0xff]
  %v1850 = vld [vmem:[#allocation3 + $0x18] sm:$0xff]
  %v1851 = vld [vmem:[#allocation3 + $0x20] sm:$0xff]
  %v1852 = vld [vmem:[#allocation3 + $0x28] sm:$0xff]
  %v1853 = vld [vmem:[#allocation3 + $0x30] sm:$0xff]
  %v1854 = vld [vmem:[#allocation3 + $0x38] sm:$0xff]
  %v1855 = vpack.c.bf16 %v1848, %v1847
  %v1856 = vpack.c.bf16 %v1850, %v1849
  %v1857 = vpack.c.bf16 %v1852, %v1851
  %v1858 = vpack.c.bf16 %v1854, %v1853
  %v1859 = vld [vmem:[%s7] sm:$0xf]
  %v1860 = vld [vmem:[%s7 + $0x4] sm:$0xf]
  %v1861 = vld [vmem:[%s7 + $0x8] sm:$0xf]
  %v1862 = vld [vmem:[%s7 + $0xc] sm:$0xf]
  %v1863 = vld [vmem:[%s7 + $0x10] sm:$0xf]
  %v1864 = vld [vmem:[%s7 + $0x14] sm:$0xf]
  %v1865 = vld [vmem:[%s7 + $0x18] sm:$0xf]
  %v1866 = vld [vmem:[%s7 + $0x1c] sm:$0xf]
  %v1867 = vld [vmem:[%s8] sm:$0x1]
  %v1869 = vlaneseq
  %v1870 = vshrl.u32 %v1869, 7
  %v1871 = vsub.s32 0, %v1870
  %v1872 = vrot.slane %v1867, %v1871
  %v1882 = vunpack.c.l.b16 %v1859
  %v1883 = vunpack.c.l.b16 %v1860
  %v1884 = vunpack.c.l.b16 %v1861
  %v1885 = vunpack.c.l.b16 %v1862
  %v1886 = vunpack.c.l.b16 %v1863
  %v1887 = vunpack.c.l.b16 %v1864
  %v1888 = vunpack.c.l.b16 %v1865
  %v1889 = vunpack.c.l.b16 %v1866
  %v1890 = vpack.c.b16 %v1883, %v1882
  %v1891 = vpack.c.b16 %v1885, %v1884
  %v1892 = vpack.c.b16 %v1887, %v1886
  %v1893 = vpack.c.b16 %v1889, %v1888
  %v1899 = vsel %vm245, %v1855, 0
  %v1902 = vsel %vm245, %v1856, 0
  %v1905 = vsel %vm245, %v1857, 0
  %v1908 = vsel %vm245, %v1858, 0
  %1910 = vmatprep.subr.bf16.mxu0 0
  %1911 = vmatpush1.bf16.msra.mxu0 %v1890
  %1912 = vmatprep.subr.bf16.mxu0 0
  %1913 = vmatpush1.bf16.msra.mxu0 %v1891
  %1914 = vmatprep.subr.bf16.mxu0 0
  %1915 = vmatpush1.bf16.msra.mxu0 %v1892
  %1916 = vmatprep.subr.bf16.mxu0 0
  %1917 = vmatpush1.bf16.msra.mxu0 %v1893
  %1918 = vmatprep.subr.bf16.mxu0 0
  %1919 = vmatpush1.bf16.msra.mxu0 0
  %1920 = vmatprep.subr.bf16.mxu0 0
  %1921 = vmatpush1.bf16.msra.mxu0 0
  %1922 = vmatprep.subr.bf16.mxu0 0
  %1923 = vmatpush1.bf16.msra.mxu0 0
  %1924 = vmatprep.subr.bf16.mxu0 0
  %1925 = vmatpush1.bf16.msra.mxu0 0
  %1926 = vmatprep.subr.bf16.mxu0 0
  %1927 = vmatpush1.bf16.msra.mxu0 0
  %1928 = vmatprep.subr.bf16.mxu0 0
  %1929 = vmatpush1.bf16.msra.mxu0 0
  %1930 = vmatprep.subr.bf16.mxu0 0
  %1931 = vmatpush1.bf16.msra.mxu0 0
  %1932 = vmatprep.subr.bf16.mxu0 0
  %1933 = vmatpush1.bf16.msra.mxu0 0
  %1934 = vmatprep.subr.bf16.mxu0 0
  %1935 = vmatpush1.bf16.msra.mxu0 0
  %1936 = vmatprep.subr.bf16.mxu0 0
  %1937 = vmatpush1.bf16.msra.mxu0 0
  %1938 = vmatprep.subr.bf16.mxu0 0
  %1939 = vmatpush1.bf16.msra.mxu0 0
  %1940 = vmatprep.subr.bf16.mxu0 0
  %1941 = vmatpush1.bf16.msra.mxu0 0
  %1942 = vmatprep.mubr.bf16.mxu0 0
  %1943 = vmatmul.mubr.bf16.gmra.mrb[0].mxu0 %v1899
  %v1944 = vpop.f32.mrb[0].mxu0
  %v1945 = vadd.f32 %v1872, %v1944
  %v1946 = vpop.f32.mrb[0].mxu0
  %v1947 = vpop.f32.mrb[0].mxu0
  %v1948 = vadd.f32 %v1872, %v1947
  %v1949 = vpop.f32.mrb[0].mxu0
  %1950 = vmatprep.mubr.bf16.mxu0 0
  %1951 = vmatmul.mubr.bf16.gmra.mrb[0].mxu0 %v1902
  %v1952 = vpop.f32.mrb[0].mxu0
  %v1953 = vadd.f32 %v1872, %v1952
  %v1954 = vpop.f32.mrb[0].mxu0
  %v1955 = vpop.f32.mrb[0].mxu0
  %v1956 = vadd.f32 %v1872, %v1955
  %v1957 = vpop.f32.mrb[0].mxu0
  %1958 = vmatprep.mubr.bf16.mxu0 0
  %1959 = vmatmul.mubr.bf16.gmra.mrb[0].mxu0 %v1905
  %v1960 = vpop.f32.mrb[0].mxu0
  %v1961 = vadd.f32 %v1872, %v1960
  %v1962 = vpop.f32.mrb[0].mxu0
  %v1963 = vpop.f32.mrb[0].mxu0
  %v1964 = vadd.f32 %v1872, %v1963
  %v1965 = vpop.f32.mrb[0].mxu0
  %1966 = vmatprep.mubr.bf16.mxu0 0
  %1967 = vmatmul.mubr.bf16.gmra.mrb[0].mxu0 %v1908
  %v1968 = vpop.f32.mrb[0].mxu0
  %v1969 = vadd.f32 %v1872, %v1968
  %v1970 = vpop.f32.mrb[0].mxu0
  %v1971 = vpop.f32.mrb[0].mxu0
  %v1972 = vadd.f32 %v1872, %v1971
  %v1973 = vpop.f32.mrb[0].mxu0
  %1974 = vdwg.mxu0
  %v1975 = vlaneseq
  %v1976 = vand.u32 %v1975, 127
  %vm1977 = vcmp.lt.s32.totalorder %v1976, 4
  %v1978 = vmax.f32 %v1945, 0.0
  %v1979 = vmax.f32 %v1948, 0.0
  %v1980 = vmax.f32 %v1953, 0.0
  %v1981 = vmax.f32 %v1956, 0.0
  %v1982 = vmax.f32 %v1961, 0.0
  %v1983 = vmax.f32 %v1964, 0.0
  %v1984 = vmax.f32 %v1969, 0.0
  %v1985 = vmax.f32 %v1972, 0.0
  %vm1986 = vcmp.ne.f32.partialorder %v1945, %v1945
  %vm1987 = vcmp.ne.f32.partialorder %v1948, %v1948
  %vm1988 = vcmp.ne.f32.partialorder %v1953, %v1953
  %vm1989 = vcmp.ne.f32.partialorder %v1956, %v1956
  %vm1990 = vcmp.ne.f32.partialorder %v1961, %v1961
  %vm1991 = vcmp.ne.f32.partialorder %v1964, %v1964
  %vm1992 = vcmp.ne.f32.partialorder %v1969, %v1969
  %vm1993 = vcmp.ne.f32.partialorder %v1972, %v1972
  %v1994 = vadd.f32 %v1945, 0.0
  %v1995 = vadd.f32 %v1948, 0.0
  %v1996 = vadd.f32 %v1953, 0.0
  %v1997 = vadd.f32 %v1956, 0.0
  %v1998 = vadd.f32 %v1961, 0.0
  %v1999 = vadd.f32 %v1964, 0.0
  %v2000 = vadd.f32 %v1969, 0.0
  %v2001 = vadd.f32 %v1972, 0.0
  %v2002 = vand.u32 2147483647, %v1945
  %v2003 = vand.u32 2147483647, %v1948
  %v2004 = vand.u32 2147483647, %v1953
  %v2005 = vand.u32 2147483647, %v1956
  %v2006 = vand.u32 2147483647, %v1961
  %v2007 = vand.u32 2147483647, %v1964
  %v2008 = vand.u32 2147483647, %v1969
  %v2009 = vand.u32 2147483647, %v1972
  %v2010 = vsub.f32 0.0, %v2002
  %v2011 = vsub.f32 0.0, %v2003
  %v2012 = vsub.f32 0.0, %v2004
  %v2013 = vsub.f32 0.0, %v2005
  %v2014 = vsub.f32 0.0, %v2006
  %v2015 = vsub.f32 0.0, %v2007
  %v2016 = vsub.f32 0.0, %v2008
  %v2017 = vsub.f32 0.0, %v2009
  %v2018 = vmul.f32 %v2010, 1.442695
  %v2019 = vpow.pop %v2018
  %v2020 = vmul.f32 %v2011, 1.442695
  %v2021 = vpow.pop %v2020
  %v2022 = vmul.f32 %v2012, 1.442695
  %v2023 = vpow.pop %v2022
  %v2024 = vmul.f32 %v2013, 1.442695
  %v2025 = vpow.pop %v2024
  %v2026 = vmul.f32 %v2014, 1.442695
  %v2027 = vpow.pop %v2026
  %v2028 = vmul.f32 %v2015, 1.442695
  %v2029 = vpow.pop %v2028
  %v2030 = vmul.f32 %v2016, 1.442695
  %v2031 = vpow.pop %v2030
  %v2032 = vmul.f32 %v2017, 1.442695
  %v2033 = vpow.pop %v2032
  %v2034 = vadd.f32 %v2019, 1.0
  %v2035 = vlog2.pop %v2034
  %v2036 = vmul.f32 %v2035, 0.6931472
  %v2037 = vmul.f32 -0.5, %v2019
  %v2038 = vadd.f32 %v2037, 1.0
  %v2039 = vmul.f32 %v2038, %v2019
  %v2040 = vand.u32 2147483647, %v2019
  %vm2041 = vcmp.lt.f32.partialorder %v2040, 0.0004427343
  %v2042 = vsel %vm2041, %v2039, %v2036
  %v2043 = vadd.f32 %v2021, 1.0
  %v2044 = vlog2.pop %v2043
  %v2045 = vmul.f32 %v2044, 0.6931472
  %v2046 = vmul.f32 -0.5, %v2021
  %v2047 = vadd.f32 %v2046, 1.0
  %v2048 = vmul.f32 %v2047, %v2021
  %v2049 = vand.u32 2147483647, %v2021
  %vm2050 = vcmp.lt.f32.partialorder %v2049, 0.0004427343
  %v2051 = vsel %vm2050, %v2048, %v2045
  %v2052 = vadd.f32 %v2023, 1.0
  %v2053 = vlog2.pop %v2052
  %v2054 = vmul.f32 %v2053, 0.6931472
  %v2055 = vmul.f32 -0.5, %v2023
  %v2056 = vadd.f32 %v2055, 1.0
  %v2057 = vmul.f32 %v2056, %v2023
  %v2058 = vand.u32 2147483647, %v2023
  %vm2059 = vcmp.lt.f32.partialorder %v2058, 0.0004427343
  %v2060 = vsel %vm2059, %v2057, %v2054
  %v2061 = vadd.f32 %v2025, 1.0
  %v2062 = vlog2.pop %v2061
  %v2063 = vmul.f32 %v2062, 0.6931472
  %v2064 = vmul.f32 -0.5, %v2025
  %v2065 = vadd.f32 %v2064, 1.0
  %v2066 = vmul.f32 %v2065, %v2025
  %v2067 = vand.u32 2147483647, %v2025
  %vm2068 = vcmp.lt.f32.partialorder %v2067, 0.0004427343
  %v2069 = vsel %vm2068, %v2066, %v2063
  %v2070 = vadd.f32 %v2027, 1.0
  %v2071 = vlog2.pop %v2070
  %v2072 = vmul.f32 %v2071, 0.6931472
  %v2073 = vmul.f32 -0.5, %v2027
  %v2074 = vadd.f32 %v2073, 1.0
  %v2075 = vmul.f32 %v2074, %v2027
  %v2076 = vand.u32 2147483647, %v2027
  %vm2077 = vcmp.lt.f32.partialorder %v2076, 0.0004427343
  %v2078 = vsel %vm2077, %v2075, %v2072
  %v2079 = vadd.f32 %v2029, 1.0
  %v2080 = vlog2.pop %v2079
  %v2081 = vmul.f32 %v2080, 0.6931472
  %v2082 = vmul.f32 -0.5, %v2029
  %v2083 = vadd.f32 %v2082, 1.0
  %v2084 = vmul.f32 %v2083, %v2029
  %v2085 = vand.u32 2147483647, %v2029
  %vm2086 = vcmp.lt.f32.partialorder %v2085, 0.0004427343
  %v2087 = vsel %vm2086, %v2084, %v2081
  %v2088 = vadd.f32 %v2031, 1.0
  %v2089 = vlog2.pop %v2088
  %v2090 = vmul.f32 %v2089, 0.6931472
  %v2091 = vmul.f32 -0.5, %v2031
  %v2092 = vadd.f32 %v2091, 1.0
  %v2093 = vmul.f32 %v2092, %v2031
  %v2094 = vand.u32 2147483647, %v2031
  %vm2095 = vcmp.lt.f32.partialorder %v2094, 0.0004427343
  %v2096 = vsel %vm2095, %v2093, %v2090
  %v2097 = vadd.f32 %v2033, 1.0
  %v2098 = vlog2.pop %v2097
  %v2099 = vmul.f32 %v2098, 0.6931472
  %v2100 = vmul.f32 -0.5, %v2033
  %v2101 = vadd.f32 %v2100, 1.0
  %v2102 = vmul.f32 %v2101, %v2033
  %v2103 = vand.u32 2147483647, %v2033
  %vm2104 = vcmp.lt.f32.partialorder %v2103, 0.0004427343
  %v2105 = vsel %vm2104, %v2102, %v2099
  %v2106 = vadd.f32 %v1978, %v2042
  %v2107 = vadd.f32 %v1979, %v2051
  %v2108 = vadd.f32 %v1980, %v2060
  %v2109 = vadd.f32 %v1981, %v2069
  %v2110 = vadd.f32 %v1982, %v2078
  %v2111 = vadd.f32 %v1983, %v2087
  %v2112 = vadd.f32 %v1984, %v2096
  %v2113 = vadd.f32 %v1985, %v2105
  %v2114 = vsel %vm1986, %v1994, %v2106
  %v2115 = vsel %vm1987, %v1995, %v2107
  %v2116 = vsel %vm1988, %v1996, %v2108
  %v2117 = vsel %vm1989, %v1997, %v2109
  %v2118 = vsel %vm1990, %v1998, %v2110
  %v2119 = vsel %vm1991, %v1999, %v2111
  %v2120 = vsel %vm1992, %v2000, %v2112
  %v2121 = vsel %vm1993, %v2001, %v2113
  %v2122 = vadd.f32 %v2114, 0.0001
  %v2123 = vadd.f32 %v2115, 0.0001
  %v2124 = vadd.f32 %v2116, 0.0001
  %v2125 = vadd.f32 %v2117, 0.0001
  %v2126 = vadd.f32 %v2118, 0.0001
  %v2127 = vadd.f32 %v2119, 0.0001
  %v2128 = vadd.f32 %v2120, 0.0001
  %v2129 = vadd.f32 %v2121, 0.0001
  %v2130 = vsel %vm1977, %v1945, %v2122
  %v2131 = vsel %vm1977, %v1948, %v2123
  %v2132 = vsel %vm1977, %v1953, %v2124
  %v2133 = vsel %vm1977, %v1956, %v2125
  %v2134 = vsel %vm1977, %v1961, %v2126
  %v2135 = vsel %vm1977, %v1964, %v2127
  %v2136 = vsel %vm1977, %v1969, %v2128
  %v2137 = vsel %vm1977, %v1972, %v2129
  %vm2138 = vcmask 64512
  %2139 = vst.msk [vmem:[%s9] sm:$0xff] %vm2138, %v2130
  %2140 = vst.msk [vmem:[%s9 + $0x8] sm:$0xff] %vm2138, %v2131
  %2141 = vst.msk [vmem:[%s9 + $0x10] sm:$0xff] %vm2138, %v2132
  %2142 = vst.msk [vmem:[%s9 + $0x18] sm:$0xff] %vm2138, %v2133
  %2143 = vst.msk [vmem:[%s9 + $0x20] sm:$0xff] %vm2138, %v2134
  %2144 = vst.msk [vmem:[%s9 + $0x28] sm:$0xff] %vm2138, %v2135
  %2145 = vst.msk [vmem:[%s9 + $0x30] sm:$0xff] %vm2138, %v2136
  %2146 = vst.msk [vmem:[%s9 + $0x38] sm:$0xff] %vm2138, %v2137
  // Predicated region
  $region38: #{mf_inference_forward.1} parent=0 // pred_check
    _
  $region39: #{mf_inference_forward.1} parent=0 // pred_check_branch
    %2148 = sbr.rel (0) target = $region41
  $region40: #{mf_inference_forward.1} parent=0 // pred_region
    _
  $region41: #{mf_inference_forward.1} parent=0 // pred_fallthru
    _
  // Predicated region
  $region42: #{mf_inference_forward.1} parent=0 // pred_check
    _
  $region43: #{mf_inference_forward.1} parent=0 // pred_check_branch
    %2150 = sbr.rel (0) target = $region45
  $region44: #{mf_inference_forward.1} parent=0 // pred_region
    _
  $region45: #{mf_inference_forward.1} parent=0 // pred_fallthru
    _

</llo_original>
